<compile_context>
chip_gen: v7x
topology: tpu7x:2x2x1
jax: 0.10.0
libtpu: 0.0.40
codegen_flags: <defaults>
</compile_context>

<pallas_src>
import functools

import jax
import jax.numpy as jnp
from jax import lax
from jax.experimental import pallas as pl
from jax.experimental.pallas import tpu as pltpu


# ----------------------------- Pallas kernel --------------------------------
def _attention_kernel(x_ref, g_ref, wqkv_ref, wg_ref, bg_ref, wo_ref,
                      o_ref, v_ref, *, heads, dim_head):
    # x_ref    : (1, N, dim)   f32    one batch element
    # g_ref    : (1, dim)      f32    gamma * sqrt(dim)
    # wqkv_ref : (dim, 3*h*d)  bf16   q-columns pre-scaled by dim_head**-0.5
    # wg_ref   : (dim, heads)  bf16
    # bg_ref   : (1, heads)    f32
    # wo_ref   : (h*d, dim)    bf16
    # o_ref    : (1, N, dim)   f32
    # v_ref    : (1, N, h*d)   f32    orig_v (lane-dense; transposed in wrapper)
    x = x_ref[0]                                   # (N, dim) f32
    g = g_ref[...]                                 # (1, dim) f32

    # RMSNorm in f32: F.normalize(x, dim=-1) * sqrt(dim) * gamma
    # (sqrt(dim) folded into g; eps=1e-12 on the l2 norm == 1e-24 on sumsq)
    sumsq = jnp.sum(x * x, axis=-1, keepdims=True)              # (N, 1)
    inv = lax.rsqrt(jnp.maximum(sumsq, 1e-24))                  # EUP
    xn = x * inv * g                                            # (N, dim) f32
    xn_b = xn.astype(jnp.bfloat16)                              # MXU operand

    # Fused QKV projection: single bf16 MXU matmul, f32 accumulation.
    qkv = jnp.dot(xn_b, wqkv_ref[...],
                  preferred_element_type=jnp.float32)           # (N, 3*h*d) f32

    hd = heads * dim_head
    # orig_v: one unmasked lane-dense 512-lane store (offset 2*hd is 128-aligned).
    v_ref[0] = qkv[:, 2 * hd:]

    # Per-head output gates (bf16 MXU, f32 accum + bias + sigmoid in f32).
    gates = jax.nn.sigmoid(
        jnp.dot(xn_b, wg_ref[...], preferred_element_type=jnp.float32)
        + bg_ref[...])                                          # (N, heads) f32

    outs = []
    for h in range(heads):                                      # static unroll
        q = qkv[:, h * dim_head:(h + 1) * dim_head].astype(jnp.bfloat16)
        k = qkv[:, hd + h * dim_head:
                hd + (h + 1) * dim_head].astype(jnp.bfloat16)
        v = qkv[:, 2 * hd + h * dim_head:
                2 * hd + (h + 1) * dim_head].astype(jnp.bfloat16)

        # s = q @ k^T  (scale already folded into q columns of Wqkv)
        s = lax.dot_general(q, k, (((1,), (1,)), ((), ())),
                            preferred_element_type=jnp.float32)  # (N, N) f32
        m = jnp.max(s, axis=-1, keepdims=True)
        p = jnp.exp(s - m)                                       # unnormalized
        l = jnp.sum(p, axis=-1, keepdims=True)                   # (N, 1)

        o = jnp.dot(p.astype(jnp.bfloat16), v,
                    preferred_element_type=jnp.float32)          # (N, d) f32
        # Deferred softmax normalization fused with the head gate:
        # one (N,1) EUP reciprocal + one (N,d) multiply, no N^2 divide.
        outs.append(o * (gates[:, h:h + 1] * pl.reciprocal(l, approx=True)))

    o_cat = jnp.concatenate(outs, axis=-1).astype(jnp.bfloat16)  # (N, h*d)
    o_ref[0] = jnp.dot(o_cat, wo_ref[...],
                       preferred_element_type=jnp.float32)       # (N, dim)


# ------------------------------- wrapper -------------------------------------
def attention_pallas(x, gamma, wqkv, wg, bg, wo, heads, dim_head):
    """x: (B, N, dim). Returns (out (B, N, dim), orig_v (B, heads, N, dim_head))."""
    B, N, dim = x.shape
    dim_inner = heads * dim_head
    assert wqkv.shape == (dim, 3 * dim_inner)
    assert wo.shape == (dim_inner, dim)
    scale = dim_head ** -0.5

    # Fold sqrt(dim) into gamma and the attention scale into the q columns;
    # store MXU weights in bf16 (halves HBM DMA + VMEM for the weights).
    g_scaled = (gamma * (dim ** 0.5)).reshape(1, dim).astype(jnp.float32)
    col_scale = jnp.concatenate([
        jnp.full((dim_inner,), scale, dtype=jnp.float32),
        jnp.ones((2 * dim_inner,), dtype=jnp.float32)])
    wqkv_s = (wqkv.astype(jnp.float32) * col_scale[None, :]).astype(jnp.bfloat16)
    wg_b = wg.astype(jnp.bfloat16)
    bg2 = bg.reshape(1, heads).astype(jnp.float32)
    wo_b = wo.astype(jnp.bfloat16)

    kernel = functools.partial(_attention_kernel, heads=heads, dim_head=dim_head)

    # TODO(synk): rotary_embed / learned_value_residual_mix / dropout are
    # disabled in the default module config and are not implemented here.
    out, v_flat = pl.pallas_call(
        kernel,
        out_shape=(
            jax.ShapeDtypeStruct((B, N, dim), jnp.float32),
            jax.ShapeDtypeStruct((B, N, dim_inner), jnp.float32),
        ),
        grid_spec=pltpu.PrefetchScalarGridSpec(
            num_scalar_prefetch=0,
            grid=(B,),
            in_specs=[
                pl.BlockSpec((1, N, dim), lambda b: (b, 0, 0)),
                pl.BlockSpec((1, dim), lambda b: (0, 0)),
                pl.BlockSpec((dim, 3 * dim_inner), lambda b: (0, 0)),
                pl.BlockSpec((dim, heads), lambda b: (0, 0)),
                pl.BlockSpec((1, heads), lambda b: (0, 0)),
                pl.BlockSpec((dim_inner, dim), lambda b: (0, 0)),
            ],
            out_specs=(
                pl.BlockSpec((1, N, dim), lambda b: (b, 0, 0)),
                pl.BlockSpec((1, N, dim_inner), lambda b: (b, 0, 0)),
            ),
        ),
        compiler_params=pltpu.CompilerParams(
            dimension_semantics=("parallel",),
            vmem_limit_bytes=64 * 1024 * 1024),
    )(x, g_scaled, wqkv_s, wg_b, bg2, wo_b)

    # Layout plumbing outside the kernel: (B, N, h*d) -> (B, heads, N, d).
    orig_v = jnp.transpose(v_flat.reshape(B, N, heads, dim_head), (0, 2, 1, 3))
    return out, orig_v


# ------------------------------- reference -----------------------------------
def attention_ref(x, gamma, wqkv, wg, bg, wo, heads, dim_head):
    B, N, dim = x.shape
    l2 = jnp.sqrt(jnp.sum(x * x, axis=-1, keepdims=True))
    xn = x / jnp.maximum(l2, 1e-12) * (dim ** 0.5) * gamma

    qkv = xn @ wqkv                                        # (B, N, 3*h*d)
    qkv = qkv.reshape(B, N, 3, heads, dim_head)
    qkv = jnp.transpose(qkv, (2, 0, 3, 1, 4))              # (3, B, h, N, d)
    q, k, v = qkv[0], qkv[1], qkv[2]

    scale = dim_head ** -0.5
    s = jnp.einsum('bhnd,bhmd->bhnm', q, k) * scale
    p = jax.nn.softmax(s, axis=-1)
    o = jnp.einsum('bhnm,bhmd->bhnd', p, v)                # (B, h, N, d)

    gates = jax.nn.sigmoid(xn @ wg + bg)                   # (B, N, h)
    o = o * jnp.transpose(gates, (0, 2, 1))[..., None]
    o = jnp.transpose(o, (0, 2, 1, 3)).reshape(B, N, heads * dim_head)
    return o @ wo, v


# --------------------------------- main ---------------------------------------
if __name__ == "__main__":
    B, N = 2, 16
    dim = 128
    heads = 8
    dim_head = 64
    dim_inner = heads * dim_head

    key = jax.random.PRNGKey(0)
    kx, kq, kg, kb, ko = jax.random.split(key, 5)

    x = jax.random.normal(kx, (B, N, dim), dtype=jnp.float32)
    gamma = jnp.ones((dim,), dtype=jnp.float32)                      # RMSNorm.gamma

    bound_in = 1.0 / (dim ** 0.5)
    wqkv = jax.random.uniform(kq, (dim, 3 * dim_inner),
                              minval=-bound_in, maxval=bound_in, dtype=jnp.float32)
    wg = jax.random.uniform(kg, (dim, heads),
                            minval=-bound_in, maxval=bound_in, dtype=jnp.float32)
    bg = jax.random.uniform(kb, (heads,),
                            minval=-bound_in, maxval=bound_in, dtype=jnp.float32)
    bound_out = 1.0 / (dim_inner ** 0.5)
    wo = jax.random.uniform(ko, (dim_inner, dim),
                            minval=-bound_out, maxval=bound_out, dtype=jnp.float32)

    out, orig_v = attention_pallas(x, gamma, wqkv, wg, bg, wo, heads, dim_head)
    out = jax.block_until_ready(out)
    orig_v = jax.block_until_ready(orig_v)

    ref_out, ref_v = attention_ref(x, gamma, wqkv, wg, bg, wo, heads, dim_head)

    assert out.shape == (B, N, dim), out.shape
    assert orig_v.shape == (B, heads, N, dim_head), orig_v.shape
    # Tolerances loosened vs the pure-f32 kernel: MXU operands are bf16
    # (f32 accumulation) per the performance review.
    assert jnp.allclose(out, ref_out, atol=3e-2, rtol=3e-2), \
        float(jnp.max(jnp.abs(out - ref_out)))
    assert jnp.allclose(orig_v, ref_v, atol=3e-2, rtol=3e-2), \
        float(jnp.max(jnp.abs(orig_v - ref_v)))

    print("KERNEL_OK")
</pallas_src>

<mosaic_0001>
module attributes {stable_mosaic.version = 11 : i64} {
  func.func @_attention_kernel(%arg0: i32, %arg1: memref<1x16x128xf32, #tpu.memory_space<vmem>>, %arg2: memref<1x128xf32, #tpu.memory_space<vmem>>, %arg3: memref<128x1536xbf16, #tpu.memory_space<vmem>>, %arg4: memref<128x8xbf16, #tpu.memory_space<vmem>>, %arg5: memref<1x8xf32, #tpu.memory_space<vmem>>, %arg6: memref<512x128xbf16, #tpu.memory_space<vmem>>, %arg7: memref<1x16x128xf32, #tpu.memory_space<vmem>>, %arg8: memref<1x16x512xf32, #tpu.memory_space<vmem>>) attributes {dimension_semantics = [#tpu.dimension_semantics<parallel>], iteration_bounds = array<i64: 2>, scalar_prefetch = 0 : i64, scratch_operands = 0 : i64, tpu.core_type = #tpu.core_type<tc>, window_params = [{transform_indices = @transform_0, window_bounds = array<i64: 1, 16, 128>}, {pipeline_mode = #tpu.pipeline_mode<synchronous>, transform_indices = @transform_1, window_bounds = array<i64: 1, 128>}, {pipeline_mode = #tpu.pipeline_mode<synchronous>, transform_indices = @transform_2, window_bounds = array<i64: 128, 1536>}, {pipeline_mode = #tpu.pipeline_mode<synchronous>, transform_indices = @transform_3, window_bounds = array<i64: 128, 8>}, {pipeline_mode = #tpu.pipeline_mode<synchronous>, transform_indices = @transform_4, window_bounds = array<i64: 1, 8>}, {pipeline_mode = #tpu.pipeline_mode<synchronous>, transform_indices = @transform_5, window_bounds = array<i64: 512, 128>}, {transform_indices = @transform_6, window_bounds = array<i64: 1, 16, 128>}, {transform_indices = @transform_7, window_bounds = array<i64: 1, 16, 512>}]} {
    %c0 = arith.constant 0 : index
    %c0_0 = arith.constant 0 : index
    %c0_1 = arith.constant 0 : index
    %0 = vector.load %arg1[%c0, %c0_0, %c0_1] : memref<1x16x128xf32, #tpu.memory_space<vmem>>, vector<1x16x128xf32>
    %1 = vector.shape_cast %0 : vector<1x16x128xf32> to vector<16x128xf32>
    %c0_2 = arith.constant 0 : index
    %c0_3 = arith.constant 0 : index
    %2 = vector.load %arg2[%c0_2, %c0_3] : memref<1x128xf32, #tpu.memory_space<vmem>>, vector<1x128xf32>
    %3 = arith.mulf %1, %1 : vector<16x128xf32>
    %cst = arith.constant dense<0.000000e+00> : vector<16xf32>
    %4 = vector.multi_reduction <add>, %3, %cst [1] : vector<16x128xf32> to vector<16xf32>
    %5 = vector.shape_cast %4 : vector<16xf32> to vector<16x1xf32>
    %cst_4 = arith.constant 1.000000e-24 : f32
    %6 = vector.broadcast %cst_4 : f32 to vector<16x1xf32>
    %7 = arith.maximumf %5, %6 : vector<16x1xf32>
    %8 = math.rsqrt %7 : vector<16x1xf32>
    %9 = vector.broadcast %8 : vector<16x1xf32> to vector<16x128xf32>
    %10 = arith.mulf %1, %9 : vector<16x128xf32>
    %11 = vector.broadcast %2 : vector<1x128xf32> to vector<16x128xf32>
    %12 = arith.mulf %10, %11 : vector<16x128xf32>
    %13 = arith.truncf %12 : vector<16x128xf32> to vector<16x128xbf16>
    %c0_5 = arith.constant 0 : index
    %c0_6 = arith.constant 0 : index
    %14 = vector.load %arg3[%c0_5, %c0_6] : memref<128x1536xbf16, #tpu.memory_space<vmem>>, vector<128x1536xbf16>
    %cst_7 = arith.constant dense<0.000000e+00> : vector<16x1536xf32>
    %15 = tpu.matmul %13, %14, %cst_7 {dimension_numbers = #tpu.dot_dimension_numbers<[1], [0], [0], [1], [0, 0, 1, 1], [], []>} : vector<16x128xbf16>, vector<128x1536xbf16>, vector<16x1536xf32> -> vector<16x1536xf32>
    %16 = vector.extract_strided_slice %15 {offsets = [0, 1024], sizes = [16, 512], strides = [1, 1]} : vector<16x1536xf32> to vector<16x512xf32>
    %c0_8 = arith.constant 0 : index
    %c0_9 = arith.constant 0 : index
    %c0_10 = arith.constant 0 : index
    %17 = vector.load %arg8[%c0_8, %c0_9, %c0_10] : memref<1x16x512xf32, #tpu.memory_space<vmem>>, vector<1x16x512xf32>
    %18 = vector.shape_cast %17 : vector<1x16x512xf32> to vector<16x512xf32>
    %19 = vector.shape_cast %16 : vector<16x512xf32> to vector<1x16x512xf32>
    tpu.vector_store %arg8[%c0_8, %c0_9, %c0_10], %19 {strides = array<i32>} : memref<1x16x512xf32, #tpu.memory_space<vmem>>, vector<1x16x512xf32>,
    %c0_11 = arith.constant 0 : index
    %c0_12 = arith.constant 0 : index
    %20 = vector.load %arg4[%c0_11, %c0_12] : memref<128x8xbf16, #tpu.memory_space<vmem>>, vector<128x8xbf16>
    %cst_13 = arith.constant dense<0.000000e+00> : vector<16x8xf32>
    %21 = tpu.matmul %13, %20, %cst_13 {dimension_numbers = #tpu.dot_dimension_numbers<[1], [0], [0], [1], [0, 0, 1, 1], [], []>} : vector<16x128xbf16>, vector<128x8xbf16>, vector<16x8xf32> -> vector<16x8xf32>
    %c0_14 = arith.constant 0 : index
    %c0_15 = arith.constant 0 : index
    %22 = vector.load %arg5[%c0_14, %c0_15] : memref<1x8xf32, #tpu.memory_space<vmem>>, vector<1x8xf32>
    %23 = vector.broadcast %22 : vector<1x8xf32> to vector<16x8xf32>
    %24 = arith.addf %21, %23 : vector<16x8xf32>
    %25 = arith.negf %24 : vector<16x8xf32>
    %26 = math.exp %25 : vector<16x8xf32>
    %cst_16 = arith.constant 1.000000e+00 : f32
    %27 = vector.broadcast %cst_16 : f32 to vector<16x8xf32>
    %28 = arith.addf %27, %26 : vector<16x8xf32>
    %29 = arith.divf %27, %28 : vector<16x8xf32>
    %30 = vector.extract_strided_slice %15 {offsets = [0, 0], sizes = [16, 64], strides = [1, 1]} : vector<16x1536xf32> to vector<16x64xf32>
    %31 = arith.truncf %30 : vector<16x64xf32> to vector<16x64xbf16>
    %32 = vector.extract_strided_slice %15 {offsets = [0, 512], sizes = [16, 64], strides = [1, 1]} : vector<16x1536xf32> to vector<16x64xf32>
    %33 = arith.truncf %32 : vector<16x64xf32> to vector<16x64xbf16>
    %34 = vector.extract_strided_slice %15 {offsets = [0, 1024], sizes = [16, 64], strides = [1, 1]} : vector<16x1536xf32> to vector<16x64xf32>
    %35 = arith.truncf %34 : vector<16x64xf32> to vector<16x64xbf16>
    %cst_17 = arith.constant dense<0.000000e+00> : vector<16x16xf32>
    %36 = tpu.matmul %31, %33, %cst_17 {dimension_numbers = #tpu.dot_dimension_numbers<[1], [1], [0], [0], [0, 0, 1, 0], [], []>} : vector<16x64xbf16>, vector<16x64xbf16>, vector<16x16xf32> -> vector<16x16xf32>
    %cst_18 = arith.constant dense<0xFF800000> : vector<16xf32>
    %37 = vector.multi_reduction <maximumf>, %36, %cst_18 [1] : vector<16x16xf32> to vector<16xf32>
    %38 = vector.shape_cast %37 : vector<16xf32> to vector<16x1xf32>
    %39 = vector.broadcast %38 : vector<16x1xf32> to vector<16x16xf32>
    %40 = arith.subf %36, %39 : vector<16x16xf32>
    %41 = math.exp %40 : vector<16x16xf32>
    %cst_19 = arith.constant dense<0.000000e+00> : vector<16xf32>
    %42 = vector.multi_reduction <add>, %41, %cst_19 [1] : vector<16x16xf32> to vector<16xf32>
    %43 = vector.shape_cast %42 : vector<16xf32> to vector<16x1xf32>
    %44 = arith.truncf %41 : vector<16x16xf32> to vector<16x16xbf16>
    %cst_20 = arith.constant dense<0.000000e+00> : vector<16x64xf32>
    %45 = tpu.matmul %44, %35, %cst_20 {dimension_numbers = #tpu.dot_dimension_numbers<[1], [0], [0], [1], [0, 0, 1, 1], [], []>} : vector<16x16xbf16>, vector<16x64xbf16>, vector<16x64xf32> -> vector<16x64xf32>
    %46 = vector.extract_strided_slice %29 {offsets = [0, 0], sizes = [16, 1], strides = [1, 1]} : vector<16x8xf32> to vector<16x1xf32>
    %47 = tpu.reciprocal %43 {approx = true} : vector<16x1xf32> -> vector<16x1xf32>
    %48 = arith.mulf %46, %47 : vector<16x1xf32>
    %49 = vector.broadcast %48 : vector<16x1xf32> to vector<16x64xf32>
    %50 = arith.mulf %45, %49 : vector<16x64xf32>
    %51 = vector.extract_strided_slice %15 {offsets = [0, 64], sizes = [16, 64], strides = [1, 1]} : vector<16x1536xf32> to vector<16x64xf32>
    %52 = arith.truncf %51 : vector<16x64xf32> to vector<16x64xbf16>
    %53 = vector.extract_strided_slice %15 {offsets = [0, 576], sizes = [16, 64], strides = [1, 1]} : vector<16x1536xf32> to vector<16x64xf32>
    %54 = arith.truncf %53 : vector<16x64xf32> to vector<16x64xbf16>
    %55 = vector.extract_strided_slice %15 {offsets = [0, 1088], sizes = [16, 64], strides = [1, 1]} : vector<16x1536xf32> to vector<16x64xf32>
    %56 = arith.truncf %55 : vector<16x64xf32> to vector<16x64xbf16>
    %cst_21 = arith.constant dense<0.000000e+00> : vector<16x16xf32>
    %57 = tpu.matmul %52, %54, %cst_21 {dimension_numbers = #tpu.dot_dimension_numbers<[1], [1], [0], [0], [0, 0, 1, 0], [], []>} : vector<16x64xbf16>, vector<16x64xbf16>, vector<16x16xf32> -> vector<16x16xf32>
    %cst_22 = arith.constant dense<0xFF800000> : vector<16xf32>
    %58 = vector.multi_reduction <maximumf>, %57, %cst_22 [1] : vector<16x16xf32> to vector<16xf32>
    %59 = vector.shape_cast %58 : vector<16xf32> to vector<16x1xf32>
    %60 = vector.broadcast %59 : vector<16x1xf32> to vector<16x16xf32>
    %61 = arith.subf %57, %60 : vector<16x16xf32>
    %62 = math.exp %61 : vector<16x16xf32>
    %cst_23 = arith.constant dense<0.000000e+00> : vector<16xf32>
    %63 = vector.multi_reduction <add>, %62, %cst_23 [1] : vector<16x16xf32> to vector<16xf32>
    %64 = vector.shape_cast %63 : vector<16xf32> to vector<16x1xf32>
    %65 = arith.truncf %62 : vector<16x16xf32> to vector<16x16xbf16>
    %cst_24 = arith.constant dense<0.000000e+00> : vector<16x64xf32>
    %66 = tpu.matmul %65, %56, %cst_24 {dimension_numbers = #tpu.dot_dimension_numbers<[1], [0], [0], [1], [0, 0, 1, 1], [], []>} : vector<16x16xbf16>, vector<16x64xbf16>, vector<16x64xf32> -> vector<16x64xf32>
    %67 = vector.extract_strided_slice %29 {offsets = [0, 1], sizes = [16, 1], strides = [1, 1]} : vector<16x8xf32> to vector<16x1xf32>
    %68 = tpu.reciprocal %64 {approx = true} : vector<16x1xf32> -> vector<16x1xf32>
    %69 = arith.mulf %67, %68 : vector<16x1xf32>
    %70 = vector.broadcast %69 : vector<16x1xf32> to vector<16x64xf32>
    %71 = arith.mulf %66, %70 : vector<16x64xf32>
    %72 = vector.extract_strided_slice %15 {offsets = [0, 128], sizes = [16, 64], strides = [1, 1]} : vector<16x1536xf32> to vector<16x64xf32>
    %73 = arith.truncf %72 : vector<16x64xf32> to vector<16x64xbf16>
    %74 = vector.extract_strided_slice %15 {offsets = [0, 640], sizes = [16, 64], strides = [1, 1]} : vector<16x1536xf32> to vector<16x64xf32>
    %75 = arith.truncf %74 : vector<16x64xf32> to vector<16x64xbf16>
    %76 = vector.extract_strided_slice %15 {offsets = [0, 1152], sizes = [16, 64], strides = [1, 1]} : vector<16x1536xf32> to vector<16x64xf32>
    %77 = arith.truncf %76 : vector<16x64xf32> to vector<16x64xbf16>
    %cst_25 = arith.constant dense<0.000000e+00> : vector<16x16xf32>
    %78 = tpu.matmul %73, %75, %cst_25 {dimension_numbers = #tpu.dot_dimension_numbers<[1], [1], [0], [0], [0, 0, 1, 0], [], []>} : vector<16x64xbf16>, vector<16x64xbf16>, vector<16x16xf32> -> vector<16x16xf32>
    %cst_26 = arith.constant dense<0xFF800000> : vector<16xf32>
    %79 = vector.multi_reduction <maximumf>, %78, %cst_26 [1] : vector<16x16xf32> to vector<16xf32>
    %80 = vector.shape_cast %79 : vector<16xf32> to vector<16x1xf32>
    %81 = vector.broadcast %80 : vector<16x1xf32> to vector<16x16xf32>
    %82 = arith.subf %78, %81 : vector<16x16xf32>
    %83 = math.exp %82 : vector<16x16xf32>
    %cst_27 = arith.constant dense<0.000000e+00> : vector<16xf32>
    %84 = vector.multi_reduction <add>, %83, %cst_27 [1] : vector<16x16xf32> to vector<16xf32>
    %85 = vector.shape_cast %84 : vector<16xf32> to vector<16x1xf32>
    %86 = arith.truncf %83 : vector<16x16xf32> to vector<16x16xbf16>
    %cst_28 = arith.constant dense<0.000000e+00> : vector<16x64xf32>
    %87 = tpu.matmul %86, %77, %cst_28 {dimension_numbers = #tpu.dot_dimension_numbers<[1], [0], [0], [1], [0, 0, 1, 1], [], []>} : vector<16x16xbf16>, vector<16x64xbf16>, vector<16x64xf32> -> vector<16x64xf32>
    %88 = vector.extract_strided_slice %29 {offsets = [0, 2], sizes = [16, 1], strides = [1, 1]} : vector<16x8xf32> to vector<16x1xf32>
    %89 = tpu.reciprocal %85 {approx = true} : vector<16x1xf32> -> vector<16x1xf32>
    %90 = arith.mulf %88, %89 : vector<16x1xf32>
    %91 = vector.broadcast %90 : vector<16x1xf32> to vector<16x64xf32>
    %92 = arith.mulf %87, %91 : vector<16x64xf32>
    %93 = vector.extract_strided_slice %15 {offsets = [0, 192], sizes = [16, 64], strides = [1, 1]} : vector<16x1536xf32> to vector<16x64xf32>
    %94 = arith.truncf %93 : vector<16x64xf32> to vector<16x64xbf16>
    %95 = vector.extract_strided_slice %15 {offsets = [0, 704], sizes = [16, 64], strides = [1, 1]} : vector<16x1536xf32> to vector<16x64xf32>
    %96 = arith.truncf %95 : vector<16x64xf32> to vector<16x64xbf16>
    %97 = vector.extract_strided_slice %15 {offsets = [0, 1216], sizes = [16, 64], strides = [1, 1]} : vector<16x1536xf32> to vector<16x64xf32>
    %98 = arith.truncf %97 : vector<16x64xf32> to vector<16x64xbf16>
    %cst_29 = arith.constant dense<0.000000e+00> : vector<16x16xf32>
    %99 = tpu.matmul %94, %96, %cst_29 {dimension_numbers = #tpu.dot_dimension_numbers<[1], [1], [0], [0], [0, 0, 1, 0], [], []>} : vector<16x64xbf16>, vector<16x64xbf16>, vector<16x16xf32> -> vector<16x16xf32>
    %cst_30 = arith.constant dense<0xFF800000> : vector<16xf32>
    %100 = vector.multi_reduction <maximumf>, %99, %cst_30 [1] : vector<16x16xf32> to vector<16xf32>
    %101 = vector.shape_cast %100 : vector<16xf32> to vector<16x1xf32>
    %102 = vector.broadcast %101 : vector<16x1xf32> to vector<16x16xf32>
    %103 = arith.subf %99, %102 : vector<16x16xf32>
    %104 = math.exp %103 : vector<16x16xf32>
    %cst_31 = arith.constant dense<0.000000e+00> : vector<16xf32>
    %105 = vector.multi_reduction <add>, %104, %cst_31 [1] : vector<16x16xf32> to vector<16xf32>
    %106 = vector.shape_cast %105 : vector<16xf32> to vector<16x1xf32>
    %107 = arith.truncf %104 : vector<16x16xf32> to vector<16x16xbf16>
    %cst_32 = arith.constant dense<0.000000e+00> : vector<16x64xf32>
    %108 = tpu.matmul %107, %98, %cst_32 {dimension_numbers = #tpu.dot_dimension_numbers<[1], [0], [0], [1], [0, 0, 1, 1], [], []>} : vector<16x16xbf16>, vector<16x64xbf16>, vector<16x64xf32> -> vector<16x64xf32>
    %109 = vector.extract_strided_slice %29 {offsets = [0, 3], sizes = [16, 1], strides = [1, 1]} : vector<16x8xf32> to vector<16x1xf32>
    %110 = tpu.reciprocal %106 {approx = true} : vector<16x1xf32> -> vector<16x1xf32>
    %111 = arith.mulf %109, %110 : vector<16x1xf32>
    %112 = vector.broadcast %111 : vector<16x1xf32> to vector<16x64xf32>
    %113 = arith.mulf %108, %112 : vector<16x64xf32>
    %114 = vector.extract_strided_slice %15 {offsets = [0, 256], sizes = [16, 64], strides = [1, 1]} : vector<16x1536xf32> to vector<16x64xf32>
    %115 = arith.truncf %114 : vector<16x64xf32> to vector<16x64xbf16>
    %116 = vector.extract_strided_slice %15 {offsets = [0, 768], sizes = [16, 64], strides = [1, 1]} : vector<16x1536xf32> to vector<16x64xf32>
    %117 = arith.truncf %116 : vector<16x64xf32> to vector<16x64xbf16>
    %118 = vector.extract_strided_slice %15 {offsets = [0, 1280], sizes = [16, 64], strides = [1, 1]} : vector<16x1536xf32> to vector<16x64xf32>
    %119 = arith.truncf %118 : vector<16x64xf32> to vector<16x64xbf16>
    %cst_33 = arith.constant dense<0.000000e+00> : vector<16x16xf32>
    %120 = tpu.matmul %115, %117, %cst_33 {dimension_numbers = #tpu.dot_dimension_numbers<[1], [1], [0], [0], [0, 0, 1, 0], [], []>} : vector<16x64xbf16>, vector<16x64xbf16>, vector<16x16xf32> -> vector<16x16xf32>
    %cst_34 = arith.constant dense<0xFF800000> : vector<16xf32>
    %121 = vector.multi_reduction <maximumf>, %120, %cst_34 [1] : vector<16x16xf32> to vector<16xf32>
    %122 = vector.shape_cast %121 : vector<16xf32> to vector<16x1xf32>
    %123 = vector.broadcast %122 : vector<16x1xf32> to vector<16x16xf32>
    %124 = arith.subf %120, %123 : vector<16x16xf32>
    %125 = math.exp %124 : vector<16x16xf32>
    %cst_35 = arith.constant dense<0.000000e+00> : vector<16xf32>
    %126 = vector.multi_reduction <add>, %125, %cst_35 [1] : vector<16x16xf32> to vector<16xf32>
    %127 = vector.shape_cast %126 : vector<16xf32> to vector<16x1xf32>
    %128 = arith.truncf %125 : vector<16x16xf32> to vector<16x16xbf16>
    %cst_36 = arith.constant dense<0.000000e+00> : vector<16x64xf32>
    %129 = tpu.matmul %128, %119, %cst_36 {dimension_numbers = #tpu.dot_dimension_numbers<[1], [0], [0], [1], [0, 0, 1, 1], [], []>} : vector<16x16xbf16>, vector<16x64xbf16>, vector<16x64xf32> -> vector<16x64xf32>
    %130 = vector.extract_strided_slice %29 {offsets = [0, 4], sizes = [16, 1], strides = [1, 1]} : vector<16x8xf32> to vector<16x1xf32>
    %131 = tpu.reciprocal %127 {approx = true} : vector<16x1xf32> -> vector<16x1xf32>
    %132 = arith.mulf %130, %131 : vector<16x1xf32>
    %133 = vector.broadcast %132 : vector<16x1xf32> to vector<16x64xf32>
    %134 = arith.mulf %129, %133 : vector<16x64xf32>
    %135 = vector.extract_strided_slice %15 {offsets = [0, 320], sizes = [16, 64], strides = [1, 1]} : vector<16x1536xf32> to vector<16x64xf32>
    %136 = arith.truncf %135 : vector<16x64xf32> to vector<16x64xbf16>
    %137 = vector.extract_strided_slice %15 {offsets = [0, 832], sizes = [16, 64], strides = [1, 1]} : vector<16x1536xf32> to vector<16x64xf32>
    %138 = arith.truncf %137 : vector<16x64xf32> to vector<16x64xbf16>
    %139 = vector.extract_strided_slice %15 {offsets = [0, 1344], sizes = [16, 64], strides = [1, 1]} : vector<16x1536xf32> to vector<16x64xf32>
    %140 = arith.truncf %139 : vector<16x64xf32> to vector<16x64xbf16>
    %cst_37 = arith.constant dense<0.000000e+00> : vector<16x16xf32>
    %141 = tpu.matmul %136, %138, %cst_37 {dimension_numbers = #tpu.dot_dimension_numbers<[1], [1], [0], [0], [0, 0, 1, 0], [], []>} : vector<16x64xbf16>, vector<16x64xbf16>, vector<16x16xf32> -> vector<16x16xf32>
    %cst_38 = arith.constant dense<0xFF800000> : vector<16xf32>
    %142 = vector.multi_reduction <maximumf>, %141, %cst_38 [1] : vector<16x16xf32> to vector<16xf32>
    %143 = vector.shape_cast %142 : vector<16xf32> to vector<16x1xf32>
    %144 = vector.broadcast %143 : vector<16x1xf32> to vector<16x16xf32>
    %145 = arith.subf %141, %144 : vector<16x16xf32>
    %146 = math.exp %145 : vector<16x16xf32>
    %cst_39 = arith.constant dense<0.000000e+00> : vector<16xf32>
    %147 = vector.multi_reduction <add>, %146, %cst_39 [1] : vector<16x16xf32> to vector<16xf32>
    %148 = vector.shape_cast %147 : vector<16xf32> to vector<16x1xf32>
    %149 = arith.truncf %146 : vector<16x16xf32> to vector<16x16xbf16>
    %cst_40 = arith.constant dense<0.000000e+00> : vector<16x64xf32>
    %150 = tpu.matmul %149, %140, %cst_40 {dimension_numbers = #tpu.dot_dimension_numbers<[1], [0], [0], [1], [0, 0, 1, 1], [], []>} : vector<16x16xbf16>, vector<16x64xbf16>, vector<16x64xf32> -> vector<16x64xf32>
    %151 = vector.extract_strided_slice %29 {offsets = [0, 5], sizes = [16, 1], strides = [1, 1]} : vector<16x8xf32> to vector<16x1xf32>
    %152 = tpu.reciprocal %148 {approx = true} : vector<16x1xf32> -> vector<16x1xf32>
    %153 = arith.mulf %151, %152 : vector<16x1xf32>
    %154 = vector.broadcast %153 : vector<16x1xf32> to vector<16x64xf32>
    %155 = arith.mulf %150, %154 : vector<16x64xf32>
    %156 = vector.extract_strided_slice %15 {offsets = [0, 384], sizes = [16, 64], strides = [1, 1]} : vector<16x1536xf32> to vector<16x64xf32>
    %157 = arith.truncf %156 : vector<16x64xf32> to vector<16x64xbf16>
    %158 = vector.extract_strided_slice %15 {offsets = [0, 896], sizes = [16, 64], strides = [1, 1]} : vector<16x1536xf32> to vector<16x64xf32>
    %159 = arith.truncf %158 : vector<16x64xf32> to vector<16x64xbf16>
    %160 = vector.extract_strided_slice %15 {offsets = [0, 1408], sizes = [16, 64], strides = [1, 1]} : vector<16x1536xf32> to vector<16x64xf32>
    %161 = arith.truncf %160 : vector<16x64xf32> to vector<16x64xbf16>
    %cst_41 = arith.constant dense<0.000000e+00> : vector<16x16xf32>
    %162 = tpu.matmul %157, %159, %cst_41 {dimension_numbers = #tpu.dot_dimension_numbers<[1], [1], [0], [0], [0, 0, 1, 0], [], []>} : vector<16x64xbf16>, vector<16x64xbf16>, vector<16x16xf32> -> vector<16x16xf32>
    %cst_42 = arith.constant dense<0xFF800000> : vector<16xf32>
    %163 = vector.multi_reduction <maximumf>, %162, %cst_42 [1] : vector<16x16xf32> to vector<16xf32>
    %164 = vector.shape_cast %163 : vector<16xf32> to vector<16x1xf32>
    %165 = vector.broadcast %164 : vector<16x1xf32> to vector<16x16xf32>
    %166 = arith.subf %162, %165 : vector<16x16xf32>
    %167 = math.exp %166 : vector<16x16xf32>
    %cst_43 = arith.constant dense<0.000000e+00> : vector<16xf32>
    %168 = vector.multi_reduction <add>, %167, %cst_43 [1] : vector<16x16xf32> to vector<16xf32>
    %169 = vector.shape_cast %168 : vector<16xf32> to vector<16x1xf32>
    %170 = arith.truncf %167 : vector<16x16xf32> to vector<16x16xbf16>
    %cst_44 = arith.constant dense<0.000000e+00> : vector<16x64xf32>
    %171 = tpu.matmul %170, %161, %cst_44 {dimension_numbers = #tpu.dot_dimension_numbers<[1], [0], [0], [1], [0, 0, 1, 1], [], []>} : vector<16x16xbf16>, vector<16x64xbf16>, vector<16x64xf32> -> vector<16x64xf32>
    %172 = vector.extract_strided_slice %29 {offsets = [0, 6], sizes = [16, 1], strides = [1, 1]} : vector<16x8xf32> to vector<16x1xf32>
    %173 = tpu.reciprocal %169 {approx = true} : vector<16x1xf32> -> vector<16x1xf32>
    %174 = arith.mulf %172, %173 : vector<16x1xf32>
    %175 = vector.broadcast %174 : vector<16x1xf32> to vector<16x64xf32>
    %176 = arith.mulf %171, %175 : vector<16x64xf32>
    %177 = vector.extract_strided_slice %15 {offsets = [0, 448], sizes = [16, 64], strides = [1, 1]} : vector<16x1536xf32> to vector<16x64xf32>
    %178 = arith.truncf %177 : vector<16x64xf32> to vector<16x64xbf16>
    %179 = vector.extract_strided_slice %15 {offsets = [0, 960], sizes = [16, 64], strides = [1, 1]} : vector<16x1536xf32> to vector<16x64xf32>
    %180 = arith.truncf %179 : vector<16x64xf32> to vector<16x64xbf16>
    %181 = vector.extract_strided_slice %15 {offsets = [0, 1472], sizes = [16, 64], strides = [1, 1]} : vector<16x1536xf32> to vector<16x64xf32>
    %182 = arith.truncf %181 : vector<16x64xf32> to vector<16x64xbf16>
    %cst_45 = arith.constant dense<0.000000e+00> : vector<16x16xf32>
    %183 = tpu.matmul %178, %180, %cst_45 {dimension_numbers = #tpu.dot_dimension_numbers<[1], [1], [0], [0], [0, 0, 1, 0], [], []>} : vector<16x64xbf16>, vector<16x64xbf16>, vector<16x16xf32> -> vector<16x16xf32>
    %cst_46 = arith.constant dense<0xFF800000> : vector<16xf32>
    %184 = vector.multi_reduction <maximumf>, %183, %cst_46 [1] : vector<16x16xf32> to vector<16xf32>
    %185 = vector.shape_cast %184 : vector<16xf32> to vector<16x1xf32>
    %186 = vector.broadcast %185 : vector<16x1xf32> to vector<16x16xf32>
    %187 = arith.subf %183, %186 : vector<16x16xf32>
    %188 = math.exp %187 : vector<16x16xf32>
    %cst_47 = arith.constant dense<0.000000e+00> : vector<16xf32>
    %189 = vector.multi_reduction <add>, %188, %cst_47 [1] : vector<16x16xf32> to vector<16xf32>
    %190 = vector.shape_cast %189 : vector<16xf32> to vector<16x1xf32>
    %191 = arith.truncf %188 : vector<16x16xf32> to vector<16x16xbf16>
    %cst_48 = arith.constant dense<0.000000e+00> : vector<16x64xf32>
    %192 = tpu.matmul %191, %182, %cst_48 {dimension_numbers = #tpu.dot_dimension_numbers<[1], [0], [0], [1], [0, 0, 1, 1], [], []>} : vector<16x16xbf16>, vector<16x64xbf16>, vector<16x64xf32> -> vector<16x64xf32>
    %193 = vector.extract_strided_slice %29 {offsets = [0, 7], sizes = [16, 1], strides = [1, 1]} : vector<16x8xf32> to vector<16x1xf32>
    %194 = tpu.reciprocal %190 {approx = true} : vector<16x1xf32> -> vector<16x1xf32>
    %195 = arith.mulf %193, %194 : vector<16x1xf32>
    %196 = vector.broadcast %195 : vector<16x1xf32> to vector<16x64xf32>
    %197 = arith.mulf %192, %196 : vector<16x64xf32>
    %198 = tpu.concatenate %50, %71, %92, %113, %134, %155, %176, %197 in 1 : vector<16x64xf32>, vector<16x64xf32>, vector<16x64xf32>, vector<16x64xf32>, vector<16x64xf32>, vector<16x64xf32>, vector<16x64xf32>, vector<16x64xf32> -> vector<16x512xf32>
    %199 = arith.truncf %198 : vector<16x512xf32> to vector<16x512xbf16>
    %c0_49 = arith.constant 0 : index
    %c0_50 = arith.constant 0 : index
    %200 = vector.load %arg6[%c0_49, %c0_50] : memref<512x128xbf16, #tpu.memory_space<vmem>>, vector<512x128xbf16>
    %cst_51 = arith.constant dense<0.000000e+00> : vector<16x128xf32>
    %201 = tpu.matmul %199, %200, %cst_51 {dimension_numbers = #tpu.dot_dimension_numbers<[1], [0], [0], [1], [0, 0, 1, 1], [], []>} : vector<16x512xbf16>, vector<512x128xbf16>, vector<16x128xf32> -> vector<16x128xf32>
    %c0_52 = arith.constant 0 : index
    %c0_53 = arith.constant 0 : index
    %c0_54 = arith.constant 0 : index
    %202 = vector.load %arg7[%c0_52, %c0_53, %c0_54] : memref<1x16x128xf32, #tpu.memory_space<vmem>>, vector<1x16x128xf32>
    %203 = vector.shape_cast %202 : vector<1x16x128xf32> to vector<16x128xf32>
    %204 = vector.shape_cast %201 : vector<16x128xf32> to vector<1x16x128xf32>
    tpu.vector_store %arg7[%c0_52, %c0_53, %c0_54], %204 {strides = array<i32>} : memref<1x16x128xf32, #tpu.memory_space<vmem>>, vector<1x16x128xf32>,
    return
  }
  func.func @transform_0(%arg0: i32) -> (i32, i32, i32) {
    %c0_i32 = arith.constant 0 : i32
    %c0_i32_0 = arith.constant 0 : i32
    %c0_i32_1 = arith.constant 0 : i32
    return %arg0, %c0_i32, %c0_i32_0 : i32, i32, i32
  }
  func.func @transform_1(%arg0: i32) -> (i32, i32) {
    %c0_i32 = arith.constant 0 : i32
    %c0_i32_0 = arith.constant 0 : i32
    %c0_i32_1 = arith.constant 0 : i32
    return %c0_i32, %c0_i32_0 : i32, i32
  }
  func.func @transform_2(%arg0: i32) -> (i32, i32) {
    %c0_i32 = arith.constant 0 : i32
    %c0_i32_0 = arith.constant 0 : i32
    %c0_i32_1 = arith.constant 0 : i32
    return %c0_i32, %c0_i32_0 : i32, i32
  }
  func.func @transform_3(%arg0: i32) -> (i32, i32) {
    %c0_i32 = arith.constant 0 : i32
    %c0_i32_0 = arith.constant 0 : i32
    %c0_i32_1 = arith.constant 0 : i32
    return %c0_i32, %c0_i32_0 : i32, i32
  }
  func.func @transform_4(%arg0: i32) -> (i32, i32) {
    %c0_i32 = arith.constant 0 : i32
    %c0_i32_0 = arith.constant 0 : i32
    %c0_i32_1 = arith.constant 0 : i32
    return %c0_i32, %c0_i32_0 : i32, i32
  }
  func.func @transform_5(%arg0: i32) -> (i32, i32) {
    %c0_i32 = arith.constant 0 : i32
    %c0_i32_0 = arith.constant 0 : i32
    %c0_i32_1 = arith.constant 0 : i32
    return %c0_i32, %c0_i32_0 : i32, i32
  }
  func.func @transform_6(%arg0: i32) -> (i32, i32, i32) {
    %c0_i32 = arith.constant 0 : i32
    %c0_i32_0 = arith.constant 0 : i32
    %c0_i32_1 = arith.constant 0 : i32
    return %arg0, %c0_i32, %c0_i32_0 : i32, i32, i32
  }
  func.func @transform_7(%arg0: i32) -> (i32, i32, i32) {
    %c0_i32 = arith.constant 0 : i32
    %c0_i32_0 = arith.constant 0 : i32
    %c0_i32_1 = arith.constant 0 : i32
    return %arg0, %c0_i32, %c0_i32_0 : i32, i32, i32
  }
}

</mosaic_0001>

<llo_original>
// kernel: tpu_custom_call.1
$region0: #{tpu_custom_call.1}
  #allocation0 [shape = 'u32[]', space=smem, size = 0x4, offset = 0x4, fixed_abs, tag = 'smem constant byte address 0x4 - core index']
  #allocation1 [shape = 'u32[144,128]{1,0:T(1,128)}', space=vmem, size = 0x12000, scoped, tag = 'internal scratch']
  %s0 = inlined_call_operand.hbm [shape: f32[2,16,128], index: 0, kind: input, shape index: {}]
  %s1 = inlined_call_operand.hbm [shape: f32[1,128], index: 1, kind: input, shape index: {}]
  %s2 = inlined_call_operand.hbm [shape: bf16[128,1536], index: 2, kind: input, shape index: {}]
  %s3 = inlined_call_operand.hbm [shape: bf16[128,8], index: 3, kind: input, shape index: {}]
  %s4 = inlined_call_operand.hbm [shape: f32[1,8], index: 4, kind: input, shape index: {}]
  %s5 = inlined_call_operand.hbm [shape: bf16[512,128], index: 5, kind: input, shape index: {}]
  %s6 = inlined_call_operand.hbm [shape: f32[2,16,128], index: 6, kind: output, shape index: {0}]
  %s7 = inlined_call_operand.hbm [shape: f32[2,16,512], index: 7, kind: output, shape index: {1}]
  %8 = xla_tuple %s6, %s7
  %s9 = sld [smem:[#allocation0]]
  $region89: #{tpu_custom_call.1} parent=0
    _
  %s11 = ssub.s32 1, %s9
  %s12 = scalar_select 0, %s11, %s9
  $region1: #{tpu_custom_call.1} parent=0
    #allocation2 [shape = 'u8[16384]{0}', space=vmem, size = 0x4000, scoped, tag = 'input window, operand 0']
    #allocation3 [shape = 's32[2]{0}', space=sflag, size = 0x8, scoped, tag = 'scoped memory for tpu_custom_call.1']
    #allocation4 [shape = 's32[2]{0}', space=sflag, size = 0x8, scoped, tag = 'scoped memory for tpu_custom_call.1']
    #allocation5 [shape = 'u8[512]{0}', space=vmem, size = 0x400, scoped, tag = 'input window, operand 1, single buffered']
    #allocation6 [shape = 's32[1]{0}', space=sflag, size = 0x4, scoped, tag = 'scoped memory for tpu_custom_call.1']
    #allocation7 [shape = 'u8[393216]{0}', space=vmem, size = 0x60000, scoped, tag = 'input window, operand 2, single buffered']
    #allocation8 [shape = 'u8[32768]{0}', space=vmem, size = 0x8000, scoped, tag = 'input window, operand 3, single buffered']
    #allocation9 [shape = 's32[1]{0}', space=sflag, size = 0x4, scoped, tag = 'scoped memory for tpu_custom_call.1']
    #allocation10 [shape = 'u8[512]{0}', space=vmem, size = 0x400, scoped, tag = 'input window, operand 4, single buffered']
    #allocation11 [shape = 'u8[131072]{0}', space=vmem, size = 0x20000, scoped, tag = 'input window, operand 5, single buffered']
    #allocation12 [shape = 's32[1]{0}', space=sflag, size = 0x4, scoped, tag = 'scoped memory for tpu_custom_call.1']
    #allocation13 [shape = 'u8[16384]{0}', space=vmem, size = 0x4000, scoped, tag = 'output window, operand 0']
    #allocation14 [shape = 'u8[65536]{0}', space=vmem, size = 0x10000, scoped, tag = 'output window, operand 1']
    #allocation15 [shape = 's32[2]{0}', space=sflag, size = 0x8, scoped, tag = 'scoped memory for tpu_custom_call.1']
    %13 = vsyncpa [#allocation3], 0
    %s14 = scalar_lea.sflag [#allocation3], 1
    %15 = vsyncpa %s14, 0
    %16 = vsyncpa [#allocation6], 0
    %17 = vsyncpa [#allocation9], 0
    %18 = vsyncpa [#allocation12], 0
    %19 = vsyncpa [#allocation4], 0
    %s20 = scalar_lea.sflag [#allocation4], 1
    %21 = vsyncpa %s20, 0
    %22 = vsyncpa [#allocation15], 0
    %s23 = scalar_lea.sflag [#allocation15], 1
    %24 = vsyncpa %s23, 0
    loop: start=0, step=1, limit=4
    $region2: #{tpu_custom_call.1} parent=1 // loop_pre_header
      _
    $region3: #{tpu_custom_call.1} parent=1 // loop_header
      %s26 = sphi 0, %s30
      %p27 = scmp.ge.s32.totalorder %s26, 4
      %s36 = sphi 0, %s38
      %s39 = sphi 0, %s36
      %s40 = sphi 0, %s39
      %s56 = sphi 0, %s40
      %s60 = sphi 0, %s60
      %s62 = sphi 0, %s60
      %s63 = sphi 0, %s62
      %s77 = sphi 0, %s63
      %s81 = sphi 0, %s81
      %s83 = sphi 0, %s81
      %s84 = sphi 0, %s83
      %s98 = sphi 0, %s84
      %s102 = sphi 0, %s102
      %s104 = sphi 0, %s102
      %s105 = sphi 0, %s104
      %s119 = sphi 0, %s105
      %s123 = sphi 0, %s123
      %s125 = sphi 0, %s123
      %s126 = sphi 0, %s125
      %s140 = sphi 0, %s126
      %s144 = sphi 0, %s144
      %s146 = sphi 0, %s144
      %s147 = sphi 0, %s146
      %s161 = sphi 0, %s147
      %s167 = sphi 0, %s169
      %s170 = sphi 0, %s167
      %s171 = sphi 0, %s170
      %s187 = sphi 0, %s171
      %s193 = sphi 0, %s195
      %s196 = sphi 0, %s193
      %s197 = sphi 0, %s196
      %s213 = sphi 0, %s197
    $region4: #{tpu_custom_call.1} parent=1 // loop_header_branch
      %29 = sbr.rel (%p27) target = $region8
    $region5: #{tpu_custom_call.1} parent=1 // loop_body
      %s31 = ssub.s32 %s26, 1
      %s32 = ssub.s32 %s26, 2
      %s33 = sadd.s32 %s26, 1
      %s34 = ssub.s32 %s26, %s33
      %p35 = scmp.eq.s32.totalorder %s34, 0
      %s37 = sadd.s32 %s36, 1
      %s38 = scalar_select %p35, %s36, %s37
      %p41 = pneg %p35
      %p42 = scmp.eq.s32.totalorder %s26, 1
      %p43 = por %p41, %p42
      %p44 = scmp.ne.s32.totalorder %s36, %s39
      %p45 = scmp.eq.s32.totalorder %s26, 0
      %p46 = por %p44, %p45
      %p47 = scmp.ne.s32.totalorder %s36, %s39
      %p48 = scmp.eq.s32.totalorder %s31, 1
      %p49 = por %p47, %p48
      %p50 = scmp.ne.s32.totalorder %s39, %s40
      %p51 = scmp.eq.s32.totalorder %s31, 0
      %p52 = por %p50, %p51
      %p53 = scmp.ne.s32.totalorder %s39, %s40
      %p54 = scmp.eq.s32.totalorder %s32, 1
      %p55 = por %p53, %p54
      %p57 = scmp.ne.s32.totalorder %s40, %s56
      %p58 = scmp.eq.s32.totalorder %s32, 0
      %p59 = por %p57, %p58
      %s61 = sadd.s32 %s60, 1
      %p64 = scmp.eq.s32.totalorder %s26, 1
      %p65 = scmp.ne.s32.totalorder %s60, %s62
      %p66 = scmp.eq.s32.totalorder %s26, 0
      %p67 = por %p65, %p66
      %p68 = scmp.ne.s32.totalorder %s60, %s62
      %p69 = scmp.eq.s32.totalorder %s31, 1
      %p70 = por %p68, %p69
      %p71 = scmp.ne.s32.totalorder %s62, %s63
      %p72 = scmp.eq.s32.totalorder %s31, 0
      %p73 = por %p71, %p72
      %p74 = scmp.ne.s32.totalorder %s62, %s63
      %p75 = scmp.eq.s32.totalorder %s32, 1
      %p76 = por %p74, %p75
      %p78 = scmp.ne.s32.totalorder %s63, %s77
      %p79 = scmp.eq.s32.totalorder %s32, 0
      %p80 = por %p78, %p79
      %s82 = sadd.s32 %s81, 1
      %p85 = scmp.eq.s32.totalorder %s26, 1
      %p86 = scmp.ne.s32.totalorder %s81, %s83
      %p87 = scmp.eq.s32.totalorder %s26, 0
      %p88 = por %p86, %p87
      %p89 = scmp.ne.s32.totalorder %s81, %s83
      %p90 = scmp.eq.s32.totalorder %s31, 1
      %p91 = por %p89, %p90
      %p92 = scmp.ne.s32.totalorder %s83, %s84
      %p93 = scmp.eq.s32.totalorder %s31, 0
      %p94 = por %p92, %p93
      %p95 = scmp.ne.s32.totalorder %s83, %s84
      %p96 = scmp.eq.s32.totalorder %s32, 1
      %p97 = por %p95, %p96
      %p99 = scmp.ne.s32.totalorder %s84, %s98
      %p100 = scmp.eq.s32.totalorder %s32, 0
      %p101 = por %p99, %p100
      %s103 = sadd.s32 %s102, 1
      %p106 = scmp.eq.s32.totalorder %s26, 1
      %p107 = scmp.ne.s32.totalorder %s102, %s104
      %p108 = scmp.eq.s32.totalorder %s26, 0
      %p109 = por %p107, %p108
      %p110 = scmp.ne.s32.totalorder %s102, %s104
      %p111 = scmp.eq.s32.totalorder %s31, 1
      %p112 = por %p110, %p111
      %p113 = scmp.ne.s32.totalorder %s104, %s105
      %p114 = scmp.eq.s32.totalorder %s31, 0
      %p115 = por %p113, %p114
      %p116 = scmp.ne.s32.totalorder %s104, %s105
      %p117 = scmp.eq.s32.totalorder %s32, 1
      %p118 = por %p116, %p117
      %p120 = scmp.ne.s32.totalorder %s105, %s119
      %p121 = scmp.eq.s32.totalorder %s32, 0
      %p122 = por %p120, %p121
      %s124 = sadd.s32 %s123, 1
      %p127 = scmp.eq.s32.totalorder %s26, 1
      %p128 = scmp.ne.s32.totalorder %s123, %s125
      %p129 = scmp.eq.s32.totalorder %s26, 0
      %p130 = por %p128, %p129
      %p131 = scmp.ne.s32.totalorder %s123, %s125
      %p132 = scmp.eq.s32.totalorder %s31, 1
      %p133 = por %p131, %p132
      %p134 = scmp.ne.s32.totalorder %s125, %s126
      %p135 = scmp.eq.s32.totalorder %s31, 0
      %p136 = por %p134, %p135
      %p137 = scmp.ne.s32.totalorder %s125, %s126
      %p138 = scmp.eq.s32.totalorder %s32, 1
      %p139 = por %p137, %p138
      %p141 = scmp.ne.s32.totalorder %s126, %s140
      %p142 = scmp.eq.s32.totalorder %s32, 0
      %p143 = por %p141, %p142
      %s145 = sadd.s32 %s144, 1
      %p148 = scmp.eq.s32.totalorder %s26, 1
      %p149 = scmp.ne.s32.totalorder %s144, %s146
      %p150 = scmp.eq.s32.totalorder %s26, 0
      %p151 = por %p149, %p150
      %p152 = scmp.ne.s32.totalorder %s144, %s146
      %p153 = scmp.eq.s32.totalorder %s31, 1
      %p154 = por %p152, %p153
      %p155 = scmp.ne.s32.totalorder %s146, %s147
      %p156 = scmp.eq.s32.totalorder %s31, 0
      %p157 = por %p155, %p156
      %p158 = scmp.ne.s32.totalorder %s146, %s147
      %p159 = scmp.eq.s32.totalorder %s32, 1
      %p160 = por %p158, %p159
      %p162 = scmp.ne.s32.totalorder %s147, %s161
      %p163 = scmp.eq.s32.totalorder %s32, 0
      %p164 = por %p162, %p163
      %s165 = ssub.s32 %s26, %s33
      %p166 = scmp.eq.s32.totalorder %s165, 0
      %s168 = sadd.s32 %s167, 1
      %s169 = scalar_select %p166, %s167, %s168
      %p172 = pneg %p166
      %p173 = scmp.eq.s32.totalorder %s26, 1
      %p174 = por %p172, %p173
      %p175 = scmp.ne.s32.totalorder %s167, %s170
      %p176 = scmp.eq.s32.totalorder %s26, 0
      %p177 = por %p175, %p176
      %p178 = scmp.ne.s32.totalorder %s167, %s170
      %p179 = scmp.eq.s32.totalorder %s31, 1
      %p180 = por %p178, %p179
      %p181 = scmp.ne.s32.totalorder %s170, %s171
      %p182 = scmp.eq.s32.totalorder %s31, 0
      %p183 = por %p181, %p182
      %p184 = scmp.ne.s32.totalorder %s170, %s171
      %p185 = scmp.eq.s32.totalorder %s32, 1
      %p186 = por %p184, %p185
      %p188 = scmp.ne.s32.totalorder %s171, %s187
      %p189 = scmp.eq.s32.totalorder %s32, 0
      %p190 = por %p188, %p189
      %s191 = ssub.s32 %s26, %s33
      %p192 = scmp.eq.s32.totalorder %s191, 0
      %s194 = sadd.s32 %s193, 1
      %s195 = scalar_select %p192, %s193, %s194
      %p198 = pneg %p192
      %p199 = scmp.eq.s32.totalorder %s26, 1
      %p200 = por %p198, %p199
      %p201 = scmp.ne.s32.totalorder %s193, %s196
      %p202 = scmp.eq.s32.totalorder %s26, 0
      %p203 = por %p201, %p202
      %p204 = scmp.ne.s32.totalorder %s193, %s196
      %p205 = scmp.eq.s32.totalorder %s31, 1
      %p206 = por %p204, %p205
      %p207 = scmp.ne.s32.totalorder %s196, %s197
      %p208 = scmp.eq.s32.totalorder %s31, 0
      %p209 = por %p207, %p208
      %p210 = scmp.ne.s32.totalorder %s196, %s197
      %p211 = scmp.eq.s32.totalorder %s32, 1
      %p212 = por %p210, %p211
      %p214 = scmp.ne.s32.totalorder %s197, %s213
      %p215 = scmp.eq.s32.totalorder %s32, 0
      %p216 = por %p214, %p215
      %p217 = scmp.le.s32.totalorder 1, %s26
      %p218 = scmp.lt.s32.totalorder %s26, 3
      %p219 = pnand %p217, %p218
      %p220 = pneg %p219
      // Predicated region
      $region9: #{tpu_custom_call.1} parent=5 // pred_check
        _
      $region10: #{tpu_custom_call.1} parent=5 // pred_check_branch
        %222 = sbr.rel (%p219) target = $region12
      $region11: #{tpu_custom_call.1} parent=5 // pred_region
        %s223 = ssub.s32 %s26, 1
        // Predicated region
        $region13: #{tpu_custom_call.1} parent=11 // pred_check
          %p224 = pneg %p73
        $region14: #{tpu_custom_call.1} parent=11 // pred_check_branch
          %226 = sbr.rel (%p224) target = $region16
        $region15: #{tpu_custom_call.1} parent=11 // pred_region
          %s228 = ssub.s32 16, 16
          %229 = vsyncadd [#allocation6], %s228
          %s231 = sshll.u32 [#allocation5], 4
          %s232 = int_to_ptr.vmem [resolvable:$true] %s231
          %234 = dma.hbm_to_vmem [thread:$0]  %s1, 16, %s232, [#allocation6]
        $region16: #{tpu_custom_call.1} parent=11 // pred_fallthru
          _
        // Predicated region
        $region17: #{tpu_custom_call.1} parent=11 // pred_check
          %p235 = pneg %p94
        $region18: #{tpu_custom_call.1} parent=11 // pred_check_branch
          %237 = sbr.rel (%p235) target = $region20
        $region19: #{tpu_custom_call.1} parent=11 // pred_region
          %s239 = ssub.s32 12288, 12288
          %240 = vsyncadd [#allocation6], %s239
          %s241 = sshll.u32 [#allocation7], 4
          %s242 = int_to_ptr.vmem [resolvable:$true] %s241
          %247 = dma.hbm_to_vmem [thread:$0]  %s2, 12288, %s242, [#allocation6], 768, 768, 48
        $region20: #{tpu_custom_call.1} parent=11 // pred_fallthru
          _
        // Predicated region
        $region21: #{tpu_custom_call.1} parent=11 // pred_check
          %p248 = pneg %p115
        $region22: #{tpu_custom_call.1} parent=11 // pred_check_branch
          %250 = sbr.rel (%p248) target = $region24
        $region23: #{tpu_custom_call.1} parent=11 // pred_region
          %s252 = ssub.s32 1024, 1024
          %253 = vsyncadd [#allocation9], %s252
          %s254 = sshll.u32 [#allocation8], 4
          %s255 = int_to_ptr.vmem [resolvable:$true] %s254
          %260 = dma.hbm_to_vmem [thread:$0]  %s3, 1024, %s255, [#allocation9], 64, 64, 4
        $region24: #{tpu_custom_call.1} parent=11 // pred_fallthru
          _
        // Predicated region
        $region25: #{tpu_custom_call.1} parent=11 // pred_check
          %p261 = pneg %p136
        $region26: #{tpu_custom_call.1} parent=11 // pred_check_branch
          %263 = sbr.rel (%p261) target = $region28
        $region27: #{tpu_custom_call.1} parent=11 // pred_region
          %s265 = ssub.s32 16, 16
          %266 = vsyncadd [#allocation9], %s265
          %s268 = sshll.u32 [#allocation10], 4
          %s269 = int_to_ptr.vmem [resolvable:$true] %s268
          %271 = dma.hbm_to_vmem [thread:$0]  %s4, 16, %s269, [#allocation9]
        $region28: #{tpu_custom_call.1} parent=11 // pred_fallthru
          _
        // Predicated region
        $region29: #{tpu_custom_call.1} parent=11 // pred_check
          %p272 = pneg %p157
        $region30: #{tpu_custom_call.1} parent=11 // pred_check_branch
          %274 = sbr.rel (%p272) target = $region32
        $region31: #{tpu_custom_call.1} parent=11 // pred_region
          %s276 = ssub.s32 4096, 4096
          %277 = vsyncadd [#allocation12], %s276
          %s278 = sshll.u32 [#allocation11], 4
          %s279 = int_to_ptr.vmem [resolvable:$true] %s278
          %284 = dma.hbm_to_vmem [thread:$0]  %s5, 4096, %s279, [#allocation12], 64, 64, 4
        $region32: #{tpu_custom_call.1} parent=11 // pred_fallthru
          _
      $region12: #{tpu_custom_call.1} parent=5 // pred_fallthru
        _
      %p285 = scmp.lt.s32.totalorder %s26, 2
      // Predicated region
      $region33: #{tpu_custom_call.1} parent=5 // pred_check
        %p286 = pneg %p285
      $region34: #{tpu_custom_call.1} parent=5 // pred_check_branch
        %288 = sbr.rel (%p286) target = $region36
      $region35: #{tpu_custom_call.1} parent=5 // pred_region
        // Predicated region
        $region37: #{tpu_custom_call.1} parent=35 // pred_check
          %p289 = pneg %p46
        $region38: #{tpu_custom_call.1} parent=35 // pred_check_branch
          %291 = sbr.rel (%p289) target = $region40
        $region39: #{tpu_custom_call.1} parent=35 // pred_region
          %s292 = sand.u32 %s36, 1
          %s293 = scalar_lea.sflag [#allocation3], %s292
          %s294 = sand.u32 %s36, 1
          %s295 = smul.addr %s294, 16
          %s296 = scalar_lea.vmem [#allocation2], %s295
          %s298 = ssub.s32 256, 256
          %299 = vsyncadd %s293, %s298
          %s300 = smul.addr %s26, 2
          %s301 = smul.addr %s300, 128
          %s302 = scalar_lea.hbm %s0, %s301
          %s303 = sshll.u32 %s296, 4
          %s304 = int_to_ptr.vmem [resolvable:$true] %s303
          %309 = dma.hbm_to_vmem [thread:$0]  %s302, 256, %s304, %s293, 128, 128, 8
        $region40: #{tpu_custom_call.1} parent=35 // pred_fallthru
          _
      $region36: #{tpu_custom_call.1} parent=5 // pred_fallthru
        _
      %p310 = scmp.le.s32.totalorder 1, %s26
      %p311 = scmp.lt.s32.totalorder %s26, 3
      %p312 = pnand %p310, %p311
      %p313 = pneg %p312
      // Predicated region
      $region41: #{tpu_custom_call.1} parent=5 // pred_check
        _
      $region42: #{tpu_custom_call.1} parent=5 // pred_check_branch
        %315 = sbr.rel (%p312) target = $region44
      $region43: #{tpu_custom_call.1} parent=5 // pred_region
        %s316 = ssub.s32 %s26, 1
        %s317 = sand.u32 %s39, 1
        %s318 = scalar_lea.sflag [#allocation3], %s317
        %s319 = sand.u32 %s39, 1
        %s320 = smul.addr %s319, 16
        %s321 = scalar_lea.vmem [#allocation2], %s320
        // Predicated region
        $region45: #{tpu_custom_call.1} parent=43 // pred_check
          %p322 = pneg %p52
        $region46: #{tpu_custom_call.1} parent=43 // pred_check_branch
          %324 = sbr.rel (%p322) target = $region48
        $region47: #{tpu_custom_call.1} parent=43 // pred_region
          %325 = dma.done %s318, 256
        $region48: #{tpu_custom_call.1} parent=43 // pred_fallthru
          _
        // Predicated region
        $region49: #{tpu_custom_call.1} parent=43 // pred_check
          %p326 = pneg %p73
        $region50: #{tpu_custom_call.1} parent=43 // pred_check_branch
          %328 = sbr.rel (%p326) target = $region52
        $region51: #{tpu_custom_call.1} parent=43 // pred_region
          %329 = dma.done [#allocation6], 16
        $region52: #{tpu_custom_call.1} parent=43 // pred_fallthru
          _
        // Predicated region
        $region53: #{tpu_custom_call.1} parent=43 // pred_check
          %p330 = pneg %p94
        $region54: #{tpu_custom_call.1} parent=43 // pred_check_branch
          %332 = sbr.rel (%p330) target = $region56
        $region55: #{tpu_custom_call.1} parent=43 // pred_region
          %333 = dma.done [#allocation6], 12288
        $region56: #{tpu_custom_call.1} parent=43 // pred_fallthru
          _
        // Predicated region
        $region57: #{tpu_custom_call.1} parent=43 // pred_check
          %p334 = pneg %p115
        $region58: #{tpu_custom_call.1} parent=43 // pred_check_branch
          %336 = sbr.rel (%p334) target = $region60
        $region59: #{tpu_custom_call.1} parent=43 // pred_region
          %337 = dma.done [#allocation9], 1024
        $region60: #{tpu_custom_call.1} parent=43 // pred_fallthru
          _
        // Predicated region
        $region61: #{tpu_custom_call.1} parent=43 // pred_check
          %p338 = pneg %p136
        $region62: #{tpu_custom_call.1} parent=43 // pred_check_branch
          %340 = sbr.rel (%p338) target = $region64
        $region63: #{tpu_custom_call.1} parent=43 // pred_region
          %341 = dma.done [#allocation9], 16
        $region64: #{tpu_custom_call.1} parent=43 // pred_fallthru
          _
        // Predicated region
        $region65: #{tpu_custom_call.1} parent=43 // pred_check
          %p342 = pneg %p157
        $region66: #{tpu_custom_call.1} parent=43 // pred_check_branch
          %344 = sbr.rel (%p342) target = $region68
        $region67: #{tpu_custom_call.1} parent=43 // pred_region
          %345 = dma.done [#allocation12], 4096
        $region68: #{tpu_custom_call.1} parent=43 // pred_fallthru
          _
        %s346 = sand.u32 %s39, 1
        %s347 = scalar_lea.sflag [#allocation3], %s346
        %s348 = sand.u32 %s39, 1
        %s349 = smul.addr %s348, 16
        %s350 = scalar_lea.vmem [#allocation2], %s349
        %p351 = pneg %p52
        %p352 = pneg %p49
        %p353 = pneg %p73
        %p354 = pneg %p70
        %p355 = pneg %p94
        %p356 = pneg %p91
        %p357 = pneg %p115
        %p358 = pneg %p112
        %p359 = pneg %p136
        %p360 = pneg %p133
        %p361 = pneg %p157
        %p362 = pneg %p154
        %p363 = pneg %p183
        %p364 = pneg %p180
        %s365 = sand.u32 %s170, 1
        %s366 = scalar_lea.sflag [#allocation4], %s365
        %s367 = sand.u32 %s170, 1
        %s368 = smul.addr %s367, 16
        %s369 = scalar_lea.vmem [#allocation13], %s368
        %p370 = pneg %p209
        %p371 = pneg %p206
        %s372 = sand.u32 %s196, 1
        %s373 = scalar_lea.sflag [#allocation15], %s372
        %s374 = sand.u32 %s196, 1
        %s375 = smul.addr %s374, 64
        %s376 = scalar_lea.vmem [#allocation14], %s375
        %v378 = vld [vmem:[%s321] sm:$0xff]
        %v379 = vld [vmem:[%s321 + $0x8] sm:$0xff]
        %v380 = vld [vmem:[#allocation5] sm:$0x1]
        %v381 = vmul.f32 %v378, %v378
        %v382 = vmul.f32 %v379, %v379
        %383 = vadd.xlane.f32.xlu0 %v381
        %v384 = vpop.xlane.xlu0 %383
        %385 = vadd.xlane.f32.xlu0 %v382
        %v386 = vpop.xlane.xlu0 %385
        %v387 = vmax.f32 %v384, 1e-24
        %v388 = vmax.f32 %v386, 1e-24
        %v389 = vrsqrt.pop %v387
        %v390 = vrsqrt.pop %v388
        %v391 = vmul.f32 %v378, %v389
        %v392 = vmul.f32 %v379, %v390
        %v394 = vlaneseq
        %v395 = vshrl.u32 %v394, 7
        %v396 = vsub.s32 0, %v395
        %v397 = vrot.slane %v380, %v396
        %v399 = vmul.f32 %v391, %v397
        %v400 = vmul.f32 %v392, %v397
        %v401 = vpack.c.bf16 %v400, %v399
        %v402 = vld [vmem:[#allocation7] sm:$0xff]
        %v403 = vld [vmem:[#allocation7 + $0x8] sm:$0xff]
        %v404 = vld [vmem:[#allocation7 + $0x10] sm:$0xff]
        %v405 = vld [vmem:[#allocation7 + $0x18] sm:$0xff]
        %v406 = vld [vmem:[#allocation7 + $0x20] sm:$0xff]
        %v407 = vld [vmem:[#allocation7 + $0x28] sm:$0xff]
        %v408 = vld [vmem:[#allocation7 + $0x30] sm:$0xff]
        %v409 = vld [vmem:[#allocation7 + $0x38] sm:$0xff]
        %v410 = vld [vmem:[#allocation7 + $0x40] sm:$0xff]
        %v411 = vld [vmem:[#allocation7 + $0x48] sm:$0xff]
        %v412 = vld [vmem:[#allocation7 + $0x50] sm:$0xff]
        %v413 = vld [vmem:[#allocation7 + $0x58] sm:$0xff]
        %v414 = vld [vmem:[#allocation7 + $0x60] sm:$0xff]
        %v415 = vld [vmem:[#allocation7 + $0x68] sm:$0xff]
        %v416 = vld [vmem:[#allocation7 + $0x70] sm:$0xff]
        %v417 = vld [vmem:[#allocation7 + $0x78] sm:$0xff]
        %v418 = vld [vmem:[#allocation7 + $0x80] sm:$0xff]
        %v419 = vld [vmem:[#allocation7 + $0x88] sm:$0xff]
        %v420 = vld [vmem:[#allocation7 + $0x90] sm:$0xff]
        %v421 = vld [vmem:[#allocation7 + $0x98] sm:$0xff]
        %v422 = vld [vmem:[#allocation7 + $0xa0] sm:$0xff]
        %v423 = vld [vmem:[#allocation7 + $0xa8] sm:$0xff]
        %v424 = vld [vmem:[#allocation7 + $0xb0] sm:$0xff]
        %v425 = vld [vmem:[#allocation7 + $0xb8] sm:$0xff]
        %v426 = vld [vmem:[#allocation7 + $0xc0] sm:$0xff]
        %v427 = vld [vmem:[#allocation7 + $0xc8] sm:$0xff]
        %v428 = vld [vmem:[#allocation7 + $0xd0] sm:$0xff]
        %v429 = vld [vmem:[#allocation7 + $0xd8] sm:$0xff]
        %v430 = vld [vmem:[#allocation7 + $0xe0] sm:$0xff]
        %v431 = vld [vmem:[#allocation7 + $0xe8] sm:$0xff]
        %v432 = vld [vmem:[#allocation7 + $0xf0] sm:$0xff]
        %v433 = vld [vmem:[#allocation7 + $0xf8] sm:$0xff]
        %v434 = vld [vmem:[#allocation7 + $0x100] sm:$0xff]
        %v435 = vld [vmem:[#allocation7 + $0x108] sm:$0xff]
        %v436 = vld [vmem:[#allocation7 + $0x110] sm:$0xff]
        %v437 = vld [vmem:[#allocation7 + $0x118] sm:$0xff]
        %v438 = vld [vmem:[#allocation7 + $0x120] sm:$0xff]
        %v439 = vld [vmem:[#allocation7 + $0x128] sm:$0xff]
        %v440 = vld [vmem:[#allocation7 + $0x130] sm:$0xff]
        %v441 = vld [vmem:[#allocation7 + $0x138] sm:$0xff]
        %v442 = vld [vmem:[#allocation7 + $0x140] sm:$0xff]
        %v443 = vld [vmem:[#allocation7 + $0x148] sm:$0xff]
        %v444 = vld [vmem:[#allocation7 + $0x150] sm:$0xff]
        %v445 = vld [vmem:[#allocation7 + $0x158] sm:$0xff]
        %v446 = vld [vmem:[#allocation7 + $0x160] sm:$0xff]
        %v447 = vld [vmem:[#allocation7 + $0x168] sm:$0xff]
        %v448 = vld [vmem:[#allocation7 + $0x170] sm:$0xff]
        %v449 = vld [vmem:[#allocation7 + $0x178] sm:$0xff]
        %v450 = vld [vmem:[#allocation7 + $0x180] sm:$0xff]
        %v451 = vld [vmem:[#allocation7 + $0x188] sm:$0xff]
        %v452 = vld [vmem:[#allocation7 + $0x190] sm:$0xff]
        %v453 = vld [vmem:[#allocation7 + $0x198] sm:$0xff]
        %v454 = vld [vmem:[#allocation7 + $0x1a0] sm:$0xff]
        %v455 = vld [vmem:[#allocation7 + $0x1a8] sm:$0xff]
        %v456 = vld [vmem:[#allocation7 + $0x1b0] sm:$0xff]
        %v457 = vld [vmem:[#allocation7 + $0x1b8] sm:$0xff]
        %v458 = vld [vmem:[#allocation7 + $0x1c0] sm:$0xff]
        %v459 = vld [vmem:[#allocation7 + $0x1c8] sm:$0xff]
        %v460 = vld [vmem:[#allocation7 + $0x1d0] sm:$0xff]
        %v461 = vld [vmem:[#allocation7 + $0x1d8] sm:$0xff]
        %v462 = vld [vmem:[#allocation7 + $0x1e0] sm:$0xff]
        %v463 = vld [vmem:[#allocation7 + $0x1e8] sm:$0xff]
        %v464 = vld [vmem:[#allocation7 + $0x1f0] sm:$0xff]
        %v465 = vld [vmem:[#allocation7 + $0x1f8] sm:$0xff]
        %v466 = vld [vmem:[#allocation7 + $0x200] sm:$0xff]
        %v467 = vld [vmem:[#allocation7 + $0x208] sm:$0xff]
        %v468 = vld [vmem:[#allocation7 + $0x210] sm:$0xff]
        %v469 = vld [vmem:[#allocation7 + $0x218] sm:$0xff]
        %v470 = vld [vmem:[#allocation7 + $0x220] sm:$0xff]
        %v471 = vld [vmem:[#allocation7 + $0x228] sm:$0xff]
        %v472 = vld [vmem:[#allocation7 + $0x230] sm:$0xff]
        %v473 = vld [vmem:[#allocation7 + $0x238] sm:$0xff]
        %v474 = vld [vmem:[#allocation7 + $0x240] sm:$0xff]
        %v475 = vld [vmem:[#allocation7 + $0x248] sm:$0xff]
        %v476 = vld [vmem:[#allocation7 + $0x250] sm:$0xff]
        %v477 = vld [vmem:[#allocation7 + $0x258] sm:$0xff]
        %v478 = vld [vmem:[#allocation7 + $0x260] sm:$0xff]
        %v479 = vld [vmem:[#allocation7 + $0x268] sm:$0xff]
        %v480 = vld [vmem:[#allocation7 + $0x270] sm:$0xff]
        %v481 = vld [vmem:[#allocation7 + $0x278] sm:$0xff]
        %v482 = vld [vmem:[#allocation7 + $0x280] sm:$0xff]
        %v483 = vld [vmem:[#allocation7 + $0x288] sm:$0xff]
        %v484 = vld [vmem:[#allocation7 + $0x290] sm:$0xff]
        %v485 = vld [vmem:[#allocation7 + $0x298] sm:$0xff]
        %v486 = vld [vmem:[#allocation7 + $0x2a0] sm:$0xff]
        %v487 = vld [vmem:[#allocation7 + $0x2a8] sm:$0xff]
        %v488 = vld [vmem:[#allocation7 + $0x2b0] sm:$0xff]
        %v489 = vld [vmem:[#allocation7 + $0x2b8] sm:$0xff]
        %v490 = vld [vmem:[#allocation7 + $0x2c0] sm:$0xff]
        %v491 = vld [vmem:[#allocation7 + $0x2c8] sm:$0xff]
        %v492 = vld [vmem:[#allocation7 + $0x2d0] sm:$0xff]
        %v493 = vld [vmem:[#allocation7 + $0x2d8] sm:$0xff]
        %v494 = vld [vmem:[#allocation7 + $0x2e0] sm:$0xff]
        %v495 = vld [vmem:[#allocation7 + $0x2e8] sm:$0xff]
        %v496 = vld [vmem:[#allocation7 + $0x2f0] sm:$0xff]
        %v497 = vld [vmem:[#allocation7 + $0x2f8] sm:$0xff]
        %v594 = vunpack.c.l.b16 %v402
        %v595 = vunpack.c.h.b16 %v402
        %v596 = vunpack.c.l.b16 %v403
        %v597 = vunpack.c.h.b16 %v403
        %v598 = vunpack.c.l.b16 %v404
        %v599 = vunpack.c.h.b16 %v404
        %v600 = vunpack.c.l.b16 %v405
        %v601 = vunpack.c.h.b16 %v405
        %v602 = vunpack.c.l.b16 %v406
        %v603 = vunpack.c.h.b16 %v406
        %v604 = vunpack.c.l.b16 %v407
        %v605 = vunpack.c.h.b16 %v407
        %v606 = vunpack.c.l.b16 %v408
        %v607 = vunpack.c.h.b16 %v408
        %v608 = vunpack.c.l.b16 %v409
        %v609 = vunpack.c.h.b16 %v409
        %v610 = vunpack.c.l.b16 %v410
        %v611 = vunpack.c.h.b16 %v410
        %v612 = vunpack.c.l.b16 %v411
        %v613 = vunpack.c.h.b16 %v411
        %v614 = vunpack.c.l.b16 %v412
        %v615 = vunpack.c.h.b16 %v412
        %v616 = vunpack.c.l.b16 %v413
        %v617 = vunpack.c.h.b16 %v413
        %v618 = vunpack.c.l.b16 %v414
        %v619 = vunpack.c.h.b16 %v414
        %v620 = vunpack.c.l.b16 %v415
        %v621 = vunpack.c.h.b16 %v415
        %v622 = vunpack.c.l.b16 %v416
        %v623 = vunpack.c.h.b16 %v416
        %v624 = vunpack.c.l.b16 %v417
        %v625 = vunpack.c.h.b16 %v417
        %v626 = vunpack.c.l.b16 %v418
        %v627 = vunpack.c.h.b16 %v418
        %v628 = vunpack.c.l.b16 %v419
        %v629 = vunpack.c.h.b16 %v419
        %v630 = vunpack.c.l.b16 %v420
        %v631 = vunpack.c.h.b16 %v420
        %v632 = vunpack.c.l.b16 %v421
        %v633 = vunpack.c.h.b16 %v421
        %v634 = vunpack.c.l.b16 %v422
        %v635 = vunpack.c.h.b16 %v422
        %v636 = vunpack.c.l.b16 %v423
        %v637 = vunpack.c.h.b16 %v423
        %v638 = vunpack.c.l.b16 %v424
        %v639 = vunpack.c.h.b16 %v424
        %v640 = vunpack.c.l.b16 %v425
        %v641 = vunpack.c.h.b16 %v425
        %v642 = vunpack.c.l.b16 %v426
        %v643 = vunpack.c.h.b16 %v426
        %v644 = vunpack.c.l.b16 %v427
        %v645 = vunpack.c.h.b16 %v427
        %v646 = vunpack.c.l.b16 %v428
        %v647 = vunpack.c.h.b16 %v428
        %v648 = vunpack.c.l.b16 %v429
        %v649 = vunpack.c.h.b16 %v429
        %v650 = vunpack.c.l.b16 %v430
        %v651 = vunpack.c.h.b16 %v430
        %v652 = vunpack.c.l.b16 %v431
        %v653 = vunpack.c.h.b16 %v431
        %v654 = vunpack.c.l.b16 %v432
        %v655 = vunpack.c.h.b16 %v432
        %v656 = vunpack.c.l.b16 %v433
        %v657 = vunpack.c.h.b16 %v433
        %v658 = vunpack.c.l.b16 %v434
        %v659 = vunpack.c.h.b16 %v434
        %v660 = vunpack.c.l.b16 %v435
        %v661 = vunpack.c.h.b16 %v435
        %v662 = vunpack.c.l.b16 %v436
        %v663 = vunpack.c.h.b16 %v436
        %v664 = vunpack.c.l.b16 %v437
        %v665 = vunpack.c.h.b16 %v437
        %v666 = vunpack.c.l.b16 %v438
        %v667 = vunpack.c.h.b16 %v438
        %v668 = vunpack.c.l.b16 %v439
        %v669 = vunpack.c.h.b16 %v439
        %v670 = vunpack.c.l.b16 %v440
        %v671 = vunpack.c.h.b16 %v440
        %v672 = vunpack.c.l.b16 %v441
        %v673 = vunpack.c.h.b16 %v441
        %v674 = vunpack.c.l.b16 %v442
        %v675 = vunpack.c.h.b16 %v442
        %v676 = vunpack.c.l.b16 %v443
        %v677 = vunpack.c.h.b16 %v443
        %v678 = vunpack.c.l.b16 %v444
        %v679 = vunpack.c.h.b16 %v444
        %v680 = vunpack.c.l.b16 %v445
        %v681 = vunpack.c.h.b16 %v445
        %v682 = vunpack.c.l.b16 %v446
        %v683 = vunpack.c.h.b16 %v446
        %v684 = vunpack.c.l.b16 %v447
        %v685 = vunpack.c.h.b16 %v447
        %v686 = vunpack.c.l.b16 %v448
        %v687 = vunpack.c.h.b16 %v448
        %v688 = vunpack.c.l.b16 %v449
        %v689 = vunpack.c.h.b16 %v449
        %v690 = vunpack.c.l.b16 %v450
        %v691 = vunpack.c.h.b16 %v450
        %v692 = vunpack.c.l.b16 %v451
        %v693 = vunpack.c.h.b16 %v451
        %v694 = vunpack.c.l.b16 %v452
        %v695 = vunpack.c.h.b16 %v452
        %v696 = vunpack.c.l.b16 %v453
        %v697 = vunpack.c.h.b16 %v453
        %v698 = vunpack.c.l.b16 %v454
        %v699 = vunpack.c.h.b16 %v454
        %v700 = vunpack.c.l.b16 %v455
        %v701 = vunpack.c.h.b16 %v455
        %v702 = vunpack.c.l.b16 %v456
        %v703 = vunpack.c.h.b16 %v456
        %v704 = vunpack.c.l.b16 %v457
        %v705 = vunpack.c.h.b16 %v457
        %v706 = vunpack.c.l.b16 %v458
        %v707 = vunpack.c.h.b16 %v458
        %v708 = vunpack.c.l.b16 %v459
        %v709 = vunpack.c.h.b16 %v459
        %v710 = vunpack.c.l.b16 %v460
        %v711 = vunpack.c.h.b16 %v460
        %v712 = vunpack.c.l.b16 %v461
        %v713 = vunpack.c.h.b16 %v461
        %v714 = vunpack.c.l.b16 %v462
        %v715 = vunpack.c.h.b16 %v462
        %v716 = vunpack.c.l.b16 %v463
        %v717 = vunpack.c.h.b16 %v463
        %v718 = vunpack.c.l.b16 %v464
        %v719 = vunpack.c.h.b16 %v464
        %v720 = vunpack.c.l.b16 %v465
        %v721 = vunpack.c.h.b16 %v465
        %v722 = vunpack.c.l.b16 %v466
        %v723 = vunpack.c.h.b16 %v466
        %v724 = vunpack.c.l.b16 %v467
        %v725 = vunpack.c.h.b16 %v467
        %v726 = vunpack.c.l.b16 %v468
        %v727 = vunpack.c.h.b16 %v468
        %v728 = vunpack.c.l.b16 %v469
        %v729 = vunpack.c.h.b16 %v469
        %v730 = vunpack.c.l.b16 %v470
        %v731 = vunpack.c.h.b16 %v470
        %v732 = vunpack.c.l.b16 %v471
        %v733 = vunpack.c.h.b16 %v471
        %v734 = vunpack.c.l.b16 %v472
        %v735 = vunpack.c.h.b16 %v472
        %v736 = vunpack.c.l.b16 %v473
        %v737 = vunpack.c.h.b16 %v473
        %v738 = vunpack.c.l.b16 %v474
        %v739 = vunpack.c.h.b16 %v474
        %v740 = vunpack.c.l.b16 %v475
        %v741 = vunpack.c.h.b16 %v475
        %v742 = vunpack.c.l.b16 %v476
        %v743 = vunpack.c.h.b16 %v476
        %v744 = vunpack.c.l.b16 %v477
        %v745 = vunpack.c.h.b16 %v477
        %v746 = vunpack.c.l.b16 %v478
        %v747 = vunpack.c.h.b16 %v478
        %v748 = vunpack.c.l.b16 %v479
        %v749 = vunpack.c.h.b16 %v479
        %v750 = vunpack.c.l.b16 %v480
        %v751 = vunpack.c.h.b16 %v480
        %v752 = vunpack.c.l.b16 %v481
        %v753 = vunpack.c.h.b16 %v481
        %v754 = vunpack.c.l.b16 %v482
        %v755 = vunpack.c.h.b16 %v482
        %v756 = vunpack.c.l.b16 %v483
        %v757 = vunpack.c.h.b16 %v483
        %v758 = vunpack.c.l.b16 %v484
        %v759 = vunpack.c.h.b16 %v484
        %v760 = vunpack.c.l.b16 %v485
        %v761 = vunpack.c.h.b16 %v485
        %v762 = vunpack.c.l.b16 %v486
        %v763 = vunpack.c.h.b16 %v486
        %v764 = vunpack.c.l.b16 %v487
        %v765 = vunpack.c.h.b16 %v487
        %v766 = vunpack.c.l.b16 %v488
        %v767 = vunpack.c.h.b16 %v488
        %v768 = vunpack.c.l.b16 %v489
        %v769 = vunpack.c.h.b16 %v489
        %v770 = vunpack.c.l.b16 %v490
        %v771 = vunpack.c.h.b16 %v490
        %v772 = vunpack.c.l.b16 %v491
        %v773 = vunpack.c.h.b16 %v491
        %v774 = vunpack.c.l.b16 %v492
        %v775 = vunpack.c.h.b16 %v492
        %v776 = vunpack.c.l.b16 %v493
        %v777 = vunpack.c.h.b16 %v493
        %v778 = vunpack.c.l.b16 %v494
        %v779 = vunpack.c.h.b16 %v494
        %v780 = vunpack.c.l.b16 %v495
        %v781 = vunpack.c.h.b16 %v495
        %v782 = vunpack.c.l.b16 %v496
        %v783 = vunpack.c.h.b16 %v496
        %v784 = vunpack.c.l.b16 %v497
        %v785 = vunpack.c.h.b16 %v497
        %v786 = vpack.c.b16 %v606, %v594
        %v787 = vpack.c.b16 %v607, %v595
        %v788 = vpack.c.b16 %v608, %v596
        %v789 = vpack.c.b16 %v609, %v597
        %v790 = vpack.c.b16 %v610, %v598
        %v791 = vpack.c.b16 %v611, %v599
        %v792 = vpack.c.b16 %v612, %v600
        %v793 = vpack.c.b16 %v613, %v601
        %v794 = vpack.c.b16 %v614, %v602
        %v795 = vpack.c.b16 %v615, %v603
        %v796 = vpack.c.b16 %v616, %v604
        %v797 = vpack.c.b16 %v617, %v605
        %v798 = vpack.c.b16 %v630, %v618
        %v799 = vpack.c.b16 %v631, %v619
        %v800 = vpack.c.b16 %v632, %v620
        %v801 = vpack.c.b16 %v633, %v621
        %v802 = vpack.c.b16 %v634, %v622
        %v803 = vpack.c.b16 %v635, %v623
        %v804 = vpack.c.b16 %v636, %v624
        %v805 = vpack.c.b16 %v637, %v625
        %v806 = vpack.c.b16 %v638, %v626
        %v807 = vpack.c.b16 %v639, %v627
        %v808 = vpack.c.b16 %v640, %v628
        %v809 = vpack.c.b16 %v641, %v629
        %v810 = vpack.c.b16 %v654, %v642
        %v811 = vpack.c.b16 %v655, %v643
        %v812 = vpack.c.b16 %v656, %v644
        %v813 = vpack.c.b16 %v657, %v645
        %v814 = vpack.c.b16 %v658, %v646
        %v815 = vpack.c.b16 %v659, %v647
        %v816 = vpack.c.b16 %v660, %v648
        %v817 = vpack.c.b16 %v661, %v649
        %v818 = vpack.c.b16 %v662, %v650
        %v819 = vpack.c.b16 %v663, %v651
        %v820 = vpack.c.b16 %v664, %v652
        %v821 = vpack.c.b16 %v665, %v653
        %v822 = vpack.c.b16 %v678, %v666
        %v823 = vpack.c.b16 %v679, %v667
        %v824 = vpack.c.b16 %v680, %v668
        %v825 = vpack.c.b16 %v681, %v669
        %v826 = vpack.c.b16 %v682, %v670
        %v827 = vpack.c.b16 %v683, %v671
        %v828 = vpack.c.b16 %v684, %v672
        %v829 = vpack.c.b16 %v685, %v673
        %v830 = vpack.c.b16 %v686, %v674
        %v831 = vpack.c.b16 %v687, %v675
        %v832 = vpack.c.b16 %v688, %v676
        %v833 = vpack.c.b16 %v689, %v677
        %v834 = vpack.c.b16 %v702, %v690
        %v835 = vpack.c.b16 %v703, %v691
        %v836 = vpack.c.b16 %v704, %v692
        %v837 = vpack.c.b16 %v705, %v693
        %v838 = vpack.c.b16 %v706, %v694
        %v839 = vpack.c.b16 %v707, %v695
        %v840 = vpack.c.b16 %v708, %v696
        %v841 = vpack.c.b16 %v709, %v697
        %v842 = vpack.c.b16 %v710, %v698
        %v843 = vpack.c.b16 %v711, %v699
        %v844 = vpack.c.b16 %v712, %v700
        %v845 = vpack.c.b16 %v713, %v701
        %v846 = vpack.c.b16 %v726, %v714
        %v847 = vpack.c.b16 %v727, %v715
        %v848 = vpack.c.b16 %v728, %v716
        %v849 = vpack.c.b16 %v729, %v717
        %v850 = vpack.c.b16 %v730, %v718
        %v851 = vpack.c.b16 %v731, %v719
        %v852 = vpack.c.b16 %v732, %v720
        %v853 = vpack.c.b16 %v733, %v721
        %v854 = vpack.c.b16 %v734, %v722
        %v855 = vpack.c.b16 %v735, %v723
        %v856 = vpack.c.b16 %v736, %v724
        %v857 = vpack.c.b16 %v737, %v725
        %v858 = vpack.c.b16 %v750, %v738
        %v859 = vpack.c.b16 %v751, %v739
        %v860 = vpack.c.b16 %v752, %v740
        %v861 = vpack.c.b16 %v753, %v741
        %v862 = vpack.c.b16 %v754, %v742
        %v863 = vpack.c.b16 %v755, %v743
        %v864 = vpack.c.b16 %v756, %v744
        %v865 = vpack.c.b16 %v757, %v745
        %v866 = vpack.c.b16 %v758, %v746
        %v867 = vpack.c.b16 %v759, %v747
        %v868 = vpack.c.b16 %v760, %v748
        %v869 = vpack.c.b16 %v761, %v749
        %v870 = vpack.c.b16 %v774, %v762
        %v871 = vpack.c.b16 %v775, %v763
        %v872 = vpack.c.b16 %v776, %v764
        %v873 = vpack.c.b16 %v777, %v765
        %v874 = vpack.c.b16 %v778, %v766
        %v875 = vpack.c.b16 %v779, %v767
        %v876 = vpack.c.b16 %v780, %v768
        %v877 = vpack.c.b16 %v781, %v769
        %v878 = vpack.c.b16 %v782, %v770
        %v879 = vpack.c.b16 %v783, %v771
        %v880 = vpack.c.b16 %v784, %v772
        %v881 = vpack.c.b16 %v785, %v773
        %978 = vmatprep.subr.bf16.mxu0 %v787
        %979 = vmatpush1.bf16.msra.mxu0 %v786
        %980 = vmatprep.subr.bf16.mxu0 %v799
        %981 = vmatpush1.bf16.msra.mxu0 %v798
        %982 = vmatprep.subr.bf16.mxu0 %v811
        %983 = vmatpush1.bf16.msra.mxu0 %v810
        %984 = vmatprep.subr.bf16.mxu0 %v823
        %985 = vmatpush1.bf16.msra.mxu0 %v822
        %986 = vmatprep.subr.bf16.mxu0 %v835
        %987 = vmatpush1.bf16.msra.mxu0 %v834
        %988 = vmatprep.subr.bf16.mxu0 %v847
        %989 = vmatpush1.bf16.msra.mxu0 %v846
        %990 = vmatprep.subr.bf16.mxu0 %v859
        %991 = vmatpush1.bf16.msra.mxu0 %v858
        %992 = vmatprep.subr.bf16.mxu0 %v871
        %993 = vmatpush1.bf16.msra.mxu0 %v870
        %994 = vmatprep.subr.bf16.mxu0 0
        %995 = vmatpush1.bf16.msra.mxu0 0
        %996 = vmatprep.subr.bf16.mxu0 0
        %997 = vmatpush1.bf16.msra.mxu0 0
        %998 = vmatprep.subr.bf16.mxu0 0
        %999 = vmatpush1.bf16.msra.mxu0 0
        %1000 = vmatprep.subr.bf16.mxu0 0
        %1001 = vmatpush1.bf16.msra.mxu0 0
        %1002 = vmatprep.subr.bf16.mxu0 0
        %1003 = vmatpush1.bf16.msra.mxu0 0
        %1004 = vmatprep.subr.bf16.mxu0 0
        %1005 = vmatpush1.bf16.msra.mxu0 0
        %1006 = vmatprep.subr.bf16.mxu0 0
        %1007 = vmatpush1.bf16.msra.mxu0 0
        %1008 = vmatprep.subr.bf16.mxu0 0
        %1009 = vmatpush1.bf16.msra.mxu0 0
        %1010 = vmatprep.mubr.bf16.mxu0 0
        %1011 = vmatmul.mubr.bf16.gmra.mrb[0].mxu0 %v401
        %v1012 = vpop.f32.mrb[0].mxu0
        %v1013 = vadd.f32 0.0, %v1012
        %v1014 = vpop.f32.mrb[0].mxu0
        %v1015 = vadd.f32 0.0, %v1014
        %v1016 = vpop.f32.mrb[0].mxu0
        %v1017 = vadd.f32 0.0, %v1016
        %v1018 = vpop.f32.mrb[0].mxu0
        %v1019 = vadd.f32 0.0, %v1018
        %1020 = vdwg.mxu0
        %1021 = vmatprep.subr.bf16.mxu0 %v789
        %1022 = vmatpush1.bf16.msra.mxu0 %v788
        %1023 = vmatprep.subr.bf16.mxu0 %v801
        %1024 = vmatpush1.bf16.msra.mxu0 %v800
        %1025 = vmatprep.subr.bf16.mxu0 %v813
        %1026 = vmatpush1.bf16.msra.mxu0 %v812
        %1027 = vmatprep.subr.bf16.mxu0 %v825
        %1028 = vmatpush1.bf16.msra.mxu0 %v824
        %1029 = vmatprep.subr.bf16.mxu0 %v837
        %1030 = vmatpush1.bf16.msra.mxu0 %v836
        %1031 = vmatprep.subr.bf16.mxu0 %v849
        %1032 = vmatpush1.bf16.msra.mxu0 %v848
        %1033 = vmatprep.subr.bf16.mxu0 %v861
        %1034 = vmatpush1.bf16.msra.mxu0 %v860
        %1035 = vmatprep.subr.bf16.mxu0 %v873
        %1036 = vmatpush1.bf16.msra.mxu0 %v872
        %1037 = vmatprep.subr.bf16.mxu0 0
        %1038 = vmatpush1.bf16.msra.mxu0 0
        %1039 = vmatprep.subr.bf16.mxu0 0
        %1040 = vmatpush1.bf16.msra.mxu0 0
        %1041 = vmatprep.subr.bf16.mxu0 0
        %1042 = vmatpush1.bf16.msra.mxu0 0
        %1043 = vmatprep.subr.bf16.mxu0 0
        %1044 = vmatpush1.bf16.msra.mxu0 0
        %1045 = vmatprep.subr.bf16.mxu0 0
        %1046 = vmatpush1.bf16.msra.mxu0 0
        %1047 = vmatprep.subr.bf16.mxu0 0
        %1048 = vmatpush1.bf16.msra.mxu0 0
        %1049 = vmatprep.subr.bf16.mxu0 0
        %1050 = vmatpush1.bf16.msra.mxu0 0
        %1051 = vmatprep.subr.bf16.mxu0 0
        %1052 = vmatpush1.bf16.msra.mxu0 0
        %1053 = vmatprep.mubr.bf16.mxu0 0
        %1054 = vmatmul.mubr.bf16.gmra.mrb[0].mxu0 %v401
        %v1055 = vpop.f32.mrb[0].mxu0
        %v1056 = vadd.f32 0.0, %v1055
        %v1057 = vpop.f32.mrb[0].mxu0
        %v1058 = vadd.f32 0.0, %v1057
        %v1059 = vpop.f32.mrb[0].mxu0
        %v1060 = vadd.f32 0.0, %v1059
        %v1061 = vpop.f32.mrb[0].mxu0
        %v1062 = vadd.f32 0.0, %v1061
        %1063 = vdwg.mxu0
        %1064 = vmatprep.subr.bf16.mxu0 %v791
        %1065 = vmatpush1.bf16.msra.mxu0 %v790
        %1066 = vmatprep.subr.bf16.mxu0 %v803
        %1067 = vmatpush1.bf16.msra.mxu0 %v802
        %1068 = vmatprep.subr.bf16.mxu0 %v815
        %1069 = vmatpush1.bf16.msra.mxu0 %v814
        %1070 = vmatprep.subr.bf16.mxu0 %v827
        %1071 = vmatpush1.bf16.msra.mxu0 %v826
        %1072 = vmatprep.subr.bf16.mxu0 %v839
        %1073 = vmatpush1.bf16.msra.mxu0 %v838
        %1074 = vmatprep.subr.bf16.mxu0 %v851
        %1075 = vmatpush1.bf16.msra.mxu0 %v850
        %1076 = vmatprep.subr.bf16.mxu0 %v863
        %1077 = vmatpush1.bf16.msra.mxu0 %v862
        %1078 = vmatprep.subr.bf16.mxu0 %v875
        %1079 = vmatpush1.bf16.msra.mxu0 %v874
        %1080 = vmatprep.subr.bf16.mxu0 0
        %1081 = vmatpush1.bf16.msra.mxu0 0
        %1082 = vmatprep.subr.bf16.mxu0 0
        %1083 = vmatpush1.bf16.msra.mxu0 0
        %1084 = vmatprep.subr.bf16.mxu0 0
        %1085 = vmatpush1.bf16.msra.mxu0 0
        %1086 = vmatprep.subr.bf16.mxu0 0
        %1087 = vmatpush1.bf16.msra.mxu0 0
        %1088 = vmatprep.subr.bf16.mxu0 0
        %1089 = vmatpush1.bf16.msra.mxu0 0
        %1090 = vmatprep.subr.bf16.mxu0 0
        %1091 = vmatpush1.bf16.msra.mxu0 0
        %1092 = vmatprep.subr.bf16.mxu0 0
        %1093 = vmatpush1.bf16.msra.mxu0 0
        %1094 = vmatprep.subr.bf16.mxu0 0
        %1095 = vmatpush1.bf16.msra.mxu0 0
        %1096 = vmatprep.mubr.bf16.mxu0 0
        %1097 = vmatmul.mubr.bf16.gmra.mrb[0].mxu0 %v401
        %v1098 = vpop.f32.mrb[0].mxu0
        %v1099 = vadd.f32 0.0, %v1098
        %v1100 = vpop.f32.mrb[0].mxu0
        %v1101 = vadd.f32 0.0, %v1100
        %v1102 = vpop.f32.mrb[0].mxu0
        %v1103 = vadd.f32 0.0, %v1102
        %v1104 = vpop.f32.mrb[0].mxu0
        %v1105 = vadd.f32 0.0, %v1104
        %1106 = vdwg.mxu0
        %1107 = vmatprep.subr.bf16.mxu0 %v793
        %1108 = vmatpush1.bf16.msra.mxu0 %v792
        %1109 = vmatprep.subr.bf16.mxu0 %v805
        %1110 = vmatpush1.bf16.msra.mxu0 %v804
        %1111 = vmatprep.subr.bf16.mxu0 %v817
        %1112 = vmatpush1.bf16.msra.mxu0 %v816
        %1113 = vmatprep.subr.bf16.mxu0 %v829
        %1114 = vmatpush1.bf16.msra.mxu0 %v828
        %1115 = vmatprep.subr.bf16.mxu0 %v841
        %1116 = vmatpush1.bf16.msra.mxu0 %v840
        %1117 = vmatprep.subr.bf16.mxu0 %v853
        %1118 = vmatpush1.bf16.msra.mxu0 %v852
        %1119 = vmatprep.subr.bf16.mxu0 %v865
        %1120 = vmatpush1.bf16.msra.mxu0 %v864
        %1121 = vmatprep.subr.bf16.mxu0 %v877
        %1122 = vmatpush1.bf16.msra.mxu0 %v876
        %1123 = vmatprep.subr.bf16.mxu0 0
        %1124 = vmatpush1.bf16.msra.mxu0 0
        %1125 = vmatprep.subr.bf16.mxu0 0
        %1126 = vmatpush1.bf16.msra.mxu0 0
        %1127 = vmatprep.subr.bf16.mxu0 0
        %1128 = vmatpush1.bf16.msra.mxu0 0
        %1129 = vmatprep.subr.bf16.mxu0 0
        %1130 = vmatpush1.bf16.msra.mxu0 0
        %1131 = vmatprep.subr.bf16.mxu0 0
        %1132 = vmatpush1.bf16.msra.mxu0 0
        %1133 = vmatprep.subr.bf16.mxu0 0
        %1134 = vmatpush1.bf16.msra.mxu0 0
        %1135 = vmatprep.subr.bf16.mxu0 0
        %1136 = vmatpush1.bf16.msra.mxu0 0
        %1137 = vmatprep.subr.bf16.mxu0 0
        %1138 = vmatpush1.bf16.msra.mxu0 0
        %1139 = vmatprep.mubr.bf16.mxu0 0
        %1140 = vmatmul.mubr.bf16.gmra.mrb[0].mxu0 %v401
        %v1141 = vpop.f32.mrb[0].mxu0
        %v1142 = vadd.f32 0.0, %v1141
        %v1143 = vpop.f32.mrb[0].mxu0
        %v1144 = vadd.f32 0.0, %v1143
        %v1145 = vpop.f32.mrb[0].mxu0
        %v1146 = vadd.f32 0.0, %v1145
        %v1147 = vpop.f32.mrb[0].mxu0
        %v1148 = vadd.f32 0.0, %v1147
        %1149 = vdwg.mxu0
        %1150 = vmatprep.subr.bf16.mxu0 %v795
        %1151 = vmatpush1.bf16.msra.mxu0 %v794
        %1152 = vmatprep.subr.bf16.mxu0 %v807
        %1153 = vmatpush1.bf16.msra.mxu0 %v806
        %1154 = vmatprep.subr.bf16.mxu0 %v819
        %1155 = vmatpush1.bf16.msra.mxu0 %v818
        %1156 = vmatprep.subr.bf16.mxu0 %v831
        %1157 = vmatpush1.bf16.msra.mxu0 %v830
        %1158 = vmatprep.subr.bf16.mxu0 %v843
        %1159 = vmatpush1.bf16.msra.mxu0 %v842
        %1160 = vmatprep.subr.bf16.mxu0 %v855
        %1161 = vmatpush1.bf16.msra.mxu0 %v854
        %1162 = vmatprep.subr.bf16.mxu0 %v867
        %1163 = vmatpush1.bf16.msra.mxu0 %v866
        %1164 = vmatprep.subr.bf16.mxu0 %v879
        %1165 = vmatpush1.bf16.msra.mxu0 %v878
        %1166 = vmatprep.subr.bf16.mxu0 0
        %1167 = vmatpush1.bf16.msra.mxu0 0
        %1168 = vmatprep.subr.bf16.mxu0 0
        %1169 = vmatpush1.bf16.msra.mxu0 0
        %1170 = vmatprep.subr.bf16.mxu0 0
        %1171 = vmatpush1.bf16.msra.mxu0 0
        %1172 = vmatprep.subr.bf16.mxu0 0
        %1173 = vmatpush1.bf16.msra.mxu0 0
        %1174 = vmatprep.subr.bf16.mxu0 0
        %1175 = vmatpush1.bf16.msra.mxu0 0
        %1176 = vmatprep.subr.bf16.mxu0 0
        %1177 = vmatpush1.bf16.msra.mxu0 0
        %1178 = vmatprep.subr.bf16.mxu0 0
        %1179 = vmatpush1.bf16.msra.mxu0 0
        %1180 = vmatprep.subr.bf16.mxu0 0
        %1181 = vmatpush1.bf16.msra.mxu0 0
        %1182 = vmatprep.mubr.bf16.mxu0 0
        %1183 = vmatmul.mubr.bf16.gmra.mrb[0].mxu0 %v401
        %v1184 = vpop.f32.mrb[0].mxu0
        %v1185 = vadd.f32 0.0, %v1184
        %v1186 = vpop.f32.mrb[0].mxu0
        %v1187 = vadd.f32 0.0, %v1186
        %v1188 = vpop.f32.mrb[0].mxu0
        %v1189 = vadd.f32 0.0, %v1188
        %v1190 = vpop.f32.mrb[0].mxu0
        %v1191 = vadd.f32 0.0, %v1190
        %1192 = vdwg.mxu0
        %1193 = vmatprep.subr.bf16.mxu0 %v797
        %1194 = vmatpush1.bf16.msra.mxu0 %v796
        %1195 = vmatprep.subr.bf16.mxu0 %v809
        %1196 = vmatpush1.bf16.msra.mxu0 %v808
        %1197 = vmatprep.subr.bf16.mxu0 %v821
        %1198 = vmatpush1.bf16.msra.mxu0 %v820
        %1199 = vmatprep.subr.bf16.mxu0 %v833
        %1200 = vmatpush1.bf16.msra.mxu0 %v832
        %1201 = vmatprep.subr.bf16.mxu0 %v845
        %1202 = vmatpush1.bf16.msra.mxu0 %v844
        %1203 = vmatprep.subr.bf16.mxu0 %v857
        %1204 = vmatpush1.bf16.msra.mxu0 %v856
        %1205 = vmatprep.subr.bf16.mxu0 %v869
        %1206 = vmatpush1.bf16.msra.mxu0 %v868
        %1207 = vmatprep.subr.bf16.mxu0 %v881
        %1208 = vmatpush1.bf16.msra.mxu0 %v880
        %1209 = vmatprep.subr.bf16.mxu0 0
        %1210 = vmatpush1.bf16.msra.mxu0 0
        %1211 = vmatprep.subr.bf16.mxu0 0
        %1212 = vmatpush1.bf16.msra.mxu0 0
        %1213 = vmatprep.subr.bf16.mxu0 0
        %1214 = vmatpush1.bf16.msra.mxu0 0
        %1215 = vmatprep.subr.bf16.mxu0 0
        %1216 = vmatpush1.bf16.msra.mxu0 0
        %1217 = vmatprep.subr.bf16.mxu0 0
        %1218 = vmatpush1.bf16.msra.mxu0 0
        %1219 = vmatprep.subr.bf16.mxu0 0
        %1220 = vmatpush1.bf16.msra.mxu0 0
        %1221 = vmatprep.subr.bf16.mxu0 0
        %1222 = vmatpush1.bf16.msra.mxu0 0
        %1223 = vmatprep.subr.bf16.mxu0 0
        %1224 = vmatpush1.bf16.msra.mxu0 0
        %1225 = vmatprep.mubr.bf16.mxu0 0
        %1226 = vmatmul.mubr.bf16.gmra.mrb[0].mxu0 %v401
        %v1227 = vpop.f32.mrb[0].mxu0
        %v1228 = vadd.f32 0.0, %v1227
        %v1229 = vpop.f32.mrb[0].mxu0
        %v1230 = vadd.f32 0.0, %v1229
        %v1231 = vpop.f32.mrb[0].mxu0
        %v1232 = vadd.f32 0.0, %v1231
        %v1233 = vpop.f32.mrb[0].mxu0
        %v1234 = vadd.f32 0.0, %v1233
        %1235 = vdwg.mxu0
        %1236 = vst [vmem:[%s376] sm:$0xff] %v1185
        %1237 = vst [vmem:[%s376 + $0x8] sm:$0xff] %v1187
        %1238 = vst [vmem:[%s376 + $0x10] sm:$0xff] %v1228
        %1239 = vst [vmem:[%s376 + $0x18] sm:$0xff] %v1230
        %1240 = vst [vmem:[%s376 + $0x20] sm:$0xff] %v1189
        %1241 = vst [vmem:[%s376 + $0x28] sm:$0xff] %v1191
        %1242 = vst [vmem:[%s376 + $0x30] sm:$0xff] %v1232
        %1243 = vst [vmem:[%s376 + $0x38] sm:$0xff] %v1234
        %v1244 = vld [vmem:[#allocation8] sm:$0xf]
        %v1245 = vld [vmem:[#allocation8 + $0x4] sm:$0xf]
        %v1246 = vld [vmem:[#allocation8 + $0x8] sm:$0xf]
        %v1247 = vld [vmem:[#allocation8 + $0xc] sm:$0xf]
        %v1248 = vld [vmem:[#allocation8 + $0x10] sm:$0xf]
        %v1249 = vld [vmem:[#allocation8 + $0x14] sm:$0xf]
        %v1250 = vld [vmem:[#allocation8 + $0x18] sm:$0xf]
        %v1251 = vld [vmem:[#allocation8 + $0x1c] sm:$0xf]
        %v1252 = vld [vmem:[#allocation8 + $0x20] sm:$0xf]
        %v1253 = vld [vmem:[#allocation8 + $0x24] sm:$0xf]
        %v1254 = vld [vmem:[#allocation8 + $0x28] sm:$0xf]
        %v1255 = vld [vmem:[#allocation8 + $0x2c] sm:$0xf]
        %v1256 = vld [vmem:[#allocation8 + $0x30] sm:$0xf]
        %v1257 = vld [vmem:[#allocation8 + $0x34] sm:$0xf]
        %v1258 = vld [vmem:[#allocation8 + $0x38] sm:$0xf]
        %v1259 = vld [vmem:[#allocation8 + $0x3c] sm:$0xf]
        %v1260 = vld [vmem:[#allocation10] sm:$0x1]
        %v1262 = vlaneseq
        %v1263 = vshrl.u32 %v1262, 7
        %v1264 = vsub.s32 0, %v1263
        %v1265 = vrot.slane %v1260, %v1264
        %v1283 = vunpack.c.l.b16 %v1244
        %v1284 = vunpack.c.l.b16 %v1245
        %v1285 = vunpack.c.l.b16 %v1246
        %v1286 = vunpack.c.l.b16 %v1247
        %v1287 = vunpack.c.l.b16 %v1248
        %v1288 = vunpack.c.l.b16 %v1249
        %v1289 = vunpack.c.l.b16 %v1250
        %v1290 = vunpack.c.l.b16 %v1251
        %v1291 = vunpack.c.l.b16 %v1252
        %v1292 = vunpack.c.l.b16 %v1253
        %v1293 = vunpack.c.l.b16 %v1254
        %v1294 = vunpack.c.l.b16 %v1255
        %v1295 = vunpack.c.l.b16 %v1256
        %v1296 = vunpack.c.l.b16 %v1257
        %v1297 = vunpack.c.l.b16 %v1258
        %v1298 = vunpack.c.l.b16 %v1259
        %v1299 = vpack.c.b16 %v1284, %v1283
        %v1300 = vpack.c.b16 %v1286, %v1285
        %v1301 = vpack.c.b16 %v1288, %v1287
        %v1302 = vpack.c.b16 %v1290, %v1289
        %v1303 = vpack.c.b16 %v1292, %v1291
        %v1304 = vpack.c.b16 %v1294, %v1293
        %v1305 = vpack.c.b16 %v1296, %v1295
        %v1306 = vpack.c.b16 %v1298, %v1297
        %1315 = vmatprep.subr.bf16.mxu0 0
        %1316 = vmatpush1.bf16.msra.mxu0 %v1299
        %1317 = vmatprep.subr.bf16.mxu0 0
        %1318 = vmatpush1.bf16.msra.mxu0 %v1300
        %1319 = vmatprep.subr.bf16.mxu0 0
        %1320 = vmatpush1.bf16.msra.mxu0 %v1301
        %1321 = vmatprep.subr.bf16.mxu0 0
        %1322 = vmatpush1.bf16.msra.mxu0 %v1302
        %1323 = vmatprep.subr.bf16.mxu0 0
        %1324 = vmatpush1.bf16.msra.mxu0 %v1303
        %1325 = vmatprep.subr.bf16.mxu0 0
        %1326 = vmatpush1.bf16.msra.mxu0 %v1304
        %1327 = vmatprep.subr.bf16.mxu0 0
        %1328 = vmatpush1.bf16.msra.mxu0 %v1305
        %1329 = vmatprep.subr.bf16.mxu0 0
        %1330 = vmatpush1.bf16.msra.mxu0 %v1306
        %1331 = vmatprep.subr.bf16.mxu0 0
        %1332 = vmatpush1.bf16.msra.mxu0 0
        %1333 = vmatprep.subr.bf16.mxu0 0
        %1334 = vmatpush1.bf16.msra.mxu0 0
        %1335 = vmatprep.subr.bf16.mxu0 0
        %1336 = vmatpush1.bf16.msra.mxu0 0
        %1337 = vmatprep.subr.bf16.mxu0 0
        %1338 = vmatpush1.bf16.msra.mxu0 0
        %1339 = vmatprep.subr.bf16.mxu0 0
        %1340 = vmatpush1.bf16.msra.mxu0 0
        %1341 = vmatprep.subr.bf16.mxu0 0
        %1342 = vmatpush1.bf16.msra.mxu0 0
        %1343 = vmatprep.subr.bf16.mxu0 0
        %1344 = vmatpush1.bf16.msra.mxu0 0
        %1345 = vmatprep.subr.bf16.mxu0 0
        %1346 = vmatpush1.bf16.msra.mxu0 0
        %1347 = vmatprep.mubr.bf16.mxu0 0
        %1348 = vmatmul.mubr.bf16.gmra.mrb[0].mxu0 %v401
        %v1349 = vpop.f32.mrb[0].mxu0
        %v1350 = vadd.f32 %v1265, %v1349
        %v1351 = vpop.f32.mrb[0].mxu0
        %v1352 = vpop.f32.mrb[0].mxu0
        %v1353 = vadd.f32 %v1265, %v1352
        %v1354 = vpop.f32.mrb[0].mxu0
        %1355 = vdwg.mxu0
        %v1356 = vxor.u32 %v1350, 2147483648
        %v1357 = vxor.u32 %v1353, 2147483648
        %v1358 = vmul.f32 %v1356, 1.442695
        %v1359 = vpow.pop %v1358
        %v1360 = vmul.f32 %v1357, 1.442695
        %v1361 = vpow.pop %v1360
        %v1362 = vadd.f32 %v1359, 1.0
        %v1363 = vadd.f32 %v1361, 1.0
        %v1364 = vrcp.pop %v1362
        %v1365 = vmul.f32 1.0, %v1364
        %v1366 = vrcp.pop %v1363
        %v1367 = vmul.f32 1.0, %v1366
        %v1368 = vpack.c.bf16 %v1017, %v1013
        %v1369 = vpack.c.bf16 %v1103, %v1099
        %v1370 = vpack.c.bf16 %v1189, %v1185
        %vm1371 = vcmask 523264
        %v1373 = vsel %vm1371, %v1368, 0
        %v1376 = vsel %vm1371, %v1369, 0
        %1378 = vmatprep.subr.bf16.mxu0 0
        %1379 = vmatpush1.bf16.xpose.msra.mxu0 %v1376
        %1380 = vmatprep.subr.bf16.mxu0 0
        %1381 = vmatpush1.bf16.xpose.msra.mxu0 0
        %1382 = vmatprep.subr.bf16.mxu0 0
        %1383 = vmatpush1.bf16.xpose.msra.mxu0 0
        %1384 = vmatprep.subr.bf16.mxu0 0
        %1385 = vmatpush1.bf16.xpose.msra.mxu0 0
        %1386 = vmatprep.subr.bf16.mxu0 0
        %1387 = vmatpush1.bf16.xpose.msra.mxu0 0
        %1388 = vmatprep.subr.bf16.mxu0 0
        %1389 = vmatpush1.bf16.xpose.msra.mxu0 0
        %1390 = vmatprep.subr.bf16.mxu0 0
        %1391 = vmatpush1.bf16.xpose.msra.mxu0 0
        %1392 = vmatprep.subr.bf16.mxu0 0
        %1393 = vmatpush1.bf16.xpose.msra.mxu0 0
        %1394 = vmatprep.subr.bf16.mxu0 0
        %1395 = vmatpush1.bf16.xpose.msra.mxu0 0
        %1396 = vmatprep.subr.bf16.mxu0 0
        %1397 = vmatpush1.bf16.xpose.msra.mxu0 0
        %1398 = vmatprep.subr.bf16.mxu0 0
        %1399 = vmatpush1.bf16.xpose.msra.mxu0 0
        %1400 = vmatprep.subr.bf16.mxu0 0
        %1401 = vmatpush1.bf16.xpose.msra.mxu0 0
        %1402 = vmatprep.subr.bf16.mxu0 0
        %1403 = vmatpush1.bf16.xpose.msra.mxu0 0
        %1404 = vmatprep.subr.bf16.mxu0 0
        %1405 = vmatpush1.bf16.xpose.msra.mxu0 0
        %1406 = vmatprep.subr.bf16.mxu0 0
        %1407 = vmatpush1.bf16.xpose.msra.mxu0 0
        %1408 = vmatprep.subr.bf16.mxu0 0
        %1409 = vmatpush1.bf16.xpose.msra.mxu0 0
        %1410 = vmatprep.mubr.bf16.mxu0 0
        %1411 = vmatmul.mubr.bf16.gmra.mrb[0].mxu0 %v1373
        %v1412 = vpop.f32.mrb[0].mxu0
        %v1413 = vadd.f32 0.0, %v1412
        %v1414 = vpop.f32.mrb[0].mxu0
        %v1415 = vpop.f32.mrb[0].mxu0
        %v1416 = vadd.f32 0.0, %v1415
        %v1417 = vpop.f32.mrb[0].mxu0
        %1418 = vdwg.mxu0
        %vm1419 = vcmask 130048
        %v1420 = vsel %vm1419, %v1413, -inf
        %1421 = vmax.xlane.f32.xlu0 %v1420
        %v1422 = vpop.xlane.xlu0 %1421
        %v1423 = vsel %vm1419, %v1416, -inf
        %1424 = vmax.xlane.f32.xlu0 %v1423
        %v1425 = vpop.xlane.xlu0 %1424
        %v1426 = vsub.f32 %v1413, %v1422
        %v1427 = vsub.f32 %v1416, %v1425
        %v1428 = vmul.f32 %v1426, 1.442695
        %v1429 = vpow.pop %v1428
        %v1430 = vmul.f32 %v1427, 1.442695
        %v1431 = vpow.pop %v1430
        %v1432 = vsel %vm1419, %v1429, 0.0
        %1433 = vadd.xlane.f32.xlu0 %v1432
        %v1434 = vpop.xlane.xlu0 %1433
        %v1435 = vsel %vm1419, %v1431, 0.0
        %1436 = vadd.xlane.f32.xlu0 %v1435
        %v1437 = vpop.xlane.xlu0 %1436
        %v1438 = vpack.c.bf16 %v1431, %v1429
        %v1440 = vsel %vm1419, %v1438, 0
        %1442 = vmatprep.subr.bf16.mxu0 0
        %1443 = vmatpush1.bf16.msra.mxu0 %v1370
        %1444 = vmatprep.subr.bf16.mxu0 0
        %1445 = vmatpush1.bf16.msra.mxu0 0
        %1446 = vmatprep.subr.bf16.mxu0 0
        %1447 = vmatpush1.bf16.msra.mxu0 0
        %1448 = vmatprep.subr.bf16.mxu0 0
        %1449 = vmatpush1.bf16.msra.mxu0 0
        %1450 = vmatprep.subr.bf16.mxu0 0
        %1451 = vmatpush1.bf16.msra.mxu0 0
        %1452 = vmatprep.subr.bf16.mxu0 0
        %1453 = vmatpush1.bf16.msra.mxu0 0
        %1454 = vmatprep.subr.bf16.mxu0 0
        %1455 = vmatpush1.bf16.msra.mxu0 0
        %1456 = vmatprep.subr.bf16.mxu0 0
        %1457 = vmatpush1.bf16.msra.mxu0 0
        %1458 = vmatprep.subr.bf16.mxu0 0
        %1459 = vmatpush1.bf16.msra.mxu0 0
        %1460 = vmatprep.subr.bf16.mxu0 0
        %1461 = vmatpush1.bf16.msra.mxu0 0
        %1462 = vmatprep.subr.bf16.mxu0 0
        %1463 = vmatpush1.bf16.msra.mxu0 0
        %1464 = vmatprep.subr.bf16.mxu0 0
        %1465 = vmatpush1.bf16.msra.mxu0 0
        %1466 = vmatprep.subr.bf16.mxu0 0
        %1467 = vmatpush1.bf16.msra.mxu0 0
        %1468 = vmatprep.subr.bf16.mxu0 0
        %1469 = vmatpush1.bf16.msra.mxu0 0
        %1470 = vmatprep.subr.bf16.mxu0 0
        %1471 = vmatpush1.bf16.msra.mxu0 0
        %1472 = vmatprep.subr.bf16.mxu0 0
        %1473 = vmatpush1.bf16.msra.mxu0 0
        %1474 = vmatprep.mubr.bf16.mxu0 0
        %1475 = vmatmul.mubr.bf16.gmra.mrb[0].mxu0 %v1440
        %v1476 = vpop.f32.mrb[0].mxu0
        %v1477 = vadd.f32 0.0, %v1476
        %v1478 = vpop.f32.mrb[0].mxu0
        %v1479 = vpop.f32.mrb[0].mxu0
        %v1480 = vadd.f32 0.0, %v1479
        %v1481 = vpop.f32.mrb[0].mxu0
        %1482 = vdwg.mxu0
        %v1483 = vrcp.pop %v1434
        %v1484 = vrcp.pop %v1437
        %v1485 = vmul.f32 %v1365, %v1483
        %v1486 = vmul.f32 %v1367, %v1484
        %1488 = vset.pattern.permute.xlu0 0
        %1489 = vperm.xlu0 %1488, %v1485
        %v1490 = vpop.permute.xlu0 %1489
        %1493 = vset.pattern.permute.xlu0 0
        %1494 = vperm.xlu0 %1493, %v1486
        %v1495 = vpop.permute.xlu0 %1494
        %v1497 = vmul.f32 %v1477, %v1490
        %v1498 = vmul.f32 %v1480, %v1495
        %1500 = vrot.lane.b32.xlu0 %v1368, 64
        %v1501 = vpop.permute.xlu0 %1500
        %1503 = vrot.lane.b32.xlu0 %v1369, 64
        %v1504 = vpop.permute.xlu0 %1503
        %v1506 = vsel %vm1371, %v1501, 0
        %v1509 = vsel %vm1371, %v1504, 0
        %1511 = vmatprep.subr.bf16.mxu0 0
        %1512 = vmatpush1.bf16.xpose.msra.mxu0 %v1509
        %1513 = vmatprep.subr.bf16.mxu0 0
        %1514 = vmatpush1.bf16.xpose.msra.mxu0 0
        %1515 = vmatprep.subr.bf16.mxu0 0
        %1516 = vmatpush1.bf16.xpose.msra.mxu0 0
        %1517 = vmatprep.subr.bf16.mxu0 0
        %1518 = vmatpush1.bf16.xpose.msra.mxu0 0
        %1519 = vmatprep.subr.bf16.mxu0 0
        %1520 = vmatpush1.bf16.xpose.msra.mxu0 0
        %1521 = vmatprep.subr.bf16.mxu0 0
        %1522 = vmatpush1.bf16.xpose.msra.mxu0 0
        %1523 = vmatprep.subr.bf16.mxu0 0
        %1524 = vmatpush1.bf16.xpose.msra.mxu0 0
        %1525 = vmatprep.subr.bf16.mxu0 0
        %1526 = vmatpush1.bf16.xpose.msra.mxu0 0
        %1527 = vmatprep.subr.bf16.mxu0 0
        %1528 = vmatpush1.bf16.xpose.msra.mxu0 0
        %1529 = vmatprep.subr.bf16.mxu0 0
        %1530 = vmatpush1.bf16.xpose.msra.mxu0 0
        %1531 = vmatprep.subr.bf16.mxu0 0
        %1532 = vmatpush1.bf16.xpose.msra.mxu0 0
        %1533 = vmatprep.subr.bf16.mxu0 0
        %1534 = vmatpush1.bf16.xpose.msra.mxu0 0
        %1535 = vmatprep.subr.bf16.mxu0 0
        %1536 = vmatpush1.bf16.xpose.msra.mxu0 0
        %1537 = vmatprep.subr.bf16.mxu0 0
        %1538 = vmatpush1.bf16.xpose.msra.mxu0 0
        %1539 = vmatprep.subr.bf16.mxu0 0
        %1540 = vmatpush1.bf16.xpose.msra.mxu0 0
        %1541 = vmatprep.subr.bf16.mxu0 0
        %1542 = vmatpush1.bf16.xpose.msra.mxu0 0
        %1543 = vmatprep.mubr.bf16.mxu0 0
        %1544 = vmatmul.mubr.bf16.gmra.mrb[0].mxu0 %v1506
        %v1545 = vpop.f32.mrb[0].mxu0
        %v1546 = vadd.f32 0.0, %v1545
        %v1547 = vpop.f32.mrb[0].mxu0
        %v1548 = vpop.f32.mrb[0].mxu0
        %v1549 = vadd.f32 0.0, %v1548
        %v1550 = vpop.f32.mrb[0].mxu0
        %1551 = vdwg.mxu0
        %v1552 = vsel %vm1419, %v1546, -inf
        %1553 = vmax.xlane.f32.xlu0 %v1552
        %v1554 = vpop.xlane.xlu0 %1553
        %v1555 = vsel %vm1419, %v1549, -inf
        %1556 = vmax.xlane.f32.xlu0 %v1555
        %v1557 = vpop.xlane.xlu0 %1556
        %v1558 = vsub.f32 %v1546, %v1554
        %v1559 = vsub.f32 %v1549, %v1557
        %v1560 = vmul.f32 %v1558, 1.442695
        %v1561 = vpow.pop %v1560
        %v1562 = vmul.f32 %v1559, 1.442695
        %v1563 = vpow.pop %v1562
        %v1564 = vsel %vm1419, %v1561, 0.0
        %1565 = vadd.xlane.f32.xlu0 %v1564
        %v1566 = vpop.xlane.xlu0 %1565
        %v1567 = vsel %vm1419, %v1563, 0.0
        %1568 = vadd.xlane.f32.xlu0 %v1567
        %v1569 = vpop.xlane.xlu0 %1568
        %v1570 = vpack.c.bf16 %v1563, %v1561
        %1572 = vrot.lane.b32.xlu0 %v1370, 64
        %v1573 = vpop.permute.xlu0 %1572
        %v1576 = vsel %vm1419, %v1570, 0
        %1578 = vmatprep.subr.bf16.mxu0 0
        %1579 = vmatpush1.bf16.msra.mxu0 %v1573
        %1580 = vmatprep.subr.bf16.mxu0 0
        %1581 = vmatpush1.bf16.msra.mxu0 0
        %1582 = vmatprep.subr.bf16.mxu0 0
        %1583 = vmatpush1.bf16.msra.mxu0 0
        %1584 = vmatprep.subr.bf16.mxu0 0
        %1585 = vmatpush1.bf16.msra.mxu0 0
        %1586 = vmatprep.subr.bf16.mxu0 0
        %1587 = vmatpush1.bf16.msra.mxu0 0
        %1588 = vmatprep.subr.bf16.mxu0 0
        %1589 = vmatpush1.bf16.msra.mxu0 0
        %1590 = vmatprep.subr.bf16.mxu0 0
        %1591 = vmatpush1.bf16.msra.mxu0 0
        %1592 = vmatprep.subr.bf16.mxu0 0
        %1593 = vmatpush1.bf16.msra.mxu0 0
        %1594 = vmatprep.subr.bf16.mxu0 0
        %1595 = vmatpush1.bf16.msra.mxu0 0
        %1596 = vmatprep.subr.bf16.mxu0 0
        %1597 = vmatpush1.bf16.msra.mxu0 0
        %1598 = vmatprep.subr.bf16.mxu0 0
        %1599 = vmatpush1.bf16.msra.mxu0 0
        %1600 = vmatprep.subr.bf16.mxu0 0
        %1601 = vmatpush1.bf16.msra.mxu0 0
        %1602 = vmatprep.subr.bf16.mxu0 0
        %1603 = vmatpush1.bf16.msra.mxu0 0
        %1604 = vmatprep.subr.bf16.mxu0 0
        %1605 = vmatpush1.bf16.msra.mxu0 0
        %1606 = vmatprep.subr.bf16.mxu0 0
        %1607 = vmatpush1.bf16.msra.mxu0 0
        %1608 = vmatprep.subr.bf16.mxu0 0
        %1609 = vmatpush1.bf16.msra.mxu0 0
        %1610 = vmatprep.mubr.bf16.mxu0 0
        %1611 = vmatmul.mubr.bf16.gmra.mrb[0].mxu0 %v1576
        %v1612 = vpop.f32.mrb[0].mxu0
        %v1613 = vadd.f32 0.0, %v1612
        %v1614 = vpop.f32.mrb[0].mxu0
        %v1615 = vpop.f32.mrb[0].mxu0
        %v1616 = vadd.f32 0.0, %v1615
        %v1617 = vpop.f32.mrb[0].mxu0
        %1618 = vdwg.mxu0
        %v1619 = vrcp.pop %v1566
        %v1620 = vrcp.pop %v1569
        %v1621 = vmul.f32 %v1365, %v1619
        %v1622 = vmul.f32 %v1367, %v1620
        %1624 = vset.pattern.permute.xlu0 1
        %1625 = vperm.xlu0 %1624, %v1621
        %v1626 = vpop.permute.xlu0 %1625
        %1629 = vset.pattern.permute.xlu0 1
        %1630 = vperm.xlu0 %1629, %v1622
        %v1631 = vpop.permute.xlu0 %1630
        %v1633 = vmul.f32 %v1613, %v1626
        %v1634 = vmul.f32 %v1616, %v1631
        %v1635 = vpack.c.bf16 %v1019, %v1015
        %v1636 = vpack.c.bf16 %v1105, %v1101
        %v1637 = vpack.c.bf16 %v1191, %v1187
        %v1639 = vsel %vm1371, %v1635, 0
        %v1642 = vsel %vm1371, %v1636, 0
        %1644 = vmatprep.subr.bf16.mxu0 0
        %1645 = vmatpush1.bf16.xpose.msra.mxu0 %v1642
        %1646 = vmatprep.subr.bf16.mxu0 0
        %1647 = vmatpush1.bf16.xpose.msra.mxu0 0
        %1648 = vmatprep.subr.bf16.mxu0 0
        %1649 = vmatpush1.bf16.xpose.msra.mxu0 0
        %1650 = vmatprep.subr.bf16.mxu0 0
        %1651 = vmatpush1.bf16.xpose.msra.mxu0 0
        %1652 = vmatprep.subr.bf16.mxu0 0
        %1653 = vmatpush1.bf16.xpose.msra.mxu0 0
        %1654 = vmatprep.subr.bf16.mxu0 0
        %1655 = vmatpush1.bf16.xpose.msra.mxu0 0
        %1656 = vmatprep.subr.bf16.mxu0 0
        %1657 = vmatpush1.bf16.xpose.msra.mxu0 0
        %1658 = vmatprep.subr.bf16.mxu0 0
        %1659 = vmatpush1.bf16.xpose.msra.mxu0 0
        %1660 = vmatprep.subr.bf16.mxu0 0
        %1661 = vmatpush1.bf16.xpose.msra.mxu0 0
        %1662 = vmatprep.subr.bf16.mxu0 0
        %1663 = vmatpush1.bf16.xpose.msra.mxu0 0
        %1664 = vmatprep.subr.bf16.mxu0 0
        %1665 = vmatpush1.bf16.xpose.msra.mxu0 0
        %1666 = vmatprep.subr.bf16.mxu0 0
        %1667 = vmatpush1.bf16.xpose.msra.mxu0 0
        %1668 = vmatprep.subr.bf16.mxu0 0
        %1669 = vmatpush1.bf16.xpose.msra.mxu0 0
        %1670 = vmatprep.subr.bf16.mxu0 0
        %1671 = vmatpush1.bf16.xpose.msra.mxu0 0
        %1672 = vmatprep.subr.bf16.mxu0 0
        %1673 = vmatpush1.bf16.xpose.msra.mxu0 0
        %1674 = vmatprep.subr.bf16.mxu0 0
        %1675 = vmatpush1.bf16.xpose.msra.mxu0 0
        %1676 = vmatprep.mubr.bf16.mxu0 0
        %1677 = vmatmul.mubr.bf16.gmra.mrb[0].mxu0 %v1639
        %v1678 = vpop.f32.mrb[0].mxu0
        %v1679 = vadd.f32 0.0, %v1678
        %v1680 = vpop.f32.mrb[0].mxu0
        %v1681 = vpop.f32.mrb[0].mxu0
        %v1682 = vadd.f32 0.0, %v1681
        %v1683 = vpop.f32.mrb[0].mxu0
        %1684 = vdwg.mxu0
        %v1685 = vsel %vm1419, %v1679, -inf
        %1686 = vmax.xlane.f32.xlu0 %v1685
        %v1687 = vpop.xlane.xlu0 %1686
        %v1688 = vsel %vm1419, %v1682, -inf
        %1689 = vmax.xlane.f32.xlu0 %v1688
        %v1690 = vpop.xlane.xlu0 %1689
        %v1691 = vsub.f32 %v1679, %v1687
        %v1692 = vsub.f32 %v1682, %v1690
        %v1693 = vmul.f32 %v1691, 1.442695
        %v1694 = vpow.pop %v1693
        %v1695 = vmul.f32 %v1692, 1.442695
        %v1696 = vpow.pop %v1695
        %v1697 = vsel %vm1419, %v1694, 0.0
        %1698 = vadd.xlane.f32.xlu0 %v1697
        %v1699 = vpop.xlane.xlu0 %1698
        %v1700 = vsel %vm1419, %v1696, 0.0
        %1701 = vadd.xlane.f32.xlu0 %v1700
        %v1702 = vpop.xlane.xlu0 %1701
        %v1703 = vpack.c.bf16 %v1696, %v1694
        %v1705 = vsel %vm1419, %v1703, 0
        %1707 = vmatprep.subr.bf16.mxu0 0
        %1708 = vmatpush1.bf16.msra.mxu0 %v1637
        %1709 = vmatprep.subr.bf16.mxu0 0
        %1710 = vmatpush1.bf16.msra.mxu0 0
        %1711 = vmatprep.subr.bf16.mxu0 0
        %1712 = vmatpush1.bf16.msra.mxu0 0
        %1713 = vmatprep.subr.bf16.mxu0 0
        %1714 = vmatpush1.bf16.msra.mxu0 0
        %1715 = vmatprep.subr.bf16.mxu0 0
        %1716 = vmatpush1.bf16.msra.mxu0 0
        %1717 = vmatprep.subr.bf16.mxu0 0
        %1718 = vmatpush1.bf16.msra.mxu0 0
        %1719 = vmatprep.subr.bf16.mxu0 0
        %1720 = vmatpush1.bf16.msra.mxu0 0
        %1721 = vmatprep.subr.bf16.mxu0 0
        %1722 = vmatpush1.bf16.msra.mxu0 0
        %1723 = vmatprep.subr.bf16.mxu0 0
        %1724 = vmatpush1.bf16.msra.mxu0 0
        %1725 = vmatprep.subr.bf16.mxu0 0
        %1726 = vmatpush1.bf16.msra.mxu0 0
        %1727 = vmatprep.subr.bf16.mxu0 0
        %1728 = vmatpush1.bf16.msra.mxu0 0
        %1729 = vmatprep.subr.bf16.mxu0 0
        %1730 = vmatpush1.bf16.msra.mxu0 0
        %1731 = vmatprep.subr.bf16.mxu0 0
        %1732 = vmatpush1.bf16.msra.mxu0 0
        %1733 = vmatprep.subr.bf16.mxu0 0
        %1734 = vmatpush1.bf16.msra.mxu0 0
        %1735 = vmatprep.subr.bf16.mxu0 0
        %1736 = vmatpush1.bf16.msra.mxu0 0
        %1737 = vmatprep.subr.bf16.mxu0 0
        %1738 = vmatpush1.bf16.msra.mxu0 0
        %1739 = vmatprep.mubr.bf16.mxu0 0
        %1740 = vmatmul.mubr.bf16.gmra.mrb[0].mxu0 %v1705
        %v1741 = vpop.f32.mrb[0].mxu0
        %v1742 = vadd.f32 0.0, %v1741
        %v1743 = vpop.f32.mrb[0].mxu0
        %v1744 = vpop.f32.mrb[0].mxu0
        %v1745 = vadd.f32 0.0, %v1744
        %v1746 = vpop.f32.mrb[0].mxu0
        %1747 = vdwg.mxu0
        %v1748 = vrcp.pop %v1699
        %v1749 = vrcp.pop %v1702
        %v1750 = vmul.f32 %v1365, %v1748
        %v1751 = vmul.f32 %v1367, %v1749
        %1753 = vset.pattern.permute.xlu0 2
        %1754 = vperm.xlu0 %1753, %v1750
        %v1755 = vpop.permute.xlu0 %1754
        %1758 = vset.pattern.permute.xlu0 2
        %1759 = vperm.xlu0 %1758, %v1751
        %v1760 = vpop.permute.xlu0 %1759
        %v1762 = vmul.f32 %v1742, %v1755
        %v1763 = vmul.f32 %v1745, %v1760
        %1765 = vrot.lane.b32.xlu0 %v1635, 64
        %v1766 = vpop.permute.xlu0 %1765
        %1768 = vrot.lane.b32.xlu0 %v1636, 64
        %v1769 = vpop.permute.xlu0 %1768
        %v1771 = vsel %vm1371, %v1766, 0
        %v1774 = vsel %vm1371, %v1769, 0
        %1776 = vmatprep.subr.bf16.mxu0 0
        %1777 = vmatpush1.bf16.xpose.msra.mxu0 %v1774
        %1778 = vmatprep.subr.bf16.mxu0 0
        %1779 = vmatpush1.bf16.xpose.msra.mxu0 0
        %1780 = vmatprep.subr.bf16.mxu0 0
        %1781 = vmatpush1.bf16.xpose.msra.mxu0 0
        %1782 = vmatprep.subr.bf16.mxu0 0
        %1783 = vmatpush1.bf16.xpose.msra.mxu0 0
        %1784 = vmatprep.subr.bf16.mxu0 0
        %1785 = vmatpush1.bf16.xpose.msra.mxu0 0
        %1786 = vmatprep.subr.bf16.mxu0 0
        %1787 = vmatpush1.bf16.xpose.msra.mxu0 0
        %1788 = vmatprep.subr.bf16.mxu0 0
        %1789 = vmatpush1.bf16.xpose.msra.mxu0 0
        %1790 = vmatprep.subr.bf16.mxu0 0
        %1791 = vmatpush1.bf16.xpose.msra.mxu0 0
        %1792 = vmatprep.subr.bf16.mxu0 0
        %1793 = vmatpush1.bf16.xpose.msra.mxu0 0
        %1794 = vmatprep.subr.bf16.mxu0 0
        %1795 = vmatpush1.bf16.xpose.msra.mxu0 0
        %1796 = vmatprep.subr.bf16.mxu0 0
        %1797 = vmatpush1.bf16.xpose.msra.mxu0 0
        %1798 = vmatprep.subr.bf16.mxu0 0
        %1799 = vmatpush1.bf16.xpose.msra.mxu0 0
        %1800 = vmatprep.subr.bf16.mxu0 0
        %1801 = vmatpush1.bf16.xpose.msra.mxu0 0
        %1802 = vmatprep.subr.bf16.mxu0 0
        %1803 = vmatpush1.bf16.xpose.msra.mxu0 0
        %1804 = vmatprep.subr.bf16.mxu0 0
        %1805 = vmatpush1.bf16.xpose.msra.mxu0 0
        %1806 = vmatprep.subr.bf16.mxu0 0
        %1807 = vmatpush1.bf16.xpose.msra.mxu0 0
        %1808 = vmatprep.mubr.bf16.mxu0 0
        %1809 = vmatmul.mubr.bf16.gmra.mrb[0].mxu0 %v1771
        %v1810 = vpop.f32.mrb[0].mxu0
        %v1811 = vadd.f32 0.0, %v1810
        %v1812 = vpop.f32.mrb[0].mxu0
        %v1813 = vpop.f32.mrb[0].mxu0
        %v1814 = vadd.f32 0.0, %v1813
        %v1815 = vpop.f32.mrb[0].mxu0
        %1816 = vdwg.mxu0
        %v1817 = vsel %vm1419, %v1811, -inf
        %1818 = vmax.xlane.f32.xlu0 %v1817
        %v1819 = vpop.xlane.xlu0 %1818
        %v1820 = vsel %vm1419, %v1814, -inf
        %1821 = vmax.xlane.f32.xlu0 %v1820
        %v1822 = vpop.xlane.xlu0 %1821
        %v1823 = vsub.f32 %v1811, %v1819
        %v1824 = vsub.f32 %v1814, %v1822
        %v1825 = vmul.f32 %v1823, 1.442695
        %v1826 = vpow.pop %v1825
        %v1827 = vmul.f32 %v1824, 1.442695
        %v1828 = vpow.pop %v1827
        %v1829 = vsel %vm1419, %v1826, 0.0
        %1830 = vadd.xlane.f32.xlu0 %v1829
        %v1831 = vpop.xlane.xlu0 %1830
        %v1832 = vsel %vm1419, %v1828, 0.0
        %1833 = vadd.xlane.f32.xlu0 %v1832
        %v1834 = vpop.xlane.xlu0 %1833
        %v1835 = vpack.c.bf16 %v1828, %v1826
        %1837 = vrot.lane.b32.xlu0 %v1637, 64
        %v1838 = vpop.permute.xlu0 %1837
        %v1841 = vsel %vm1419, %v1835, 0
        %1843 = vmatprep.subr.bf16.mxu0 0
        %1844 = vmatpush1.bf16.msra.mxu0 %v1838
        %1845 = vmatprep.subr.bf16.mxu0 0
        %1846 = vmatpush1.bf16.msra.mxu0 0
        %1847 = vmatprep.subr.bf16.mxu0 0
        %1848 = vmatpush1.bf16.msra.mxu0 0
        %1849 = vmatprep.subr.bf16.mxu0 0
        %1850 = vmatpush1.bf16.msra.mxu0 0
        %1851 = vmatprep.subr.bf16.mxu0 0
        %1852 = vmatpush1.bf16.msra.mxu0 0
        %1853 = vmatprep.subr.bf16.mxu0 0
        %1854 = vmatpush1.bf16.msra.mxu0 0
        %1855 = vmatprep.subr.bf16.mxu0 0
        %1856 = vmatpush1.bf16.msra.mxu0 0
        %1857 = vmatprep.subr.bf16.mxu0 0
        %1858 = vmatpush1.bf16.msra.mxu0 0
        %1859 = vmatprep.subr.bf16.mxu0 0
        %1860 = vmatpush1.bf16.msra.mxu0 0
        %1861 = vmatprep.subr.bf16.mxu0 0
        %1862 = vmatpush1.bf16.msra.mxu0 0
        %1863 = vmatprep.subr.bf16.mxu0 0
        %1864 = vmatpush1.bf16.msra.mxu0 0
        %1865 = vmatprep.subr.bf16.mxu0 0
        %1866 = vmatpush1.bf16.msra.mxu0 0
        %1867 = vmatprep.subr.bf16.mxu0 0
        %1868 = vmatpush1.bf16.msra.mxu0 0
        %1869 = vmatprep.subr.bf16.mxu0 0
        %1870 = vmatpush1.bf16.msra.mxu0 0
        %1871 = vmatprep.subr.bf16.mxu0 0
        %1872 = vmatpush1.bf16.msra.mxu0 0
        %1873 = vmatprep.subr.bf16.mxu0 0
        %1874 = vmatpush1.bf16.msra.mxu0 0
        %1875 = vmatprep.mubr.bf16.mxu0 0
        %1876 = vmatmul.mubr.bf16.gmra.mrb[0].mxu0 %v1841
        %v1877 = vpop.f32.mrb[0].mxu0
        %v1878 = vadd.f32 0.0, %v1877
        %v1879 = vpop.f32.mrb[0].mxu0
        %v1880 = vpop.f32.mrb[0].mxu0
        %v1881 = vadd.f32 0.0, %v1880
        %v1882 = vpop.f32.mrb[0].mxu0
        %1883 = vdwg.mxu0
        %v1884 = vrcp.pop %v1831
        %v1885 = vrcp.pop %v1834
        %v1886 = vmul.f32 %v1365, %v1884
        %v1887 = vmul.f32 %v1367, %v1885
        %1889 = vset.pattern.permute.xlu0 3
        %1890 = vperm.xlu0 %1889, %v1886
        %v1891 = vpop.permute.xlu0 %1890
        %1894 = vset.pattern.permute.xlu0 3
        %1895 = vperm.xlu0 %1894, %v1887
        %v1896 = vpop.permute.xlu0 %1895
        %v1898 = vmul.f32 %v1878, %v1891
        %v1899 = vmul.f32 %v1881, %v1896
        %v1900 = vpack.c.bf16 %v1060, %v1056
        %v1901 = vpack.c.bf16 %v1146, %v1142
        %v1902 = vpack.c.bf16 %v1232, %v1228
        %v1904 = vsel %vm1371, %v1900, 0
        %v1907 = vsel %vm1371, %v1901, 0
        %1909 = vmatprep.subr.bf16.mxu0 0
        %1910 = vmatpush1.bf16.xpose.msra.mxu0 %v1907
        %1911 = vmatprep.subr.bf16.mxu0 0
        %1912 = vmatpush1.bf16.xpose.msra.mxu0 0
        %1913 = vmatprep.subr.bf16.mxu0 0
        %1914 = vmatpush1.bf16.xpose.msra.mxu0 0
        %1915 = vmatprep.subr.bf16.mxu0 0
        %1916 = vmatpush1.bf16.xpose.msra.mxu0 0
        %1917 = vmatprep.subr.bf16.mxu0 0
        %1918 = vmatpush1.bf16.xpose.msra.mxu0 0
        %1919 = vmatprep.subr.bf16.mxu0 0
        %1920 = vmatpush1.bf16.xpose.msra.mxu0 0
        %1921 = vmatprep.subr.bf16.mxu0 0
        %1922 = vmatpush1.bf16.xpose.msra.mxu0 0
        %1923 = vmatprep.subr.bf16.mxu0 0
        %1924 = vmatpush1.bf16.xpose.msra.mxu0 0
        %1925 = vmatprep.subr.bf16.mxu0 0
        %1926 = vmatpush1.bf16.xpose.msra.mxu0 0
        %1927 = vmatprep.subr.bf16.mxu0 0
        %1928 = vmatpush1.bf16.xpose.msra.mxu0 0
        %1929 = vmatprep.subr.bf16.mxu0 0
        %1930 = vmatpush1.bf16.xpose.msra.mxu0 0
        %1931 = vmatprep.subr.bf16.mxu0 0
        %1932 = vmatpush1.bf16.xpose.msra.mxu0 0
        %1933 = vmatprep.subr.bf16.mxu0 0
        %1934 = vmatpush1.bf16.xpose.msra.mxu0 0
        %1935 = vmatprep.subr.bf16.mxu0 0
        %1936 = vmatpush1.bf16.xpose.msra.mxu0 0
        %1937 = vmatprep.subr.bf16.mxu0 0
        %1938 = vmatpush1.bf16.xpose.msra.mxu0 0
        %1939 = vmatprep.subr.bf16.mxu0 0
        %1940 = vmatpush1.bf16.xpose.msra.mxu0 0
        %1941 = vmatprep.mubr.bf16.mxu0 0
        %1942 = vmatmul.mubr.bf16.gmra.mrb[0].mxu0 %v1904
        %v1943 = vpop.f32.mrb[0].mxu0
        %v1944 = vadd.f32 0.0, %v1943
        %v1945 = vpop.f32.mrb[0].mxu0
        %v1946 = vpop.f32.mrb[0].mxu0
        %v1947 = vadd.f32 0.0, %v1946
        %v1948 = vpop.f32.mrb[0].mxu0
        %1949 = vdwg.mxu0
        %v1950 = vsel %vm1419, %v1944, -inf
        %1951 = vmax.xlane.f32.xlu0 %v1950
        %v1952 = vpop.xlane.xlu0 %1951
        %v1953 = vsel %vm1419, %v1947, -inf
        %1954 = vmax.xlane.f32.xlu0 %v1953
        %v1955 = vpop.xlane.xlu0 %1954
        %v1956 = vsub.f32 %v1944, %v1952
        %v1957 = vsub.f32 %v1947, %v1955
        %v1958 = vmul.f32 %v1956, 1.442695
        %v1959 = vpow.pop %v1958
        %v1960 = vmul.f32 %v1957, 1.442695
        %v1961 = vpow.pop %v1960
        %v1962 = vsel %vm1419, %v1959, 0.0
        %1963 = vadd.xlane.f32.xlu0 %v1962
        %v1964 = vpop.xlane.xlu0 %1963
        %v1965 = vsel %vm1419, %v1961, 0.0
        %1966 = vadd.xlane.f32.xlu0 %v1965
        %v1967 = vpop.xlane.xlu0 %1966
        %v1968 = vpack.c.bf16 %v1961, %v1959
        %v1970 = vsel %vm1419, %v1968, 0
        %1972 = vmatprep.subr.bf16.mxu0 0
        %1973 = vmatpush1.bf16.msra.mxu0 %v1902
        %1974 = vmatprep.subr.bf16.mxu0 0
        %1975 = vmatpush1.bf16.msra.mxu0 0
        %1976 = vmatprep.subr.bf16.mxu0 0
        %1977 = vmatpush1.bf16.msra.mxu0 0
        %1978 = vmatprep.subr.bf16.mxu0 0
        %1979 = vmatpush1.bf16.msra.mxu0 0
        %1980 = vmatprep.subr.bf16.mxu0 0
        %1981 = vmatpush1.bf16.msra.mxu0 0
        %1982 = vmatprep.subr.bf16.mxu0 0
        %1983 = vmatpush1.bf16.msra.mxu0 0
        %1984 = vmatprep.subr.bf16.mxu0 0
        %1985 = vmatpush1.bf16.msra.mxu0 0
        %1986 = vmatprep.subr.bf16.mxu0 0
        %1987 = vmatpush1.bf16.msra.mxu0 0
        %1988 = vmatprep.subr.bf16.mxu0 0
        %1989 = vmatpush1.bf16.msra.mxu0 0
        %1990 = vmatprep.subr.bf16.mxu0 0
        %1991 = vmatpush1.bf16.msra.mxu0 0
        %1992 = vmatprep.subr.bf16.mxu0 0
        %1993 = vmatpush1.bf16.msra.mxu0 0
        %1994 = vmatprep.subr.bf16.mxu0 0
        %1995 = vmatpush1.bf16.msra.mxu0 0
        %1996 = vmatprep.subr.bf16.mxu0 0
        %1997 = vmatpush1.bf16.msra.mxu0 0
        %1998 = vmatprep.subr.bf16.mxu0 0
        %1999 = vmatpush1.bf16.msra.mxu0 0
        %2000 = vmatprep.subr.bf16.mxu0 0
        %2001 = vmatpush1.bf16.msra.mxu0 0
        %2002 = vmatprep.subr.bf16.mxu0 0
        %2003 = vmatpush1.bf16.msra.mxu0 0
        %2004 = vmatprep.mubr.bf16.mxu0 0
        %2005 = vmatmul.mubr.bf16.gmra.mrb[0].mxu0 %v1970
        %v2006 = vpop.f32.mrb[0].mxu0
        %v2007 = vadd.f32 0.0, %v2006
        %v2008 = vpop.f32.mrb[0].mxu0
        %v2009 = vpop.f32.mrb[0].mxu0
        %v2010 = vadd.f32 0.0, %v2009
        %v2011 = vpop.f32.mrb[0].mxu0
        %2012 = vdwg.mxu0
        %v2013 = vrcp.pop %v1964
        %v2014 = vrcp.pop %v1967
        %v2015 = vmul.f32 %v1365, %v2013
        %v2016 = vmul.f32 %v1367, %v2014
        %2018 = vset.pattern.permute.xlu0 4
        %2019 = vperm.xlu0 %2018, %v2015
        %v2020 = vpop.permute.xlu0 %2019
        %2023 = vset.pattern.permute.xlu0 4
        %2024 = vperm.xlu0 %2023, %v2016
        %v2025 = vpop.permute.xlu0 %2024
        %v2027 = vmul.f32 %v2007, %v2020
        %v2028 = vmul.f32 %v2010, %v2025
        %2030 = vrot.lane.b32.xlu0 %v1900, 64
        %v2031 = vpop.permute.xlu0 %2030
        %2033 = vrot.lane.b32.xlu0 %v1901, 64
        %v2034 = vpop.permute.xlu0 %2033
        %v2036 = vsel %vm1371, %v2031, 0
        %v2039 = vsel %vm1371, %v2034, 0
        %2041 = vmatprep.subr.bf16.mxu0 0
        %2042 = vmatpush1.bf16.xpose.msra.mxu0 %v2039
        %2043 = vmatprep.subr.bf16.mxu0 0
        %2044 = vmatpush1.bf16.xpose.msra.mxu0 0
        %2045 = vmatprep.subr.bf16.mxu0 0
        %2046 = vmatpush1.bf16.xpose.msra.mxu0 0
        %2047 = vmatprep.subr.bf16.mxu0 0
        %2048 = vmatpush1.bf16.xpose.msra.mxu0 0
        %2049 = vmatprep.subr.bf16.mxu0 0
        %2050 = vmatpush1.bf16.xpose.msra.mxu0 0
        %2051 = vmatprep.subr.bf16.mxu0 0
        %2052 = vmatpush1.bf16.xpose.msra.mxu0 0
        %2053 = vmatprep.subr.bf16.mxu0 0
        %2054 = vmatpush1.bf16.xpose.msra.mxu0 0
        %2055 = vmatprep.subr.bf16.mxu0 0
        %2056 = vmatpush1.bf16.xpose.msra.mxu0 0
        %2057 = vmatprep.subr.bf16.mxu0 0
        %2058 = vmatpush1.bf16.xpose.msra.mxu0 0
        %2059 = vmatprep.subr.bf16.mxu0 0
        %2060 = vmatpush1.bf16.xpose.msra.mxu0 0
        %2061 = vmatprep.subr.bf16.mxu0 0
        %2062 = vmatpush1.bf16.xpose.msra.mxu0 0
        %2063 = vmatprep.subr.bf16.mxu0 0
        %2064 = vmatpush1.bf16.xpose.msra.mxu0 0
        %2065 = vmatprep.subr.bf16.mxu0 0
        %2066 = vmatpush1.bf16.xpose.msra.mxu0 0
        %2067 = vmatprep.subr.bf16.mxu0 0
        %2068 = vmatpush1.bf16.xpose.msra.mxu0 0
        %2069 = vmatprep.subr.bf16.mxu0 0
        %2070 = vmatpush1.bf16.xpose.msra.mxu0 0
        %2071 = vmatprep.subr.bf16.mxu0 0
        %2072 = vmatpush1.bf16.xpose.msra.mxu0 0
        %2073 = vmatprep.mubr.bf16.mxu0 0
        %2074 = vmatmul.mubr.bf16.gmra.mrb[0].mxu0 %v2036
        %v2075 = vpop.f32.mrb[0].mxu0
        %v2076 = vadd.f32 0.0, %v2075
        %v2077 = vpop.f32.mrb[0].mxu0
        %v2078 = vpop.f32.mrb[0].mxu0
        %v2079 = vadd.f32 0.0, %v2078
        %v2080 = vpop.f32.mrb[0].mxu0
        %2081 = vdwg.mxu0
        %v2082 = vsel %vm1419, %v2076, -inf
        %2083 = vmax.xlane.f32.xlu0 %v2082
        %v2084 = vpop.xlane.xlu0 %2083
        %v2085 = vsel %vm1419, %v2079, -inf
        %2086 = vmax.xlane.f32.xlu0 %v2085
        %v2087 = vpop.xlane.xlu0 %2086
        %v2088 = vsub.f32 %v2076, %v2084
        %v2089 = vsub.f32 %v2079, %v2087
        %v2090 = vmul.f32 %v2088, 1.442695
        %v2091 = vpow.pop %v2090
        %v2092 = vmul.f32 %v2089, 1.442695
        %v2093 = vpow.pop %v2092
        %v2094 = vsel %vm1419, %v2091, 0.0
        %2095 = vadd.xlane.f32.xlu0 %v2094
        %v2096 = vpop.xlane.xlu0 %2095
        %v2097 = vsel %vm1419, %v2093, 0.0
        %2098 = vadd.xlane.f32.xlu0 %v2097
        %v2099 = vpop.xlane.xlu0 %2098
        %v2100 = vpack.c.bf16 %v2093, %v2091
        %2102 = vrot.lane.b32.xlu0 %v1902, 64
        %v2103 = vpop.permute.xlu0 %2102
        %v2106 = vsel %vm1419, %v2100, 0
        %2108 = vmatprep.subr.bf16.mxu0 0
        %2109 = vmatpush1.bf16.msra.mxu0 %v2103
        %2110 = vmatprep.subr.bf16.mxu0 0
        %2111 = vmatpush1.bf16.msra.mxu0 0
        %2112 = vmatprep.subr.bf16.mxu0 0
        %2113 = vmatpush1.bf16.msra.mxu0 0
        %2114 = vmatprep.subr.bf16.mxu0 0
        %2115 = vmatpush1.bf16.msra.mxu0 0
        %2116 = vmatprep.subr.bf16.mxu0 0
        %2117 = vmatpush1.bf16.msra.mxu0 0
        %2118 = vmatprep.subr.bf16.mxu0 0
        %2119 = vmatpush1.bf16.msra.mxu0 0
        %2120 = vmatprep.subr.bf16.mxu0 0
        %2121 = vmatpush1.bf16.msra.mxu0 0
        %2122 = vmatprep.subr.bf16.mxu0 0
        %2123 = vmatpush1.bf16.msra.mxu0 0
        %2124 = vmatprep.subr.bf16.mxu0 0
        %2125 = vmatpush1.bf16.msra.mxu0 0
        %2126 = vmatprep.subr.bf16.mxu0 0
        %2127 = vmatpush1.bf16.msra.mxu0 0
        %2128 = vmatprep.subr.bf16.mxu0 0
        %2129 = vmatpush1.bf16.msra.mxu0 0
        %2130 = vmatprep.subr.bf16.mxu0 0
        %2131 = vmatpush1.bf16.msra.mxu0 0
        %2132 = vmatprep.subr.bf16.mxu0 0
        %2133 = vmatpush1.bf16.msra.mxu0 0
        %2134 = vmatprep.subr.bf16.mxu0 0
        %2135 = vmatpush1.bf16.msra.mxu0 0
        %2136 = vmatprep.subr.bf16.mxu0 0
        %2137 = vmatpush1.bf16.msra.mxu0 0
        %2138 = vmatprep.subr.bf16.mxu0 0
        %2139 = vmatpush1.bf16.msra.mxu0 0
        %2140 = vmatprep.mubr.bf16.mxu0 0
        %2141 = vmatmul.mubr.bf16.gmra.mrb[0].mxu0 %v2106
        %v2142 = vpop.f32.mrb[0].mxu0
        %v2143 = vadd.f32 0.0, %v2142
        %v2144 = vpop.f32.mrb[0].mxu0
        %v2145 = vpop.f32.mrb[0].mxu0
        %v2146 = vadd.f32 0.0, %v2145
        %v2147 = vpop.f32.mrb[0].mxu0
        %2148 = vdwg.mxu0
        %v2149 = vrcp.pop %v2096
        %v2150 = vrcp.pop %v2099
        %v2151 = vmul.f32 %v1365, %v2149
        %v2152 = vmul.f32 %v1367, %v2150
        %2154 = vset.pattern.permute.xlu0 5
        %2155 = vperm.xlu0 %2154, %v2151
        %v2156 = vpop.permute.xlu0 %2155
        %2159 = vset.pattern.permute.xlu0 5
        %2160 = vperm.xlu0 %2159, %v2152
        %v2161 = vpop.permute.xlu0 %2160
        %v2163 = vmul.f32 %v2143, %v2156
        %v2164 = vmul.f32 %v2146, %v2161
        %v2165 = vpack.c.bf16 %v1062, %v1058
        %v2166 = vpack.c.bf16 %v1148, %v1144
        %v2167 = vpack.c.bf16 %v1234, %v1230
        %v2169 = vsel %vm1371, %v2165, 0
        %v2172 = vsel %vm1371, %v2166, 0
        %2174 = vmatprep.subr.bf16.mxu0 0
        %2175 = vmatpush1.bf16.xpose.msra.mxu0 %v2172
        %2176 = vmatprep.subr.bf16.mxu0 0
        %2177 = vmatpush1.bf16.xpose.msra.mxu0 0
        %2178 = vmatprep.subr.bf16.mxu0 0
        %2179 = vmatpush1.bf16.xpose.msra.mxu0 0
        %2180 = vmatprep.subr.bf16.mxu0 0
        %2181 = vmatpush1.bf16.xpose.msra.mxu0 0
        %2182 = vmatprep.subr.bf16.mxu0 0
        %2183 = vmatpush1.bf16.xpose.msra.mxu0 0
        %2184 = vmatprep.subr.bf16.mxu0 0
        %2185 = vmatpush1.bf16.xpose.msra.mxu0 0
        %2186 = vmatprep.subr.bf16.mxu0 0
        %2187 = vmatpush1.bf16.xpose.msra.mxu0 0
        %2188 = vmatprep.subr.bf16.mxu0 0
        %2189 = vmatpush1.bf16.xpose.msra.mxu0 0
        %2190 = vmatprep.subr.bf16.mxu0 0
        %2191 = vmatpush1.bf16.xpose.msra.mxu0 0
        %2192 = vmatprep.subr.bf16.mxu0 0
        %2193 = vmatpush1.bf16.xpose.msra.mxu0 0
        %2194 = vmatprep.subr.bf16.mxu0 0
        %2195 = vmatpush1.bf16.xpose.msra.mxu0 0
        %2196 = vmatprep.subr.bf16.mxu0 0
        %2197 = vmatpush1.bf16.xpose.msra.mxu0 0
        %2198 = vmatprep.subr.bf16.mxu0 0
        %2199 = vmatpush1.bf16.xpose.msra.mxu0 0
        %2200 = vmatprep.subr.bf16.mxu0 0
        %2201 = vmatpush1.bf16.xpose.msra.mxu0 0
        %2202 = vmatprep.subr.bf16.mxu0 0
        %2203 = vmatpush1.bf16.xpose.msra.mxu0 0
        %2204 = vmatprep.subr.bf16.mxu0 0
        %2205 = vmatpush1.bf16.xpose.msra.mxu0 0
        %2206 = vmatprep.mubr.bf16.mxu0 0
        %2207 = vmatmul.mubr.bf16.gmra.mrb[0].mxu0 %v2169
        %v2208 = vpop.f32.mrb[0].mxu0
        %v2209 = vadd.f32 0.0, %v2208
        %v2210 = vpop.f32.mrb[0].mxu0
        %v2211 = vpop.f32.mrb[0].mxu0
        %v2212 = vadd.f32 0.0, %v2211
        %v2213 = vpop.f32.mrb[0].mxu0
        %2214 = vdwg.mxu0
        %v2215 = vsel %vm1419, %v2209, -inf
        %2216 = vmax.xlane.f32.xlu0 %v2215
        %v2217 = vpop.xlane.xlu0 %2216
        %v2218 = vsel %vm1419, %v2212, -inf
        %2219 = vmax.xlane.f32.xlu0 %v2218
        %v2220 = vpop.xlane.xlu0 %2219
        %v2221 = vsub.f32 %v2209, %v2217
        %v2222 = vsub.f32 %v2212, %v2220
        %v2223 = vmul.f32 %v2221, 1.442695
        %v2224 = vpow.pop %v2223
        %v2225 = vmul.f32 %v2222, 1.442695
        %v2226 = vpow.pop %v2225
        %v2227 = vsel %vm1419, %v2224, 0.0
        %2228 = vadd.xlane.f32.xlu0 %v2227
        %v2229 = vpop.xlane.xlu0 %2228
        %v2230 = vsel %vm1419, %v2226, 0.0
        %2231 = vadd.xlane.f32.xlu0 %v2230
        %v2232 = vpop.xlane.xlu0 %2231
        %v2233 = vpack.c.bf16 %v2226, %v2224
        %v2235 = vsel %vm1419, %v2233, 0
        %2237 = vmatprep.subr.bf16.mxu0 0
        %2238 = vmatpush1.bf16.msra.mxu0 %v2167
        %2239 = vmatprep.subr.bf16.mxu0 0
        %2240 = vmatpush1.bf16.msra.mxu0 0
        %2241 = vmatprep.subr.bf16.mxu0 0
        %2242 = vmatpush1.bf16.msra.mxu0 0
        %2243 = vmatprep.subr.bf16.mxu0 0
        %2244 = vmatpush1.bf16.msra.mxu0 0
        %2245 = vmatprep.subr.bf16.mxu0 0
        %2246 = vmatpush1.bf16.msra.mxu0 0
        %2247 = vmatprep.subr.bf16.mxu0 0
        %2248 = vmatpush1.bf16.msra.mxu0 0
        %2249 = vmatprep.subr.bf16.mxu0 0
        %2250 = vmatpush1.bf16.msra.mxu0 0
        %2251 = vmatprep.subr.bf16.mxu0 0
        %2252 = vmatpush1.bf16.msra.mxu0 0
        %2253 = vmatprep.subr.bf16.mxu0 0
        %2254 = vmatpush1.bf16.msra.mxu0 0
        %2255 = vmatprep.subr.bf16.mxu0 0
        %2256 = vmatpush1.bf16.msra.mxu0 0
        %2257 = vmatprep.subr.bf16.mxu0 0
        %2258 = vmatpush1.bf16.msra.mxu0 0
        %2259 = vmatprep.subr.bf16.mxu0 0
        %2260 = vmatpush1.bf16.msra.mxu0 0
        %2261 = vmatprep.subr.bf16.mxu0 0
        %2262 = vmatpush1.bf16.msra.mxu0 0
        %2263 = vmatprep.subr.bf16.mxu0 0
        %2264 = vmatpush1.bf16.msra.mxu0 0
        %2265 = vmatprep.subr.bf16.mxu0 0
        %2266 = vmatpush1.bf16.msra.mxu0 0
        %2267 = vmatprep.subr.bf16.mxu0 0
        %2268 = vmatpush1.bf16.msra.mxu0 0
        %2269 = vmatprep.mubr.bf16.mxu0 0
        %2270 = vmatmul.mubr.bf16.gmra.mrb[0].mxu0 %v2235
        %v2271 = vpop.f32.mrb[0].mxu0
        %v2272 = vadd.f32 0.0, %v2271
        %v2273 = vpop.f32.mrb[0].mxu0
        %v2274 = vpop.f32.mrb[0].mxu0
        %v2275 = vadd.f32 0.0, %v2274
        %v2276 = vpop.f32.mrb[0].mxu0
        %2277 = vdwg.mxu0
        %v2278 = vrcp.pop %v2229
        %v2279 = vrcp.pop %v2232
        %v2280 = vmul.f32 %v1365, %v2278
        %v2281 = vmul.f32 %v1367, %v2279
        %2283 = vset.pattern.permute.xlu0 6
        %2284 = vperm.xlu0 %2283, %v2280
        %v2285 = vpop.permute.xlu0 %2284
        %2288 = vset.pattern.permute.xlu0 6
        %2289 = vperm.xlu0 %2288, %v2281
        %v2290 = vpop.permute.xlu0 %2289
        %v2292 = vmul.f32 %v2272, %v2285
        %v2293 = vmul.f32 %v2275, %v2290
        %2295 = vrot.lane.b32.xlu0 %v2165, 64
        %v2296 = vpop.permute.xlu0 %2295
        %2298 = vrot.lane.b32.xlu0 %v2166, 64
        %v2299 = vpop.permute.xlu0 %2298
        %v2301 = vsel %vm1371, %v2296, 0
        %v2304 = vsel %vm1371, %v2299, 0
        %2306 = vmatprep.subr.bf16.mxu0 0
        %2307 = vmatpush1.bf16.xpose.msra.mxu0 %v2304
        %2308 = vmatprep.subr.bf16.mxu0 0
        %2309 = vmatpush1.bf16.xpose.msra.mxu0 0
        %2310 = vmatprep.subr.bf16.mxu0 0
        %2311 = vmatpush1.bf16.xpose.msra.mxu0 0
        %2312 = vmatprep.subr.bf16.mxu0 0
        %2313 = vmatpush1.bf16.xpose.msra.mxu0 0
        %2314 = vmatprep.subr.bf16.mxu0 0
        %2315 = vmatpush1.bf16.xpose.msra.mxu0 0
        %2316 = vmatprep.subr.bf16.mxu0 0
        %2317 = vmatpush1.bf16.xpose.msra.mxu0 0
        %2318 = vmatprep.subr.bf16.mxu0 0
        %2319 = vmatpush1.bf16.xpose.msra.mxu0 0
        %2320 = vmatprep.subr.bf16.mxu0 0
        %2321 = vmatpush1.bf16.xpose.msra.mxu0 0
        %2322 = vmatprep.subr.bf16.mxu0 0
        %2323 = vmatpush1.bf16.xpose.msra.mxu0 0
        %2324 = vmatprep.subr.bf16.mxu0 0
        %2325 = vmatpush1.bf16.xpose.msra.mxu0 0
        %2326 = vmatprep.subr.bf16.mxu0 0
        %2327 = vmatpush1.bf16.xpose.msra.mxu0 0
        %2328 = vmatprep.subr.bf16.mxu0 0
        %2329 = vmatpush1.bf16.xpose.msra.mxu0 0
        %2330 = vmatprep.subr.bf16.mxu0 0
        %2331 = vmatpush1.bf16.xpose.msra.mxu0 0
        %2332 = vmatprep.subr.bf16.mxu0 0
        %2333 = vmatpush1.bf16.xpose.msra.mxu0 0
        %2334 = vmatprep.subr.bf16.mxu0 0
        %2335 = vmatpush1.bf16.xpose.msra.mxu0 0
        %2336 = vmatprep.subr.bf16.mxu0 0
        %2337 = vmatpush1.bf16.xpose.msra.mxu0 0
        %2338 = vmatprep.mubr.bf16.mxu0 0
        %2339 = vmatmul.mubr.bf16.gmra.mrb[0].mxu0 %v2301
        %v2340 = vpop.f32.mrb[0].mxu0
        %v2341 = vadd.f32 0.0, %v2340
        %v2342 = vpop.f32.mrb[0].mxu0
        %v2343 = vpop.f32.mrb[0].mxu0
        %v2344 = vadd.f32 0.0, %v2343
        %v2345 = vpop.f32.mrb[0].mxu0
        %2346 = vdwg.mxu0
        %v2347 = vsel %vm1419, %v2341, -inf
        %2348 = vmax.xlane.f32.xlu0 %v2347
        %v2349 = vpop.xlane.xlu0 %2348
        %v2350 = vsel %vm1419, %v2344, -inf
        %2351 = vmax.xlane.f32.xlu0 %v2350
        %v2352 = vpop.xlane.xlu0 %2351
        %v2353 = vsub.f32 %v2341, %v2349
        %v2354 = vsub.f32 %v2344, %v2352
        %v2355 = vmul.f32 %v2353, 1.442695
        %v2356 = vpow.pop %v2355
        %v2357 = vmul.f32 %v2354, 1.442695
        %v2358 = vpow.pop %v2357
        %v2359 = vsel %vm1419, %v2356, 0.0
        %2360 = vadd.xlane.f32.xlu0 %v2359
        %v2361 = vpop.xlane.xlu0 %2360
        %v2362 = vsel %vm1419, %v2358, 0.0
        %2363 = vadd.xlane.f32.xlu0 %v2362
        %v2364 = vpop.xlane.xlu0 %2363
        %v2365 = vpack.c.bf16 %v2358, %v2356
        %2367 = vrot.lane.b32.xlu0 %v2167, 64
        %v2368 = vpop.permute.xlu0 %2367
        %v2371 = vsel %vm1419, %v2365, 0
        %2373 = vmatprep.subr.bf16.mxu0 0
        %2374 = vmatpush1.bf16.msra.mxu0 %v2368
        %2375 = vmatprep.subr.bf16.mxu0 0
        %2376 = vmatpush1.bf16.msra.mxu0 0
        %2377 = vmatprep.subr.bf16.mxu0 0
        %2378 = vmatpush1.bf16.msra.mxu0 0
        %2379 = vmatprep.subr.bf16.mxu0 0
        %2380 = vmatpush1.bf16.msra.mxu0 0
        %2381 = vmatprep.subr.bf16.mxu0 0
        %2382 = vmatpush1.bf16.msra.mxu0 0
        %2383 = vmatprep.subr.bf16.mxu0 0
        %2384 = vmatpush1.bf16.msra.mxu0 0
        %2385 = vmatprep.subr.bf16.mxu0 0
        %2386 = vmatpush1.bf16.msra.mxu0 0
        %2387 = vmatprep.subr.bf16.mxu0 0
        %2388 = vmatpush1.bf16.msra.mxu0 0
        %2389 = vmatprep.subr.bf16.mxu0 0
        %2390 = vmatpush1.bf16.msra.mxu0 0
        %2391 = vmatprep.subr.bf16.mxu0 0
        %2392 = vmatpush1.bf16.msra.mxu0 0
        %2393 = vmatprep.subr.bf16.mxu0 0
        %2394 = vmatpush1.bf16.msra.mxu0 0
        %2395 = vmatprep.subr.bf16.mxu0 0
        %2396 = vmatpush1.bf16.msra.mxu0 0
        %2397 = vmatprep.subr.bf16.mxu0 0
        %2398 = vmatpush1.bf16.msra.mxu0 0
        %2399 = vmatprep.subr.bf16.mxu0 0
        %2400 = vmatpush1.bf16.msra.mxu0 0
        %2401 = vmatprep.subr.bf16.mxu0 0
        %2402 = vmatpush1.bf16.msra.mxu0 0
        %2403 = vmatprep.subr.bf16.mxu0 0
        %2404 = vmatpush1.bf16.msra.mxu0 0
        %2405 = vmatprep.mubr.bf16.mxu0 0
        %2406 = vmatmul.mubr.bf16.gmra.mrb[0].mxu0 %v2371
        %v2407 = vpop.f32.mrb[0].mxu0
        %v2408 = vadd.f32 0.0, %v2407
        %v2409 = vpop.f32.mrb[0].mxu0
        %v2410 = vpop.f32.mrb[0].mxu0
        %v2411 = vadd.f32 0.0, %v2410
        %v2412 = vpop.f32.mrb[0].mxu0
        %2413 = vdwg.mxu0
        %v2414 = vrcp.pop %v2361
        %v2415 = vrcp.pop %v2364
        %v2416 = vmul.f32 %v1365, %v2414
        %v2417 = vmul.f32 %v1367, %v2415
        %2419 = vset.pattern.permute.xlu0 7
        %2420 = vperm.xlu0 %2419, %v2416
        %v2421 = vpop.permute.xlu0 %2420
        %2424 = vset.pattern.permute.xlu0 7
        %2425 = vperm.xlu0 %2424, %v2417
        %v2426 = vpop.permute.xlu0 %2425
        %v2428 = vmul.f32 %v2408, %v2421
        %v2429 = vmul.f32 %v2411, %v2426
        %2432 = vrot.lane.b32.xlu0 %v1633, 64
        %v2433 = vpop.permute.xlu0 %2432
        %2434 = vrot.lane.b32.xlu0 %v1634, 64
        %v2435 = vpop.permute.xlu0 %2434
        %2440 = vrot.lane.b32.xlu0 %v1898, 64
        %v2441 = vpop.permute.xlu0 %2440
        %2442 = vrot.lane.b32.xlu0 %v1899, 64
        %v2443 = vpop.permute.xlu0 %2442
        %2448 = vrot.lane.b32.xlu0 %v2163, 64
        %v2449 = vpop.permute.xlu0 %2448
        %2450 = vrot.lane.b32.xlu0 %v2164, 64
        %v2451 = vpop.permute.xlu0 %2450
        %2456 = vrot.lane.b32.xlu0 %v2428, 64
        %v2457 = vpop.permute.xlu0 %2456
        %2458 = vrot.lane.b32.xlu0 %v2429, 64
        %v2459 = vpop.permute.xlu0 %2458
        %v2462 = vsel %vm1371, %v1497, %v2433
        %v2463 = vsel %vm1371, %v1498, %v2435
        %v2464 = vsel %vm1371, %v1762, %v2441
        %v2465 = vsel %vm1371, %v1763, %v2443
        %v2466 = vsel %vm1371, %v2027, %v2449
        %v2467 = vsel %vm1371, %v2028, %v2451
        %v2468 = vsel %vm1371, %v2292, %v2457
        %v2469 = vsel %vm1371, %v2293, %v2459
        %v2470 = vpack.c.bf16 %v2463, %v2462
        %v2471 = vpack.c.bf16 %v2465, %v2464
        %v2472 = vpack.c.bf16 %v2467, %v2466
        %v2473 = vpack.c.bf16 %v2469, %v2468
        %v2474 = vld [vmem:[#allocation11] sm:$0xf]
        %v2475 = vld [vmem:[#allocation11 + $0x4] sm:$0xf]
        %v2476 = vld [vmem:[#allocation11 + $0x8] sm:$0xf]
        %v2477 = vld [vmem:[#allocation11 + $0xc] sm:$0xf]
        %v2478 = vld [vmem:[#allocation11 + $0x10] sm:$0xf]
        %v2479 = vld [vmem:[#allocation11 + $0x14] sm:$0xf]
        %v2480 = vld [vmem:[#allocation11 + $0x18] sm:$0xf]
        %v2481 = vld [vmem:[#allocation11 + $0x1c] sm:$0xf]
        %v2482 = vld [vmem:[#allocation11 + $0x20] sm:$0xf]
        %v2483 = vld [vmem:[#allocation11 + $0x24] sm:$0xf]
        %v2484 = vld [vmem:[#allocation11 + $0x28] sm:$0xf]
        %v2485 = vld [vmem:[#allocation11 + $0x2c] sm:$0xf]
        %v2486 = vld [vmem:[#allocation11 + $0x30] sm:$0xf]
        %v2487 = vld [vmem:[#allocation11 + $0x34] sm:$0xf]
        %v2488 = vld [vmem:[#allocation11 + $0x38] sm:$0xf]
        %v2489 = vld [vmem:[#allocation11 + $0x3c] sm:$0xf]
        %v2490 = vld [vmem:[#allocation11 + $0x40] sm:$0xf]
        %v2491 = vld [vmem:[#allocation11 + $0x44] sm:$0xf]
        %v2492 = vld [vmem:[#allocation11 + $0x48] sm:$0xf]
        %v2493 = vld [vmem:[#allocation11 + $0x4c] sm:$0xf]
        %v2494 = vld [vmem:[#allocation11 + $0x50] sm:$0xf]
        %v2495 = vld [vmem:[#allocation11 + $0x54] sm:$0xf]
        %v2496 = vld [vmem:[#allocation11 + $0x58] sm:$0xf]
        %v2497 = vld [vmem:[#allocation11 + $0x5c] sm:$0xf]
        %v2498 = vld [vmem:[#allocation11 + $0x60] sm:$0xf]
        %v2499 = vld [vmem:[#allocation11 + $0x64] sm:$0xf]
        %v2500 = vld [vmem:[#allocation11 + $0x68] sm:$0xf]
        %v2501 = vld [vmem:[#allocation11 + $0x6c] sm:$0xf]
        %v2502 = vld [vmem:[#allocation11 + $0x70] sm:$0xf]
        %v2503 = vld [vmem:[#allocation11 + $0x74] sm:$0xf]
        %v2504 = vld [vmem:[#allocation11 + $0x78] sm:$0xf]
        %v2505 = vld [vmem:[#allocation11 + $0x7c] sm:$0xf]
        %v2506 = vld [vmem:[#allocation11 + $0x80] sm:$0xf]
        %v2507 = vld [vmem:[#allocation11 + $0x84] sm:$0xf]
        %v2508 = vld [vmem:[#allocation11 + $0x88] sm:$0xf]
        %v2509 = vld [vmem:[#allocation11 + $0x8c] sm:$0xf]
        %v2510 = vld [vmem:[#allocation11 + $0x90] sm:$0xf]
        %v2511 = vld [vmem:[#allocation11 + $0x94] sm:$0xf]
        %v2512 = vld [vmem:[#allocation11 + $0x98] sm:$0xf]
        %v2513 = vld [vmem:[#allocation11 + $0x9c] sm:$0xf]
        %v2514 = vld [vmem:[#allocation11 + $0xa0] sm:$0xf]
        %v2515 = vld [vmem:[#allocation11 + $0xa4] sm:$0xf]
        %v2516 = vld [vmem:[#allocation11 + $0xa8] sm:$0xf]
        %v2517 = vld [vmem:[#allocation11 + $0xac] sm:$0xf]
        %v2518 = vld [vmem:[#allocation11 + $0xb0] sm:$0xf]
        %v2519 = vld [vmem:[#allocation11 + $0xb4] sm:$0xf]
        %v2520 = vld [vmem:[#allocation11 + $0xb8] sm:$0xf]
        %v2521 = vld [vmem:[#allocation11 + $0xbc] sm:$0xf]
        %v2522 = vld [vmem:[#allocation11 + $0xc0] sm:$0xf]
        %v2523 = vld [vmem:[#allocation11 + $0xc4] sm:$0xf]
        %v2524 = vld [vmem:[#allocation11 + $0xc8] sm:$0xf]
        %v2525 = vld [vmem:[#allocation11 + $0xcc] sm:$0xf]
        %v2526 = vld [vmem:[#allocation11 + $0xd0] sm:$0xf]
        %v2527 = vld [vmem:[#allocation11 + $0xd4] sm:$0xf]
        %v2528 = vld [vmem:[#allocation11 + $0xd8] sm:$0xf]
        %v2529 = vld [vmem:[#allocation11 + $0xdc] sm:$0xf]
        %v2530 = vld [vmem:[#allocation11 + $0xe0] sm:$0xf]
        %v2531 = vld [vmem:[#allocation11 + $0xe4] sm:$0xf]
        %v2532 = vld [vmem:[#allocation11 + $0xe8] sm:$0xf]
        %v2533 = vld [vmem:[#allocation11 + $0xec] sm:$0xf]
        %v2534 = vld [vmem:[#allocation11 + $0xf0] sm:$0xf]
        %v2535 = vld [vmem:[#allocation11 + $0xf4] sm:$0xf]
        %v2536 = vld [vmem:[#allocation11 + $0xf8] sm:$0xf]
        %v2537 = vld [vmem:[#allocation11 + $0xfc] sm:$0xf]
        %v2602 = vunpack.c.l.b16 %v2474
        %v2603 = vunpack.c.l.b16 %v2475
        %v2604 = vunpack.c.l.b16 %v2476
        %v2605 = vunpack.c.l.b16 %v2477
        %v2606 = vunpack.c.l.b16 %v2478
        %v2607 = vunpack.c.l.b16 %v2479
        %v2608 = vunpack.c.l.b16 %v2480
        %v2609 = vunpack.c.l.b16 %v2481
        %v2610 = vunpack.c.l.b16 %v2482
        %v2611 = vunpack.c.l.b16 %v2483
        %v2612 = vunpack.c.l.b16 %v2484
        %v2613 = vunpack.c.l.b16 %v2485
        %v2614 = vunpack.c.l.b16 %v2486
        %v2615 = vunpack.c.l.b16 %v2487
        %v2616 = vunpack.c.l.b16 %v2488
        %v2617 = vunpack.c.l.b16 %v2489
        %v2618 = vunpack.c.l.b16 %v2490
        %v2619 = vunpack.c.l.b16 %v2491
        %v2620 = vunpack.c.l.b16 %v2492
        %v2621 = vunpack.c.l.b16 %v2493
        %v2622 = vunpack.c.l.b16 %v2494
        %v2623 = vunpack.c.l.b16 %v2495
        %v2624 = vunpack.c.l.b16 %v2496
        %v2625 = vunpack.c.l.b16 %v2497
        %v2626 = vunpack.c.l.b16 %v2498
        %v2627 = vunpack.c.l.b16 %v2499
        %v2628 = vunpack.c.l.b16 %v2500
        %v2629 = vunpack.c.l.b16 %v2501
        %v2630 = vunpack.c.l.b16 %v2502
        %v2631 = vunpack.c.l.b16 %v2503
        %v2632 = vunpack.c.l.b16 %v2504
        %v2633 = vunpack.c.l.b16 %v2505
        %v2634 = vunpack.c.l.b16 %v2506
        %v2635 = vunpack.c.l.b16 %v2507
        %v2636 = vunpack.c.l.b16 %v2508
        %v2637 = vunpack.c.l.b16 %v2509
        %v2638 = vunpack.c.l.b16 %v2510
        %v2639 = vunpack.c.l.b16 %v2511
        %v2640 = vunpack.c.l.b16 %v2512
        %v2641 = vunpack.c.l.b16 %v2513
        %v2642 = vunpack.c.l.b16 %v2514
        %v2643 = vunpack.c.l.b16 %v2515
        %v2644 = vunpack.c.l.b16 %v2516
        %v2645 = vunpack.c.l.b16 %v2517
        %v2646 = vunpack.c.l.b16 %v2518
        %v2647 = vunpack.c.l.b16 %v2519
        %v2648 = vunpack.c.l.b16 %v2520
        %v2649 = vunpack.c.l.b16 %v2521
        %v2650 = vunpack.c.l.b16 %v2522
        %v2651 = vunpack.c.l.b16 %v2523
        %v2652 = vunpack.c.l.b16 %v2524
        %v2653 = vunpack.c.l.b16 %v2525
        %v2654 = vunpack.c.l.b16 %v2526
        %v2655 = vunpack.c.l.b16 %v2527
        %v2656 = vunpack.c.l.b16 %v2528
        %v2657 = vunpack.c.l.b16 %v2529
        %v2658 = vunpack.c.l.b16 %v2530
        %v2659 = vunpack.c.l.b16 %v2531
        %v2660 = vunpack.c.l.b16 %v2532
        %v2661 = vunpack.c.l.b16 %v2533
        %v2662 = vunpack.c.l.b16 %v2534
        %v2663 = vunpack.c.l.b16 %v2535
        %v2664 = vunpack.c.l.b16 %v2536
        %v2665 = vunpack.c.l.b16 %v2537
        %v2666 = vpack.c.b16 %v2603, %v2602
        %v2667 = vpack.c.b16 %v2605, %v2604
        %v2668 = vpack.c.b16 %v2607, %v2606
        %v2669 = vpack.c.b16 %v2609, %v2608
        %v2670 = vpack.c.b16 %v2611, %v2610
        %v2671 = vpack.c.b16 %v2613, %v2612
        %v2672 = vpack.c.b16 %v2615, %v2614
        %v2673 = vpack.c.b16 %v2617, %v2616
        %v2674 = vpack.c.b16 %v2619, %v2618
        %v2675 = vpack.c.b16 %v2621, %v2620
        %v2676 = vpack.c.b16 %v2623, %v2622
        %v2677 = vpack.c.b16 %v2625, %v2624
        %v2678 = vpack.c.b16 %v2627, %v2626
        %v2679 = vpack.c.b16 %v2629, %v2628
        %v2680 = vpack.c.b16 %v2631, %v2630
        %v2681 = vpack.c.b16 %v2633, %v2632
        %v2682 = vpack.c.b16 %v2635, %v2634
        %v2683 = vpack.c.b16 %v2637, %v2636
        %v2684 = vpack.c.b16 %v2639, %v2638
        %v2685 = vpack.c.b16 %v2641, %v2640
        %v2686 = vpack.c.b16 %v2643, %v2642
        %v2687 = vpack.c.b16 %v2645, %v2644
        %v2688 = vpack.c.b16 %v2647, %v2646
        %v2689 = vpack.c.b16 %v2649, %v2648
        %v2690 = vpack.c.b16 %v2651, %v2650
        %v2691 = vpack.c.b16 %v2653, %v2652
        %v2692 = vpack.c.b16 %v2655, %v2654
        %v2693 = vpack.c.b16 %v2657, %v2656
        %v2694 = vpack.c.b16 %v2659, %v2658
        %v2695 = vpack.c.b16 %v2661, %v2660
        %v2696 = vpack.c.b16 %v2663, %v2662
        %v2697 = vpack.c.b16 %v2665, %v2664
        %2730 = vmatprep.subr.bf16.mxu0 0
        %2731 = vmatpush1.bf16.msra.mxu0 %v2666
        %2732 = vmatprep.subr.bf16.mxu0 0
        %2733 = vmatpush1.bf16.msra.mxu0 %v2667
        %2734 = vmatprep.subr.bf16.mxu0 0
        %2735 = vmatpush1.bf16.msra.mxu0 %v2668
        %2736 = vmatprep.subr.bf16.mxu0 0
        %2737 = vmatpush1.bf16.msra.mxu0 %v2669
        %2738 = vmatprep.subr.bf16.mxu0 0
        %2739 = vmatpush1.bf16.msra.mxu0 %v2670
        %2740 = vmatprep.subr.bf16.mxu0 0
        %2741 = vmatpush1.bf16.msra.mxu0 %v2671
        %2742 = vmatprep.subr.bf16.mxu0 0
        %2743 = vmatpush1.bf16.msra.mxu0 %v2672
        %2744 = vmatprep.subr.bf16.mxu0 0
        %2745 = vmatpush1.bf16.msra.mxu0 %v2673
        %2746 = vmatprep.subr.bf16.mxu0 0
        %2747 = vmatpush1.bf16.msra.mxu0 %v2674
        %2748 = vmatprep.subr.bf16.mxu0 0
        %2749 = vmatpush1.bf16.msra.mxu0 %v2675
        %2750 = vmatprep.subr.bf16.mxu0 0
        %2751 = vmatpush1.bf16.msra.mxu0 %v2676
        %2752 = vmatprep.subr.bf16.mxu0 0
        %2753 = vmatpush1.bf16.msra.mxu0 %v2677
        %2754 = vmatprep.subr.bf16.mxu0 0
        %2755 = vmatpush1.bf16.msra.mxu0 %v2678
        %2756 = vmatprep.subr.bf16.mxu0 0
        %2757 = vmatpush1.bf16.msra.mxu0 %v2679
        %2758 = vmatprep.subr.bf16.mxu0 0
        %2759 = vmatpush1.bf16.msra.mxu0 %v2680
        %2760 = vmatprep.subr.bf16.mxu0 0
        %2761 = vmatpush1.bf16.msra.mxu0 %v2681
        %2762 = vmatprep.mubr.bf16.mxu0 %v2471
        %2763 = vmatmul.mubr.bf16.gmra.mrb[0].mxu0 %v2470
        %v2764 = vpop.f32.mrb[0].mxu0
        %v2765 = vadd.f32 0.0, %v2764
        %v2766 = vpop.f32.mrb[0].mxu0
        %v2767 = vpop.f32.mrb[0].mxu0
        %v2768 = vadd.f32 0.0, %v2767
        %v2769 = vpop.f32.mrb[0].mxu0
        %2770 = vdwg.mxu0
        %2771 = vmatprep.subr.bf16.mxu0 0
        %2772 = vmatpush1.bf16.msra.mxu0 %v2682
        %2773 = vmatprep.subr.bf16.mxu0 0
        %2774 = vmatpush1.bf16.msra.mxu0 %v2683
        %2775 = vmatprep.subr.bf16.mxu0 0
        %2776 = vmatpush1.bf16.msra.mxu0 %v2684
        %2777 = vmatprep.subr.bf16.mxu0 0
        %2778 = vmatpush1.bf16.msra.mxu0 %v2685
        %2779 = vmatprep.subr.bf16.mxu0 0
        %2780 = vmatpush1.bf16.msra.mxu0 %v2686
        %2781 = vmatprep.subr.bf16.mxu0 0
        %2782 = vmatpush1.bf16.msra.mxu0 %v2687
        %2783 = vmatprep.subr.bf16.mxu0 0
        %2784 = vmatpush1.bf16.msra.mxu0 %v2688
        %2785 = vmatprep.subr.bf16.mxu0 0
        %2786 = vmatpush1.bf16.msra.mxu0 %v2689
        %2787 = vmatprep.subr.bf16.mxu0 0
        %2788 = vmatpush1.bf16.msra.mxu0 %v2690
        %2789 = vmatprep.subr.bf16.mxu0 0
        %2790 = vmatpush1.bf16.msra.mxu0 %v2691
        %2791 = vmatprep.subr.bf16.mxu0 0
        %2792 = vmatpush1.bf16.msra.mxu0 %v2692
        %2793 = vmatprep.subr.bf16.mxu0 0
        %2794 = vmatpush1.bf16.msra.mxu0 %v2693
        %2795 = vmatprep.subr.bf16.mxu0 0
        %2796 = vmatpush1.bf16.msra.mxu0 %v2694
        %2797 = vmatprep.subr.bf16.mxu0 0
        %2798 = vmatpush1.bf16.msra.mxu0 %v2695
        %2799 = vmatprep.subr.bf16.mxu0 0
        %2800 = vmatpush1.bf16.msra.mxu0 %v2696
        %2801 = vmatprep.subr.bf16.mxu0 0
        %2802 = vmatpush1.bf16.msra.mxu0 %v2697
        %2803 = vmatprep.mubr.bf16.mxu0 %v2473
        %2804 = vmatmul.mubr.bf16.gmra.mrb[0].mxu0 %v2472
        %v2805 = vpop.f32.mrb[0].mxu0
        %v2806 = vadd.f32 %v2765, %v2805
        %v2807 = vpop.f32.mrb[0].mxu0
        %v2808 = vpop.f32.mrb[0].mxu0
        %v2809 = vadd.f32 %v2768, %v2808
        %v2810 = vpop.f32.mrb[0].mxu0
        %2811 = vdwg.mxu0
        %2812 = vst [vmem:[%s369] sm:$0xff] %v2806
        %2813 = vst [vmem:[%s369 + $0x8] sm:$0xff] %v2809
        %s2814 = sand.u32 %s170, 1
        %s2815 = scalar_lea.sflag [#allocation4], %s2814
        %s2816 = sand.u32 %s170, 1
        %s2817 = smul.addr %s2816, 16
        %s2818 = scalar_lea.vmem [#allocation13], %s2817
        %s2819 = sand.u32 %s196, 1
        %s2820 = scalar_lea.sflag [#allocation15], %s2819
        %s2821 = sand.u32 %s196, 1
        %s2822 = smul.addr %s2821, 64
        %s2823 = scalar_lea.vmem [#allocation14], %s2822
        // Predicated region
        $region69: #{tpu_custom_call.1} parent=43 // pred_check
          %p2824 = pneg %p180
        $region70: #{tpu_custom_call.1} parent=43 // pred_check_branch
          %2826 = sbr.rel (%p2824) target = $region72
        $region71: #{tpu_custom_call.1} parent=43 // pred_region
          %s2828 = ssub.s32 256, 256
          %2829 = vsyncadd %s2815, %s2828
          %s2830 = smul.addr %s31, 2
          %s2831 = smul.addr %s2830, 128
          %s2832 = scalar_lea.hbm %s6, %s2831
          %s2833 = sshll.u32 %s2818, 4
          %s2834 = int_to_ptr.vmem [resolvable:$true] %s2833
          %2839 = dma.vmem_to_hbm [thread:$0]  %s2834, 256, %s2832, %s2815, 128, 128, 8
        $region72: #{tpu_custom_call.1} parent=43 // pred_fallthru
          _
        // Predicated region
        $region73: #{tpu_custom_call.1} parent=43 // pred_check
          %p2840 = pneg %p206
        $region74: #{tpu_custom_call.1} parent=43 // pred_check_branch
          %2842 = sbr.rel (%p2840) target = $region76
        $region75: #{tpu_custom_call.1} parent=43 // pred_region
          %s2844 = ssub.s32 1024, 1024
          %2845 = vsyncadd %s2820, %s2844
          %s2846 = smul.addr %s31, 8
          %s2847 = smul.addr %s2846, 128
          %s2848 = scalar_lea.hbm %s7, %s2847
          %s2849 = sshll.u32 %s2823, 4
          %s2850 = int_to_ptr.vmem [resolvable:$true] %s2849
          %2855 = dma.vmem_to_hbm [thread:$0]  %s2850, 1024, %s2848, %s2820, 512, 512, 32
        $region76: #{tpu_custom_call.1} parent=43 // pred_fallthru
          _
      $region44: #{tpu_custom_call.1} parent=5 // pred_fallthru
        _
      %p2856 = scmp.le.s32.totalorder 2, %s26
      // Predicated region
      $region77: #{tpu_custom_call.1} parent=5 // pred_check
        %p2857 = pneg %p2856
      $region78: #{tpu_custom_call.1} parent=5 // pred_check_branch
        %2859 = sbr.rel (%p2857) target = $region80
      $region79: #{tpu_custom_call.1} parent=5 // pred_region
        %s2860 = ssub.s32 %s26, 2
        // Predicated region
        $region81: #{tpu_custom_call.1} parent=79 // pred_check
          %p2861 = pneg %p186
        $region82: #{tpu_custom_call.1} parent=79 // pred_check_branch
          %2863 = sbr.rel (%p2861) target = $region84
        $region83: #{tpu_custom_call.1} parent=79 // pred_region
          %s2864 = sand.u32 %s171, 1
          %s2865 = scalar_lea.sflag [#allocation4], %s2864
          %s2866 = sand.u32 %s171, 1
          %s2867 = smul.addr %s2866, 16
          %s2868 = scalar_lea.vmem [#allocation13], %s2867
          %2869 = dma.done %s2865, 256
        $region84: #{tpu_custom_call.1} parent=79 // pred_fallthru
          _
        // Predicated region
        $region85: #{tpu_custom_call.1} parent=79 // pred_check
          %p2870 = pneg %p212
        $region86: #{tpu_custom_call.1} parent=79 // pred_check_branch
          %2872 = sbr.rel (%p2870) target = $region88
        $region87: #{tpu_custom_call.1} parent=79 // pred_region
          %s2873 = sand.u32 %s197, 1
          %s2874 = scalar_lea.sflag [#allocation15], %s2873
          %s2875 = sand.u32 %s197, 1
          %s2876 = smul.addr %s2875, 64
          %s2877 = scalar_lea.vmem [#allocation14], %s2876
          %2878 = dma.done %s2874, 1024
        $region88: #{tpu_custom_call.1} parent=79 // pred_fallthru
          _
      $region80: #{tpu_custom_call.1} parent=5 // pred_fallthru
        _
    $region6: #{tpu_custom_call.1} parent=1 // loop_footer
      %s30 = sadd.s32 1, %s26
    $region7: #{tpu_custom_call.1} parent=1 // loop_footer_branch
      %25 = sbr.rel target = $region3
    $region8: #{tpu_custom_call.1} parent=1 // loop_exit
      _
    %2879 = vsyncpa [#allocation3], 1
    %s2880 = scalar_lea.sflag [#allocation3], 1
    %2881 = vsyncpa %s2880, 1
    %2882 = vsyncpa [#allocation6], 1
    %2883 = vsyncpa [#allocation9], 1
    %2884 = vsyncpa [#allocation12], 1
    %2885 = vsyncpa [#allocation4], 1
    %s2886 = scalar_lea.sflag [#allocation4], 1
    %2887 = vsyncpa %s2886, 1
    %2888 = vsyncpa [#allocation15], 1
    %s2889 = scalar_lea.sflag [#allocation15], 1
    %2890 = vsyncpa %s2889, 1

</llo_original>
